<compile_context>
chip_gen: v6e
topology: v6e:2x2x1
jax: 0.10.0
libtpu: 0.0.40
codegen_flags: <defaults>
</compile_context>

<pallas_src>
import math

import jax
import jax.numpy as jnp
from jax.experimental import pallas as pl
from jax.experimental.pallas import tpu as pltpu

# ----------------------------- small config ---------------------------------
NUM_LAYERS = 2
HIDDEN = 32
INTERMEDIATE = 64
NUM_HEADS = 4
HEAD_DIM = HIDDEN // NUM_HEADS
BATCH = 2
SEQ = 8          # sequence length
NCLS = SEQ       # number of cls slots (== SEQ, required by the PyTorch PE broadcast)

# rows of the packed per-layer vector operand (all padded to 3*HIDDEN columns)
ROW_BQKV, ROW_BO, ROW_G1, ROW_B1, ROW_BI, ROW_BO2, ROW_G2, ROW_B2 = range(8)
VEC_ROWS = 8
VEC_COLS = 3 * HIDDEN        # 96 >= INTERMEDIATE


# ----------------------------- helpers --------------------------------------
def _layernorm(x, g, b, eps):
    mu = jnp.mean(x, axis=-1, keepdims=True)
    var = jnp.mean((x - mu) ** 2, axis=-1, keepdims=True)
    return (x - mu) * jax.lax.rsqrt(var + eps) * g + b


def make_position_embedding(max_len, dim):
    pos = jnp.arange(max_len, dtype=jnp.float32)[:, None]
    div = jnp.exp(jnp.arange(0, dim, 2, dtype=jnp.float32) * (-(math.log(10000.0) / dim)))
    pe = jnp.zeros((max_len, dim), jnp.float32)
    pe = pe.at[:, 0::2].set(jnp.sin(pos * div))
    pe = pe.at[:, 1::2].set(jnp.cos(pos * div))
    return pe


# ----------------------------- fused kernel ----------------------------------
def fused_encoder_kernel(x_ref, mkeep_ref, madd_ref, pe_ref,
                         wqkv_ref, wo_ref, wi_ref, wo2_ref, vec_ref, head_ref,
                         emb_ref, logit_ref):
    """Whole SumEncoder forward for the full [B, N, H] batch, no grid."""
    B, N, H = x_ref.shape
    I = wi_ref.shape[-1]
    scale = 1.0 / math.sqrt(HEAD_DIM)

    mkeep = mkeep_ref[...]          # [B, N, 1]  multiplicative mask
    madd = madd_ref[...]            # [B, 1, N]  additive key mask ((1-m) * -1e18)

    # mask gathered rows, add positional embedding (matches torch order)
    x = x_ref[...] * mkeep + pe_ref[...][None, :, :]        # [B, N, H]
    xf = x.reshape(B * N, H)                                # batch flattened into MXU rows

    for layer in range(NUM_LAYERS):                         # layers statically unrolled
        vl = vec_ref[layer]                                 # [VEC_ROWS, VEC_COLS]
        bqkv = vl[ROW_BQKV:ROW_BQKV + 1, :]                 # [1, 3H]
        bo = vl[ROW_BO:ROW_BO + 1, :H]
        g1 = vl[ROW_G1:ROW_G1 + 1, :H]
        b1 = vl[ROW_B1:ROW_B1 + 1, :H]
        bi = vl[ROW_BI:ROW_BI + 1, :I]
        bo2 = vl[ROW_BO2:ROW_BO2 + 1, :H]
        g2 = vl[ROW_G2:ROW_G2 + 1, :H]
        b2 = vl[ROW_B2:ROW_B2 + 1, :H]

        # fused QKV projection: one [B*N, H] @ [H, 3H]
        qkv = jnp.dot(xf, wqkv_ref[layer], preferred_element_type=jnp.float32) + bqkv
        qkv = qkv.reshape(B, N, 3 * H)

        # attention: batched over B, heads unrolled, contraction on last dims (no .T)
        ctx_parts = []
        for h in range(NUM_HEADS):
            lo = h * HEAD_DIM
            qh = qkv[:, :, lo:lo + HEAD_DIM]                        # [B, N, HD]
            kh = qkv[:, :, H + lo:H + lo + HEAD_DIM]
            vh = qkv[:, :, 2 * H + lo:2 * H + lo + HEAD_DIM]
            s = jnp.einsum('bqd,bkd->bqk', qh, kh,
                           preferred_element_type=jnp.float32) * scale + madd
            s = s - jnp.max(s, axis=-1, keepdims=True)
            p = jnp.exp(s)
            p = p / jnp.sum(p, axis=-1, keepdims=True)              # softmax over keys
            ctx_parts.append(jnp.einsum('bqk,bkd->bqd', p, vh,
                                        preferred_element_type=jnp.float32))
        ctx = jnp.concatenate(ctx_parts, axis=-1).reshape(B * N, H)

        attn = jnp.dot(ctx, wo_ref[layer], preferred_element_type=jnp.float32) + bo
        h1 = _layernorm(attn + xf, g1, b1, 1e-12)

        inter = jnp.dot(h1, wi_ref[layer], preferred_element_type=jnp.float32) + bi
        inter = 0.5 * inter * (1.0 + jax.lax.erf(inter / math.sqrt(2.0)))   # exact GELU

        out = jnp.dot(inter, wo2_ref[layer], preferred_element_type=jnp.float32) + bo2
        xf = _layernorm(out + h1, g2, b2, 1e-12)

    # post-layer masking + head: LayerNorm(eps=1e-6) + Linear(H, 1) + logit masking
    xm = xf.reshape(B, N, H) * mkeep
    emb_ref[...] = xm

    g = head_ref[0:1, :]            # [1, H]
    b_ln = head_ref[1:2, :]
    w = head_ref[2:3, :]
    bias = head_ref[3:4, 0:1]       # [1, 1]
    y = _layernorm(xm, g, b_ln, 1e-6)
    logits = jnp.sum(y * w, axis=-1, keepdims=True) + bias          # [B, N, 1]
    logit_ref[...] = logits * mkeep


# ----------------------------- parameters ------------------------------------
def init_params(key):
    H, I, L = HIDDEN, INTERMEDIATE, NUM_LAYERS

    def dense(k, fan_in, fan_out):
        return jax.random.normal(k, (fan_in, fan_out), jnp.float32) * 0.02

    wqkv_l, wo_l, wi_l, wo2_l, vec_l = [], [], [], [], []
    for i in range(L):
        ks = jax.random.split(jax.random.fold_in(key, i), 6)
        wq, wk, wv = dense(ks[0], H, H), dense(ks[1], H, H), dense(ks[2], H, H)
        wqkv_l.append(jnp.concatenate([wq, wk, wv], axis=1))        # [H, 3H]
        wo_l.append(dense(ks[3], H, H))
        wi_l.append(dense(ks[4], H, I))
        wo2_l.append(dense(ks[5], I, H))
        vec = jnp.zeros((VEC_ROWS, VEC_COLS), jnp.float32)          # all biases zero
        vec = vec.at[ROW_G1, :H].set(1.0)                           # LN1 gamma
        vec = vec.at[ROW_G2, :H].set(1.0)                           # LN2 gamma
        vec_l.append(vec)

    kh = jax.random.fold_in(key, 1000)
    head_vec = jnp.zeros((4, H), jnp.float32)
    head_vec = head_vec.at[0, :].set(1.0)                           # final LN gamma
    head_vec = head_vec.at[2, :].set(jax.random.normal(kh, (H,), jnp.float32) * 0.02)
    # row 1 = final LN beta (0), row 3 col 0 = Linear(H,1) bias (0)

    return dict(
        wqkv=jnp.stack(wqkv_l), wo=jnp.stack(wo_l),
        wi=jnp.stack(wi_l), wo2=jnp.stack(wo2_l),
        vecs=jnp.stack(vec_l), head=head_vec,
        pe=make_position_embedding(5000, H),
    )


# ----------------------------- forward ----------------------------------------
def sum_encoder_forward(params, last_hidden_state, cls_token_ids):
    B, S, H = last_hidden_state.shape
    N = cls_token_ids.shape[1]
    I = INTERMEDIATE
    mask = (cls_token_ids != -1).astype(jnp.float32)                # [B, N]

    # torch-style advanced-index gather (negative index = from the end) -- plain-JAX glue
    idx = jnp.where(cls_token_ids < 0, cls_token_ids + S, cls_token_ids)
    cls_embed = jnp.take_along_axis(last_hidden_state, idx[:, :, None], axis=1)  # [B, N, H]

    mask_keep = mask[:, :, None]                                    # [B, N, 1]
    mask_add = ((1.0 - mask) * -1e18)[:, None, :]                   # [B, 1, N]
    pe = params["pe"][:S]                                           # [S, H]  (N == S, as in PyTorch)

    inputs = (cls_embed, mask_keep, mask_add, pe,
              params["wqkv"], params["wo"], params["wi"], params["wo2"],
              params["vecs"], params["head"])

    flops = NUM_LAYERS * (
        2 * B * N * H * 3 * H        # fused QKV projection
        + 4 * B * N * N * H          # scores + context (all heads)
        + 2 * B * N * H * H          # attention output projection
        + 4 * B * N * H * I          # FFN up + down
    ) + 2 * B * N * H                # head Linear(H, 1)
    transcendentals = NUM_LAYERS * (B * NUM_HEADS * N * N + B * N * I)
    bytes_accessed = 4 * (sum(int(a.size) for a in inputs) + B * N * H + B * N)

    vmem = pl.BlockSpec(memory_space=pltpu.MemorySpace.VMEM)
    emb, logits = pl.pallas_call(
        fused_encoder_kernel,
        out_shape=(jax.ShapeDtypeStruct((B, N, H), jnp.float32),
                   jax.ShapeDtypeStruct((B, N, 1), jnp.float32)),
        in_specs=[vmem] * len(inputs),
        out_specs=(vmem, vmem),
        cost_estimate=pl.CostEstimate(flops=flops,
                                      transcendentals=transcendentals,
                                      bytes_accessed=bytes_accessed),
    )(*inputs)

    return dict(cls_embeddings=emb, cls_token_mask=mask, logits=logits[..., 0])


# ----------------------------- main -------------------------------------------
if __name__ == "__main__":
    key = jax.random.PRNGKey(0)
    k_x, k_p = jax.random.split(key)
    params = init_params(k_p)

    last_hidden_state = jax.random.normal(k_x, (BATCH, SEQ, HIDDEN), jnp.float32)
    cls_token_ids = jnp.array([[0, 2, 4, 6, -1, -1, -1, -1],
                               [0, 1, 3, 5, 7, -1, -1, -1]], dtype=jnp.int32)

    fwd = jax.jit(sum_encoder_forward)
    out = fwd(params, last_hidden_state, cls_token_ids)
    jax.tree_util.tree_map(jax.block_until_ready, out)

    assert out["cls_embeddings"].shape == (BATCH, NCLS, HIDDEN)
    assert out["cls_token_mask"].shape == (BATCH, NCLS)
    assert out["logits"].shape == (BATCH, NCLS)
    assert bool(jnp.all(jnp.isfinite(out["cls_embeddings"])))
    assert bool(jnp.all(jnp.isfinite(out["logits"])))
    print("KERNEL_OK")
</pallas_src>

<mosaic_0001>
module attributes {stable_mosaic.version = 11 : i64} {
  func.func @fused_encoder_kernel(%arg0: memref<2x8x32xf32, #tpu.memory_space<vmem>>, %arg1: memref<2x8x1xf32, #tpu.memory_space<vmem>>, %arg2: memref<2x1x8xf32, #tpu.memory_space<vmem>>, %arg3: memref<8x32xf32, #tpu.memory_space<vmem>>, %arg4: memref<2x32x96xf32, #tpu.memory_space<vmem>>, %arg5: memref<2x32x32xf32, #tpu.memory_space<vmem>>, %arg6: memref<2x32x64xf32, #tpu.memory_space<vmem>>, %arg7: memref<2x64x32xf32, #tpu.memory_space<vmem>>, %arg8: memref<2x8x96xf32, #tpu.memory_space<vmem>>, %arg9: memref<4x32xf32, #tpu.memory_space<vmem>>, %arg10: memref<2x8x32xf32, #tpu.memory_space<vmem>>, %arg11: memref<2x8x1xf32, #tpu.memory_space<vmem>>) attributes {dimension_semantics = [], scalar_prefetch = 0 : i64, scratch_operands = 0 : i64, tpu.core_type = #tpu.core_type<tc>} {
    %c0 = arith.constant 0 : index
    %c0_0 = arith.constant 0 : index
    %c0_1 = arith.constant 0 : index
    %0 = vector.load %arg1[%c0, %c0_0, %c0_1] : memref<2x8x1xf32, #tpu.memory_space<vmem>>, vector<2x8x1xf32>
    %c0_2 = arith.constant 0 : index
    %c0_3 = arith.constant 0 : index
    %c0_4 = arith.constant 0 : index
    %1 = vector.load %arg2[%c0_2, %c0_3, %c0_4] : memref<2x1x8xf32, #tpu.memory_space<vmem>>, vector<2x1x8xf32>
    %c0_5 = arith.constant 0 : index
    %c0_6 = arith.constant 0 : index
    %c0_7 = arith.constant 0 : index
    %2 = vector.load %arg0[%c0_5, %c0_6, %c0_7] : memref<2x8x32xf32, #tpu.memory_space<vmem>>, vector<2x8x32xf32>
    %3 = vector.broadcast %0 : vector<2x8x1xf32> to vector<2x8x32xf32>
    %4 = arith.mulf %2, %3 : vector<2x8x32xf32>
    %c0_8 = arith.constant 0 : index
    %c0_9 = arith.constant 0 : index
    %5 = vector.load %arg3[%c0_8, %c0_9] : memref<8x32xf32, #tpu.memory_space<vmem>>, vector<8x32xf32>
    %6 = vector.shape_cast %5 : vector<8x32xf32> to vector<1x8x32xf32>
    %7 = vector.broadcast %6 : vector<1x8x32xf32> to vector<2x8x32xf32>
    %8 = arith.addf %4, %7 : vector<2x8x32xf32>
    %9 = vector.shape_cast %8 : vector<2x8x32xf32> to vector<16x32xf32>
    %c0_10 = arith.constant 0 : index
    %c0_11 = arith.constant 0 : index
    %c0_12 = arith.constant 0 : index
    %10 = vector.load %arg8[%c0_10, %c0_11, %c0_12] : memref<2x8x96xf32, #tpu.memory_space<vmem>>, vector<1x8x96xf32>
    %11 = vector.shape_cast %10 : vector<1x8x96xf32> to vector<8x96xf32>
    %12 = vector.extract_strided_slice %11 {offsets = [0, 0], sizes = [1, 96], strides = [1, 1]} : vector<8x96xf32> to vector<1x96xf32>
    %13 = vector.extract_strided_slice %11 {offsets = [1, 0], sizes = [1, 32], strides = [1, 1]} : vector<8x96xf32> to vector<1x32xf32>
    %14 = vector.extract_strided_slice %11 {offsets = [2, 0], sizes = [1, 32], strides = [1, 1]} : vector<8x96xf32> to vector<1x32xf32>
    %15 = vector.extract_strided_slice %11 {offsets = [3, 0], sizes = [1, 32], strides = [1, 1]} : vector<8x96xf32> to vector<1x32xf32>
    %16 = vector.extract_strided_slice %11 {offsets = [4, 0], sizes = [1, 64], strides = [1, 1]} : vector<8x96xf32> to vector<1x64xf32>
    %17 = vector.extract_strided_slice %11 {offsets = [5, 0], sizes = [1, 32], strides = [1, 1]} : vector<8x96xf32> to vector<1x32xf32>
    %18 = vector.extract_strided_slice %11 {offsets = [6, 0], sizes = [1, 32], strides = [1, 1]} : vector<8x96xf32> to vector<1x32xf32>
    %19 = vector.extract_strided_slice %11 {offsets = [7, 0], sizes = [1, 32], strides = [1, 1]} : vector<8x96xf32> to vector<1x32xf32>
    %c0_13 = arith.constant 0 : index
    %c0_14 = arith.constant 0 : index
    %c0_15 = arith.constant 0 : index
    %20 = vector.load %arg4[%c0_13, %c0_14, %c0_15] : memref<2x32x96xf32, #tpu.memory_space<vmem>>, vector<1x32x96xf32>
    %21 = vector.shape_cast %20 : vector<1x32x96xf32> to vector<32x96xf32>
    %cst = arith.constant dense<0.000000e+00> : vector<16x96xf32>
    %22 = tpu.matmul %9, %21, %cst {dimension_numbers = #tpu.dot_dimension_numbers<[1], [0], [0], [1], [0, 0, 1, 1], [], []>} : vector<16x32xf32>, vector<32x96xf32>, vector<16x96xf32> -> vector<16x96xf32>
    %23 = vector.broadcast %12 : vector<1x96xf32> to vector<16x96xf32>
    %24 = arith.addf %22, %23 : vector<16x96xf32>
    %25 = vector.shape_cast %24 : vector<16x96xf32> to vector<2x8x96xf32>
    %26 = vector.extract_strided_slice %25 {offsets = [0, 0, 0], sizes = [2, 8, 8], strides = [1, 1, 1]} : vector<2x8x96xf32> to vector<2x8x8xf32>
    %27 = vector.extract_strided_slice %25 {offsets = [0, 0, 32], sizes = [2, 8, 8], strides = [1, 1, 1]} : vector<2x8x96xf32> to vector<2x8x8xf32>
    %28 = vector.extract_strided_slice %25 {offsets = [0, 0, 64], sizes = [2, 8, 8], strides = [1, 1, 1]} : vector<2x8x96xf32> to vector<2x8x8xf32>
    "tpu.trace_start"() <{level = 10 : i32, message = "bqd,bkd->bqk"}> : () -> ()
    %cst_16 = arith.constant dense<0.000000e+00> : vector<2x8x8xf32>
    %29 = tpu.matmul %26, %27, %cst_16 {dimension_numbers = #tpu.dot_dimension_numbers<[2], [2], [1], [1], [0, 0, 0, 1, 1, 1], [0], [0]>} : vector<2x8x8xf32>, vector<2x8x8xf32>, vector<2x8x8xf32> -> vector<2x8x8xf32>
    "tpu.trace_stop"() : () -> ()
    %cst_17 = arith.constant 0.353553385 : f32
    %30 = vector.broadcast %cst_17 : f32 to vector<2x8x8xf32>
    %31 = arith.mulf %29, %30 : vector<2x8x8xf32>
    %32 = vector.broadcast %1 : vector<2x1x8xf32> to vector<2x8x8xf32>
    %33 = arith.addf %31, %32 : vector<2x8x8xf32>
    %cst_18 = arith.constant dense<0xFF800000> : vector<2x8xf32>
    %34 = vector.multi_reduction <maximumf>, %33, %cst_18 [2] : vector<2x8x8xf32> to vector<2x8xf32>
    %35 = vector.shape_cast %34 : vector<2x8xf32> to vector<2x8x1xf32>
    %36 = vector.broadcast %35 : vector<2x8x1xf32> to vector<2x8x8xf32>
    %37 = arith.subf %33, %36 : vector<2x8x8xf32>
    %38 = math.exp %37 : vector<2x8x8xf32>
    %cst_19 = arith.constant dense<0.000000e+00> : vector<2x8xf32>
    %39 = vector.multi_reduction <add>, %38, %cst_19 [2] : vector<2x8x8xf32> to vector<2x8xf32>
    %40 = vector.shape_cast %39 : vector<2x8xf32> to vector<2x8x1xf32>
    %41 = vector.broadcast %40 : vector<2x8x1xf32> to vector<2x8x8xf32>
    %42 = arith.divf %38, %41 : vector<2x8x8xf32>
    "tpu.trace_start"() <{level = 10 : i32, message = "bqk,bkd->bqd"}> : () -> ()
    %cst_20 = arith.constant dense<0.000000e+00> : vector<2x8x8xf32>
    %43 = tpu.matmul %42, %28, %cst_20 {dimension_numbers = #tpu.dot_dimension_numbers<[2], [1], [1], [2], [0, 0, 0, 1, 1, 2], [0], [0]>} : vector<2x8x8xf32>, vector<2x8x8xf32>, vector<2x8x8xf32> -> vector<2x8x8xf32>
    "tpu.trace_stop"() : () -> ()
    %44 = vector.extract_strided_slice %25 {offsets = [0, 0, 8], sizes = [2, 8, 8], strides = [1, 1, 1]} : vector<2x8x96xf32> to vector<2x8x8xf32>
    %45 = vector.extract_strided_slice %25 {offsets = [0, 0, 40], sizes = [2, 8, 8], strides = [1, 1, 1]} : vector<2x8x96xf32> to vector<2x8x8xf32>
    %46 = vector.extract_strided_slice %25 {offsets = [0, 0, 72], sizes = [2, 8, 8], strides = [1, 1, 1]} : vector<2x8x96xf32> to vector<2x8x8xf32>
    "tpu.trace_start"() <{level = 10 : i32, message = "bqd,bkd->bqk"}> : () -> ()
    %cst_21 = arith.constant dense<0.000000e+00> : vector<2x8x8xf32>
    %47 = tpu.matmul %44, %45, %cst_21 {dimension_numbers = #tpu.dot_dimension_numbers<[2], [2], [1], [1], [0, 0, 0, 1, 1, 1], [0], [0]>} : vector<2x8x8xf32>, vector<2x8x8xf32>, vector<2x8x8xf32> -> vector<2x8x8xf32>
    "tpu.trace_stop"() : () -> ()
    %cst_22 = arith.constant 0.353553385 : f32
    %48 = vector.broadcast %cst_22 : f32 to vector<2x8x8xf32>
    %49 = arith.mulf %47, %48 : vector<2x8x8xf32>
    %50 = vector.broadcast %1 : vector<2x1x8xf32> to vector<2x8x8xf32>
    %51 = arith.addf %49, %50 : vector<2x8x8xf32>
    %cst_23 = arith.constant dense<0xFF800000> : vector<2x8xf32>
    %52 = vector.multi_reduction <maximumf>, %51, %cst_23 [2] : vector<2x8x8xf32> to vector<2x8xf32>
    %53 = vector.shape_cast %52 : vector<2x8xf32> to vector<2x8x1xf32>
    %54 = vector.broadcast %53 : vector<2x8x1xf32> to vector<2x8x8xf32>
    %55 = arith.subf %51, %54 : vector<2x8x8xf32>
    %56 = math.exp %55 : vector<2x8x8xf32>
    %cst_24 = arith.constant dense<0.000000e+00> : vector<2x8xf32>
    %57 = vector.multi_reduction <add>, %56, %cst_24 [2] : vector<2x8x8xf32> to vector<2x8xf32>
    %58 = vector.shape_cast %57 : vector<2x8xf32> to vector<2x8x1xf32>
    %59 = vector.broadcast %58 : vector<2x8x1xf32> to vector<2x8x8xf32>
    %60 = arith.divf %56, %59 : vector<2x8x8xf32>
    "tpu.trace_start"() <{level = 10 : i32, message = "bqk,bkd->bqd"}> : () -> ()
    %cst_25 = arith.constant dense<0.000000e+00> : vector<2x8x8xf32>
    %61 = tpu.matmul %60, %46, %cst_25 {dimension_numbers = #tpu.dot_dimension_numbers<[2], [1], [1], [2], [0, 0, 0, 1, 1, 2], [0], [0]>} : vector<2x8x8xf32>, vector<2x8x8xf32>, vector<2x8x8xf32> -> vector<2x8x8xf32>
    "tpu.trace_stop"() : () -> ()
    %62 = vector.extract_strided_slice %25 {offsets = [0, 0, 16], sizes = [2, 8, 8], strides = [1, 1, 1]} : vector<2x8x96xf32> to vector<2x8x8xf32>
    %63 = vector.extract_strided_slice %25 {offsets = [0, 0, 48], sizes = [2, 8, 8], strides = [1, 1, 1]} : vector<2x8x96xf32> to vector<2x8x8xf32>
    %64 = vector.extract_strided_slice %25 {offsets = [0, 0, 80], sizes = [2, 8, 8], strides = [1, 1, 1]} : vector<2x8x96xf32> to vector<2x8x8xf32>
    "tpu.trace_start"() <{level = 10 : i32, message = "bqd,bkd->bqk"}> : () -> ()
    %cst_26 = arith.constant dense<0.000000e+00> : vector<2x8x8xf32>
    %65 = tpu.matmul %62, %63, %cst_26 {dimension_numbers = #tpu.dot_dimension_numbers<[2], [2], [1], [1], [0, 0, 0, 1, 1, 1], [0], [0]>} : vector<2x8x8xf32>, vector<2x8x8xf32>, vector<2x8x8xf32> -> vector<2x8x8xf32>
    "tpu.trace_stop"() : () -> ()
    %cst_27 = arith.constant 0.353553385 : f32
    %66 = vector.broadcast %cst_27 : f32 to vector<2x8x8xf32>
    %67 = arith.mulf %65, %66 : vector<2x8x8xf32>
    %68 = vector.broadcast %1 : vector<2x1x8xf32> to vector<2x8x8xf32>
    %69 = arith.addf %67, %68 : vector<2x8x8xf32>
    %cst_28 = arith.constant dense<0xFF800000> : vector<2x8xf32>
    %70 = vector.multi_reduction <maximumf>, %69, %cst_28 [2] : vector<2x8x8xf32> to vector<2x8xf32>
    %71 = vector.shape_cast %70 : vector<2x8xf32> to vector<2x8x1xf32>
    %72 = vector.broadcast %71 : vector<2x8x1xf32> to vector<2x8x8xf32>
    %73 = arith.subf %69, %72 : vector<2x8x8xf32>
    %74 = math.exp %73 : vector<2x8x8xf32>
    %cst_29 = arith.constant dense<0.000000e+00> : vector<2x8xf32>
    %75 = vector.multi_reduction <add>, %74, %cst_29 [2] : vector<2x8x8xf32> to vector<2x8xf32>
    %76 = vector.shape_cast %75 : vector<2x8xf32> to vector<2x8x1xf32>
    %77 = vector.broadcast %76 : vector<2x8x1xf32> to vector<2x8x8xf32>
    %78 = arith.divf %74, %77 : vector<2x8x8xf32>
    "tpu.trace_start"() <{level = 10 : i32, message = "bqk,bkd->bqd"}> : () -> ()
    %cst_30 = arith.constant dense<0.000000e+00> : vector<2x8x8xf32>
    %79 = tpu.matmul %78, %64, %cst_30 {dimension_numbers = #tpu.dot_dimension_numbers<[2], [1], [1], [2], [0, 0, 0, 1, 1, 2], [0], [0]>} : vector<2x8x8xf32>, vector<2x8x8xf32>, vector<2x8x8xf32> -> vector<2x8x8xf32>
    "tpu.trace_stop"() : () -> ()
    %80 = vector.extract_strided_slice %25 {offsets = [0, 0, 24], sizes = [2, 8, 8], strides = [1, 1, 1]} : vector<2x8x96xf32> to vector<2x8x8xf32>
    %81 = vector.extract_strided_slice %25 {offsets = [0, 0, 56], sizes = [2, 8, 8], strides = [1, 1, 1]} : vector<2x8x96xf32> to vector<2x8x8xf32>
    %82 = vector.extract_strided_slice %25 {offsets = [0, 0, 88], sizes = [2, 8, 8], strides = [1, 1, 1]} : vector<2x8x96xf32> to vector<2x8x8xf32>
    "tpu.trace_start"() <{level = 10 : i32, message = "bqd,bkd->bqk"}> : () -> ()
    %cst_31 = arith.constant dense<0.000000e+00> : vector<2x8x8xf32>
    %83 = tpu.matmul %80, %81, %cst_31 {dimension_numbers = #tpu.dot_dimension_numbers<[2], [2], [1], [1], [0, 0, 0, 1, 1, 1], [0], [0]>} : vector<2x8x8xf32>, vector<2x8x8xf32>, vector<2x8x8xf32> -> vector<2x8x8xf32>
    "tpu.trace_stop"() : () -> ()
    %cst_32 = arith.constant 0.353553385 : f32
    %84 = vector.broadcast %cst_32 : f32 to vector<2x8x8xf32>
    %85 = arith.mulf %83, %84 : vector<2x8x8xf32>
    %86 = vector.broadcast %1 : vector<2x1x8xf32> to vector<2x8x8xf32>
    %87 = arith.addf %85, %86 : vector<2x8x8xf32>
    %cst_33 = arith.constant dense<0xFF800000> : vector<2x8xf32>
    %88 = vector.multi_reduction <maximumf>, %87, %cst_33 [2] : vector<2x8x8xf32> to vector<2x8xf32>
    %89 = vector.shape_cast %88 : vector<2x8xf32> to vector<2x8x1xf32>
    %90 = vector.broadcast %89 : vector<2x8x1xf32> to vector<2x8x8xf32>
    %91 = arith.subf %87, %90 : vector<2x8x8xf32>
    %92 = math.exp %91 : vector<2x8x8xf32>
    %cst_34 = arith.constant dense<0.000000e+00> : vector<2x8xf32>
    %93 = vector.multi_reduction <add>, %92, %cst_34 [2] : vector<2x8x8xf32> to vector<2x8xf32>
    %94 = vector.shape_cast %93 : vector<2x8xf32> to vector<2x8x1xf32>
    %95 = vector.broadcast %94 : vector<2x8x1xf32> to vector<2x8x8xf32>
    %96 = arith.divf %92, %95 : vector<2x8x8xf32>
    "tpu.trace_start"() <{level = 10 : i32, message = "bqk,bkd->bqd"}> : () -> ()
    %cst_35 = arith.constant dense<0.000000e+00> : vector<2x8x8xf32>
    %97 = tpu.matmul %96, %82, %cst_35 {dimension_numbers = #tpu.dot_dimension_numbers<[2], [1], [1], [2], [0, 0, 0, 1, 1, 2], [0], [0]>} : vector<2x8x8xf32>, vector<2x8x8xf32>, vector<2x8x8xf32> -> vector<2x8x8xf32>
    "tpu.trace_stop"() : () -> ()
    %98 = tpu.concatenate %43, %61, %79, %97 in 2 : vector<2x8x8xf32>, vector<2x8x8xf32>, vector<2x8x8xf32>, vector<2x8x8xf32> -> vector<2x8x32xf32>
    %99 = vector.shape_cast %98 : vector<2x8x32xf32> to vector<16x32xf32>
    %c0_36 = arith.constant 0 : index
    %c0_37 = arith.constant 0 : index
    %c0_38 = arith.constant 0 : index
    %100 = vector.load %arg5[%c0_36, %c0_37, %c0_38] : memref<2x32x32xf32, #tpu.memory_space<vmem>>, vector<1x32x32xf32>
    %101 = vector.shape_cast %100 : vector<1x32x32xf32> to vector<32x32xf32>
    %cst_39 = arith.constant dense<0.000000e+00> : vector<16x32xf32>
    %102 = tpu.matmul %99, %101, %cst_39 {dimension_numbers = #tpu.dot_dimension_numbers<[1], [0], [0], [1], [0, 0, 1, 1], [], []>} : vector<16x32xf32>, vector<32x32xf32>, vector<16x32xf32> -> vector<16x32xf32>
    %103 = vector.broadcast %13 : vector<1x32xf32> to vector<16x32xf32>
    %104 = arith.addf %102, %103 : vector<16x32xf32>
    %105 = arith.addf %104, %9 : vector<16x32xf32>
    %cst_40 = arith.constant dense<0.000000e+00> : vector<16xf32>
    %106 = vector.multi_reduction <add>, %105, %cst_40 [1] : vector<16x32xf32> to vector<16xf32>
    %107 = vector.shape_cast %106 : vector<16xf32> to vector<16x1xf32>
    %cst_41 = arith.constant 3.200000e+01 : f32
    %108 = vector.broadcast %cst_41 : f32 to vector<16x1xf32>
    %109 = arith.divf %107, %108 : vector<16x1xf32>
    %110 = vector.broadcast %109 : vector<16x1xf32> to vector<16x32xf32>
    %111 = arith.subf %105, %110 : vector<16x32xf32>
    %112 = arith.mulf %111, %111 : vector<16x32xf32>
    %cst_42 = arith.constant dense<0.000000e+00> : vector<16xf32>
    %113 = vector.multi_reduction <add>, %112, %cst_42 [1] : vector<16x32xf32> to vector<16xf32>
    %114 = vector.shape_cast %113 : vector<16xf32> to vector<16x1xf32>
    %cst_43 = arith.constant 3.200000e+01 : f32
    %115 = vector.broadcast %cst_43 : f32 to vector<16x1xf32>
    %116 = arith.divf %114, %115 : vector<16x1xf32>
    %117 = vector.broadcast %109 : vector<16x1xf32> to vector<16x32xf32>
    %118 = arith.subf %105, %117 : vector<16x32xf32>
    %cst_44 = arith.constant 9.99999996E-13 : f32
    %119 = vector.broadcast %cst_44 : f32 to vector<16x1xf32>
    %120 = arith.addf %116, %119 : vector<16x1xf32>
    %121 = math.rsqrt %120 : vector<16x1xf32>
    %122 = vector.broadcast %121 : vector<16x1xf32> to vector<16x32xf32>
    %123 = arith.mulf %118, %122 : vector<16x32xf32>
    %124 = vector.broadcast %14 : vector<1x32xf32> to vector<16x32xf32>
    %125 = arith.mulf %123, %124 : vector<16x32xf32>
    %126 = vector.broadcast %15 : vector<1x32xf32> to vector<16x32xf32>
    %127 = arith.addf %125, %126 : vector<16x32xf32>
    %c0_45 = arith.constant 0 : index
    %c0_46 = arith.constant 0 : index
    %c0_47 = arith.constant 0 : index
    %128 = vector.load %arg6[%c0_45, %c0_46, %c0_47] : memref<2x32x64xf32, #tpu.memory_space<vmem>>, vector<1x32x64xf32>
    %129 = vector.shape_cast %128 : vector<1x32x64xf32> to vector<32x64xf32>
    %cst_48 = arith.constant dense<0.000000e+00> : vector<16x64xf32>
    %130 = tpu.matmul %127, %129, %cst_48 {dimension_numbers = #tpu.dot_dimension_numbers<[1], [0], [0], [1], [0, 0, 1, 1], [], []>} : vector<16x32xf32>, vector<32x64xf32>, vector<16x64xf32> -> vector<16x64xf32>
    %131 = vector.broadcast %16 : vector<1x64xf32> to vector<16x64xf32>
    %132 = arith.addf %130, %131 : vector<16x64xf32>
    %cst_49 = arith.constant 5.000000e-01 : f32
    %133 = vector.broadcast %cst_49 : f32 to vector<16x64xf32>
    %134 = arith.mulf %133, %132 : vector<16x64xf32>
    %cst_50 = arith.constant 1.41421354 : f32
    %135 = vector.broadcast %cst_50 : f32 to vector<16x64xf32>
    %136 = arith.divf %132, %135 : vector<16x64xf32>
    %137 = math.erf %136 : vector<16x64xf32>
    %cst_51 = arith.constant 1.000000e+00 : f32
    %138 = vector.broadcast %cst_51 : f32 to vector<16x64xf32>
    %139 = arith.addf %138, %137 : vector<16x64xf32>
    %140 = arith.mulf %134, %139 : vector<16x64xf32>
    %c0_52 = arith.constant 0 : index
    %c0_53 = arith.constant 0 : index
    %c0_54 = arith.constant 0 : index
    %141 = vector.load %arg7[%c0_52, %c0_53, %c0_54] : memref<2x64x32xf32, #tpu.memory_space<vmem>>, vector<1x64x32xf32>
    %142 = vector.shape_cast %141 : vector<1x64x32xf32> to vector<64x32xf32>
    %cst_55 = arith.constant dense<0.000000e+00> : vector<16x32xf32>
    %143 = tpu.matmul %140, %142, %cst_55 {dimension_numbers = #tpu.dot_dimension_numbers<[1], [0], [0], [1], [0, 0, 1, 1], [], []>} : vector<16x64xf32>, vector<64x32xf32>, vector<16x32xf32> -> vector<16x32xf32>
    %144 = vector.broadcast %17 : vector<1x32xf32> to vector<16x32xf32>
    %145 = arith.addf %143, %144 : vector<16x32xf32>
    %146 = arith.addf %145, %127 : vector<16x32xf32>
    %cst_56 = arith.constant dense<0.000000e+00> : vector<16xf32>
    %147 = vector.multi_reduction <add>, %146, %cst_56 [1] : vector<16x32xf32> to vector<16xf32>
    %148 = vector.shape_cast %147 : vector<16xf32> to vector<16x1xf32>
    %cst_57 = arith.constant 3.200000e+01 : f32
    %149 = vector.broadcast %cst_57 : f32 to vector<16x1xf32>
    %150 = arith.divf %148, %149 : vector<16x1xf32>
    %151 = vector.broadcast %150 : vector<16x1xf32> to vector<16x32xf32>
    %152 = arith.subf %146, %151 : vector<16x32xf32>
    %153 = arith.mulf %152, %152 : vector<16x32xf32>
    %cst_58 = arith.constant dense<0.000000e+00> : vector<16xf32>
    %154 = vector.multi_reduction <add>, %153, %cst_58 [1] : vector<16x32xf32> to vector<16xf32>
    %155 = vector.shape_cast %154 : vector<16xf32> to vector<16x1xf32>
    %cst_59 = arith.constant 3.200000e+01 : f32
    %156 = vector.broadcast %cst_59 : f32 to vector<16x1xf32>
    %157 = arith.divf %155, %156 : vector<16x1xf32>
    %158 = vector.broadcast %150 : vector<16x1xf32> to vector<16x32xf32>
    %159 = arith.subf %146, %158 : vector<16x32xf32>
    %cst_60 = arith.constant 9.99999996E-13 : f32
    %160 = vector.broadcast %cst_60 : f32 to vector<16x1xf32>
    %161 = arith.addf %157, %160 : vector<16x1xf32>
    %162 = math.rsqrt %161 : vector<16x1xf32>
    %163 = vector.broadcast %162 : vector<16x1xf32> to vector<16x32xf32>
    %164 = arith.mulf %159, %163 : vector<16x32xf32>
    %165 = vector.broadcast %18 : vector<1x32xf32> to vector<16x32xf32>
    %166 = arith.mulf %164, %165 : vector<16x32xf32>
    %167 = vector.broadcast %19 : vector<1x32xf32> to vector<16x32xf32>
    %168 = arith.addf %166, %167 : vector<16x32xf32>
    %c1 = arith.constant 1 : index
    %c0_61 = arith.constant 0 : index
    %c0_62 = arith.constant 0 : index
    %169 = vector.load %arg8[%c1, %c0_61, %c0_62] : memref<2x8x96xf32, #tpu.memory_space<vmem>>, vector<1x8x96xf32>
    %170 = vector.shape_cast %169 : vector<1x8x96xf32> to vector<8x96xf32>
    %171 = vector.extract_strided_slice %170 {offsets = [0, 0], sizes = [1, 96], strides = [1, 1]} : vector<8x96xf32> to vector<1x96xf32>
    %172 = vector.extract_strided_slice %170 {offsets = [1, 0], sizes = [1, 32], strides = [1, 1]} : vector<8x96xf32> to vector<1x32xf32>
    %173 = vector.extract_strided_slice %170 {offsets = [2, 0], sizes = [1, 32], strides = [1, 1]} : vector<8x96xf32> to vector<1x32xf32>
    %174 = vector.extract_strided_slice %170 {offsets = [3, 0], sizes = [1, 32], strides = [1, 1]} : vector<8x96xf32> to vector<1x32xf32>
    %175 = vector.extract_strided_slice %170 {offsets = [4, 0], sizes = [1, 64], strides = [1, 1]} : vector<8x96xf32> to vector<1x64xf32>
    %176 = vector.extract_strided_slice %170 {offsets = [5, 0], sizes = [1, 32], strides = [1, 1]} : vector<8x96xf32> to vector<1x32xf32>
    %177 = vector.extract_strided_slice %170 {offsets = [6, 0], sizes = [1, 32], strides = [1, 1]} : vector<8x96xf32> to vector<1x32xf32>
    %178 = vector.extract_strided_slice %170 {offsets = [7, 0], sizes = [1, 32], strides = [1, 1]} : vector<8x96xf32> to vector<1x32xf32>
    %c1_63 = arith.constant 1 : index
    %c0_64 = arith.constant 0 : index
    %c0_65 = arith.constant 0 : index
    %179 = vector.load %arg4[%c1_63, %c0_64, %c0_65] : memref<2x32x96xf32, #tpu.memory_space<vmem>>, vector<1x32x96xf32>
    %180 = vector.shape_cast %179 : vector<1x32x96xf32> to vector<32x96xf32>
    %cst_66 = arith.constant dense<0.000000e+00> : vector<16x96xf32>
    %181 = tpu.matmul %168, %180, %cst_66 {dimension_numbers = #tpu.dot_dimension_numbers<[1], [0], [0], [1], [0, 0, 1, 1], [], []>} : vector<16x32xf32>, vector<32x96xf32>, vector<16x96xf32> -> vector<16x96xf32>
    %182 = vector.broadcast %171 : vector<1x96xf32> to vector<16x96xf32>
    %183 = arith.addf %181, %182 : vector<16x96xf32>
    %184 = vector.shape_cast %183 : vector<16x96xf32> to vector<2x8x96xf32>
    %185 = vector.extract_strided_slice %184 {offsets = [0, 0, 0], sizes = [2, 8, 8], strides = [1, 1, 1]} : vector<2x8x96xf32> to vector<2x8x8xf32>
    %186 = vector.extract_strided_slice %184 {offsets = [0, 0, 32], sizes = [2, 8, 8], strides = [1, 1, 1]} : vector<2x8x96xf32> to vector<2x8x8xf32>
    %187 = vector.extract_strided_slice %184 {offsets = [0, 0, 64], sizes = [2, 8, 8], strides = [1, 1, 1]} : vector<2x8x96xf32> to vector<2x8x8xf32>
    "tpu.trace_start"() <{level = 10 : i32, message = "bqd,bkd->bqk"}> : () -> ()
    %cst_67 = arith.constant dense<0.000000e+00> : vector<2x8x8xf32>
    %188 = tpu.matmul %185, %186, %cst_67 {dimension_numbers = #tpu.dot_dimension_numbers<[2], [2], [1], [1], [0, 0, 0, 1, 1, 1], [0], [0]>} : vector<2x8x8xf32>, vector<2x8x8xf32>, vector<2x8x8xf32> -> vector<2x8x8xf32>
    "tpu.trace_stop"() : () -> ()
    %cst_68 = arith.constant 0.353553385 : f32
    %189 = vector.broadcast %cst_68 : f32 to vector<2x8x8xf32>
    %190 = arith.mulf %188, %189 : vector<2x8x8xf32>
    %191 = vector.broadcast %1 : vector<2x1x8xf32> to vector<2x8x8xf32>
    %192 = arith.addf %190, %191 : vector<2x8x8xf32>
    %cst_69 = arith.constant dense<0xFF800000> : vector<2x8xf32>
    %193 = vector.multi_reduction <maximumf>, %192, %cst_69 [2] : vector<2x8x8xf32> to vector<2x8xf32>
    %194 = vector.shape_cast %193 : vector<2x8xf32> to vector<2x8x1xf32>
    %195 = vector.broadcast %194 : vector<2x8x1xf32> to vector<2x8x8xf32>
    %196 = arith.subf %192, %195 : vector<2x8x8xf32>
    %197 = math.exp %196 : vector<2x8x8xf32>
    %cst_70 = arith.constant dense<0.000000e+00> : vector<2x8xf32>
    %198 = vector.multi_reduction <add>, %197, %cst_70 [2] : vector<2x8x8xf32> to vector<2x8xf32>
    %199 = vector.shape_cast %198 : vector<2x8xf32> to vector<2x8x1xf32>
    %200 = vector.broadcast %199 : vector<2x8x1xf32> to vector<2x8x8xf32>
    %201 = arith.divf %197, %200 : vector<2x8x8xf32>
    "tpu.trace_start"() <{level = 10 : i32, message = "bqk,bkd->bqd"}> : () -> ()
    %cst_71 = arith.constant dense<0.000000e+00> : vector<2x8x8xf32>
    %202 = tpu.matmul %201, %187, %cst_71 {dimension_numbers = #tpu.dot_dimension_numbers<[2], [1], [1], [2], [0, 0, 0, 1, 1, 2], [0], [0]>} : vector<2x8x8xf32>, vector<2x8x8xf32>, vector<2x8x8xf32> -> vector<2x8x8xf32>
    "tpu.trace_stop"() : () -> ()
    %203 = vector.extract_strided_slice %184 {offsets = [0, 0, 8], sizes = [2, 8, 8], strides = [1, 1, 1]} : vector<2x8x96xf32> to vector<2x8x8xf32>
    %204 = vector.extract_strided_slice %184 {offsets = [0, 0, 40], sizes = [2, 8, 8], strides = [1, 1, 1]} : vector<2x8x96xf32> to vector<2x8x8xf32>
    %205 = vector.extract_strided_slice %184 {offsets = [0, 0, 72], sizes = [2, 8, 8], strides = [1, 1, 1]} : vector<2x8x96xf32> to vector<2x8x8xf32>
    "tpu.trace_start"() <{level = 10 : i32, message = "bqd,bkd->bqk"}> : () -> ()
    %cst_72 = arith.constant dense<0.000000e+00> : vector<2x8x8xf32>
    %206 = tpu.matmul %203, %204, %cst_72 {dimension_numbers = #tpu.dot_dimension_numbers<[2], [2], [1], [1], [0, 0, 0, 1, 1, 1], [0], [0]>} : vector<2x8x8xf32>, vector<2x8x8xf32>, vector<2x8x8xf32> -> vector<2x8x8xf32>
    "tpu.trace_stop"() : () -> ()
    %cst_73 = arith.constant 0.353553385 : f32
    %207 = vector.broadcast %cst_73 : f32 to vector<2x8x8xf32>
    %208 = arith.mulf %206, %207 : vector<2x8x8xf32>
    %209 = vector.broadcast %1 : vector<2x1x8xf32> to vector<2x8x8xf32>
    %210 = arith.addf %208, %209 : vector<2x8x8xf32>
    %cst_74 = arith.constant dense<0xFF800000> : vector<2x8xf32>
    %211 = vector.multi_reduction <maximumf>, %210, %cst_74 [2] : vector<2x8x8xf32> to vector<2x8xf32>
    %212 = vector.shape_cast %211 : vector<2x8xf32> to vector<2x8x1xf32>
    %213 = vector.broadcast %212 : vector<2x8x1xf32> to vector<2x8x8xf32>
    %214 = arith.subf %210, %213 : vector<2x8x8xf32>
    %215 = math.exp %214 : vector<2x8x8xf32>
    %cst_75 = arith.constant dense<0.000000e+00> : vector<2x8xf32>
    %216 = vector.multi_reduction <add>, %215, %cst_75 [2] : vector<2x8x8xf32> to vector<2x8xf32>
    %217 = vector.shape_cast %216 : vector<2x8xf32> to vector<2x8x1xf32>
    %218 = vector.broadcast %217 : vector<2x8x1xf32> to vector<2x8x8xf32>
    %219 = arith.divf %215, %218 : vector<2x8x8xf32>
    "tpu.trace_start"() <{level = 10 : i32, message = "bqk,bkd->bqd"}> : () -> ()
    %cst_76 = arith.constant dense<0.000000e+00> : vector<2x8x8xf32>
    %220 = tpu.matmul %219, %205, %cst_76 {dimension_numbers = #tpu.dot_dimension_numbers<[2], [1], [1], [2], [0, 0, 0, 1, 1, 2], [0], [0]>} : vector<2x8x8xf32>, vector<2x8x8xf32>, vector<2x8x8xf32> -> vector<2x8x8xf32>
    "tpu.trace_stop"() : () -> ()
    %221 = vector.extract_strided_slice %184 {offsets = [0, 0, 16], sizes = [2, 8, 8], strides = [1, 1, 1]} : vector<2x8x96xf32> to vector<2x8x8xf32>
    %222 = vector.extract_strided_slice %184 {offsets = [0, 0, 48], sizes = [2, 8, 8], strides = [1, 1, 1]} : vector<2x8x96xf32> to vector<2x8x8xf32>
    %223 = vector.extract_strided_slice %184 {offsets = [0, 0, 80], sizes = [2, 8, 8], strides = [1, 1, 1]} : vector<2x8x96xf32> to vector<2x8x8xf32>
    "tpu.trace_start"() <{level = 10 : i32, message = "bqd,bkd->bqk"}> : () -> ()
    %cst_77 = arith.constant dense<0.000000e+00> : vector<2x8x8xf32>
    %224 = tpu.matmul %221, %222, %cst_77 {dimension_numbers = #tpu.dot_dimension_numbers<[2], [2], [1], [1], [0, 0, 0, 1, 1, 1], [0], [0]>} : vector<2x8x8xf32>, vector<2x8x8xf32>, vector<2x8x8xf32> -> vector<2x8x8xf32>
    "tpu.trace_stop"() : () -> ()
    %cst_78 = arith.constant 0.353553385 : f32
    %225 = vector.broadcast %cst_78 : f32 to vector<2x8x8xf32>
    %226 = arith.mulf %224, %225 : vector<2x8x8xf32>
    %227 = vector.broadcast %1 : vector<2x1x8xf32> to vector<2x8x8xf32>
    %228 = arith.addf %226, %227 : vector<2x8x8xf32>
    %cst_79 = arith.constant dense<0xFF800000> : vector<2x8xf32>
    %229 = vector.multi_reduction <maximumf>, %228, %cst_79 [2] : vector<2x8x8xf32> to vector<2x8xf32>
    %230 = vector.shape_cast %229 : vector<2x8xf32> to vector<2x8x1xf32>
    %231 = vector.broadcast %230 : vector<2x8x1xf32> to vector<2x8x8xf32>
    %232 = arith.subf %228, %231 : vector<2x8x8xf32>
    %233 = math.exp %232 : vector<2x8x8xf32>
    %cst_80 = arith.constant dense<0.000000e+00> : vector<2x8xf32>
    %234 = vector.multi_reduction <add>, %233, %cst_80 [2] : vector<2x8x8xf32> to vector<2x8xf32>
    %235 = vector.shape_cast %234 : vector<2x8xf32> to vector<2x8x1xf32>
    %236 = vector.broadcast %235 : vector<2x8x1xf32> to vector<2x8x8xf32>
    %237 = arith.divf %233, %236 : vector<2x8x8xf32>
    "tpu.trace_start"() <{level = 10 : i32, message = "bqk,bkd->bqd"}> : () -> ()
    %cst_81 = arith.constant dense<0.000000e+00> : vector<2x8x8xf32>
    %238 = tpu.matmul %237, %223, %cst_81 {dimension_numbers = #tpu.dot_dimension_numbers<[2], [1], [1], [2], [0, 0, 0, 1, 1, 2], [0], [0]>} : vector<2x8x8xf32>, vector<2x8x8xf32>, vector<2x8x8xf32> -> vector<2x8x8xf32>
    "tpu.trace_stop"() : () -> ()
    %239 = vector.extract_strided_slice %184 {offsets = [0, 0, 24], sizes = [2, 8, 8], strides = [1, 1, 1]} : vector<2x8x96xf32> to vector<2x8x8xf32>
    %240 = vector.extract_strided_slice %184 {offsets = [0, 0, 56], sizes = [2, 8, 8], strides = [1, 1, 1]} : vector<2x8x96xf32> to vector<2x8x8xf32>
    %241 = vector.extract_strided_slice %184 {offsets = [0, 0, 88], sizes = [2, 8, 8], strides = [1, 1, 1]} : vector<2x8x96xf32> to vector<2x8x8xf32>
    "tpu.trace_start"() <{level = 10 : i32, message = "bqd,bkd->bqk"}> : () -> ()
    %cst_82 = arith.constant dense<0.000000e+00> : vector<2x8x8xf32>
    %242 = tpu.matmul %239, %240, %cst_82 {dimension_numbers = #tpu.dot_dimension_numbers<[2], [2], [1], [1], [0, 0, 0, 1, 1, 1], [0], [0]>} : vector<2x8x8xf32>, vector<2x8x8xf32>, vector<2x8x8xf32> -> vector<2x8x8xf32>
    "tpu.trace_stop"() : () -> ()
    %cst_83 = arith.constant 0.353553385 : f32
    %243 = vector.broadcast %cst_83 : f32 to vector<2x8x8xf32>
    %244 = arith.mulf %242, %243 : vector<2x8x8xf32>
    %245 = vector.broadcast %1 : vector<2x1x8xf32> to vector<2x8x8xf32>
    %246 = arith.addf %244, %245 : vector<2x8x8xf32>
    %cst_84 = arith.constant dense<0xFF800000> : vector<2x8xf32>
    %247 = vector.multi_reduction <maximumf>, %246, %cst_84 [2] : vector<2x8x8xf32> to vector<2x8xf32>
    %248 = vector.shape_cast %247 : vector<2x8xf32> to vector<2x8x1xf32>
    %249 = vector.broadcast %248 : vector<2x8x1xf32> to vector<2x8x8xf32>
    %250 = arith.subf %246, %249 : vector<2x8x8xf32>
    %251 = math.exp %250 : vector<2x8x8xf32>
    %cst_85 = arith.constant dense<0.000000e+00> : vector<2x8xf32>
    %252 = vector.multi_reduction <add>, %251, %cst_85 [2] : vector<2x8x8xf32> to vector<2x8xf32>
    %253 = vector.shape_cast %252 : vector<2x8xf32> to vector<2x8x1xf32>
    %254 = vector.broadcast %253 : vector<2x8x1xf32> to vector<2x8x8xf32>
    %255 = arith.divf %251, %254 : vector<2x8x8xf32>
    "tpu.trace_start"() <{level = 10 : i32, message = "bqk,bkd->bqd"}> : () -> ()
    %cst_86 = arith.constant dense<0.000000e+00> : vector<2x8x8xf32>
    %256 = tpu.matmul %255, %241, %cst_86 {dimension_numbers = #tpu.dot_dimension_numbers<[2], [1], [1], [2], [0, 0, 0, 1, 1, 2], [0], [0]>} : vector<2x8x8xf32>, vector<2x8x8xf32>, vector<2x8x8xf32> -> vector<2x8x8xf32>
    "tpu.trace_stop"() : () -> ()
    %257 = tpu.concatenate %202, %220, %238, %256 in 2 : vector<2x8x8xf32>, vector<2x8x8xf32>, vector<2x8x8xf32>, vector<2x8x8xf32> -> vector<2x8x32xf32>
    %258 = vector.shape_cast %257 : vector<2x8x32xf32> to vector<16x32xf32>
    %c1_87 = arith.constant 1 : index
    %c0_88 = arith.constant 0 : index
    %c0_89 = arith.constant 0 : index
    %259 = vector.load %arg5[%c1_87, %c0_88, %c0_89] : memref<2x32x32xf32, #tpu.memory_space<vmem>>, vector<1x32x32xf32>
    %260 = vector.shape_cast %259 : vector<1x32x32xf32> to vector<32x32xf32>
    %cst_90 = arith.constant dense<0.000000e+00> : vector<16x32xf32>
    %261 = tpu.matmul %258, %260, %cst_90 {dimension_numbers = #tpu.dot_dimension_numbers<[1], [0], [0], [1], [0, 0, 1, 1], [], []>} : vector<16x32xf32>, vector<32x32xf32>, vector<16x32xf32> -> vector<16x32xf32>
    %262 = vector.broadcast %172 : vector<1x32xf32> to vector<16x32xf32>
    %263 = arith.addf %261, %262 : vector<16x32xf32>
    %264 = arith.addf %263, %168 : vector<16x32xf32>
    %cst_91 = arith.constant dense<0.000000e+00> : vector<16xf32>
    %265 = vector.multi_reduction <add>, %264, %cst_91 [1] : vector<16x32xf32> to vector<16xf32>
    %266 = vector.shape_cast %265 : vector<16xf32> to vector<16x1xf32>
    %cst_92 = arith.constant 3.200000e+01 : f32
    %267 = vector.broadcast %cst_92 : f32 to vector<16x1xf32>
    %268 = arith.divf %266, %267 : vector<16x1xf32>
    %269 = vector.broadcast %268 : vector<16x1xf32> to vector<16x32xf32>
    %270 = arith.subf %264, %269 : vector<16x32xf32>
    %271 = arith.mulf %270, %270 : vector<16x32xf32>
    %cst_93 = arith.constant dense<0.000000e+00> : vector<16xf32>
    %272 = vector.multi_reduction <add>, %271, %cst_93 [1] : vector<16x32xf32> to vector<16xf32>
    %273 = vector.shape_cast %272 : vector<16xf32> to vector<16x1xf32>
    %cst_94 = arith.constant 3.200000e+01 : f32
    %274 = vector.broadcast %cst_94 : f32 to vector<16x1xf32>
    %275 = arith.divf %273, %274 : vector<16x1xf32>
    %276 = vector.broadcast %268 : vector<16x1xf32> to vector<16x32xf32>
    %277 = arith.subf %264, %276 : vector<16x32xf32>
    %cst_95 = arith.constant 9.99999996E-13 : f32
    %278 = vector.broadcast %cst_95 : f32 to vector<16x1xf32>
    %279 = arith.addf %275, %278 : vector<16x1xf32>
    %280 = math.rsqrt %279 : vector<16x1xf32>
    %281 = vector.broadcast %280 : vector<16x1xf32> to vector<16x32xf32>
    %282 = arith.mulf %277, %281 : vector<16x32xf32>
    %283 = vector.broadcast %173 : vector<1x32xf32> to vector<16x32xf32>
    %284 = arith.mulf %282, %283 : vector<16x32xf32>
    %285 = vector.broadcast %174 : vector<1x32xf32> to vector<16x32xf32>
    %286 = arith.addf %284, %285 : vector<16x32xf32>
    %c1_96 = arith.constant 1 : index
    %c0_97 = arith.constant 0 : index
    %c0_98 = arith.constant 0 : index
    %287 = vector.load %arg6[%c1_96, %c0_97, %c0_98] : memref<2x32x64xf32, #tpu.memory_space<vmem>>, vector<1x32x64xf32>
    %288 = vector.shape_cast %287 : vector<1x32x64xf32> to vector<32x64xf32>
    %cst_99 = arith.constant dense<0.000000e+00> : vector<16x64xf32>
    %289 = tpu.matmul %286, %288, %cst_99 {dimension_numbers = #tpu.dot_dimension_numbers<[1], [0], [0], [1], [0, 0, 1, 1], [], []>} : vector<16x32xf32>, vector<32x64xf32>, vector<16x64xf32> -> vector<16x64xf32>
    %290 = vector.broadcast %175 : vector<1x64xf32> to vector<16x64xf32>
    %291 = arith.addf %289, %290 : vector<16x64xf32>
    %cst_100 = arith.constant 5.000000e-01 : f32
    %292 = vector.broadcast %cst_100 : f32 to vector<16x64xf32>
    %293 = arith.mulf %292, %291 : vector<16x64xf32>
    %cst_101 = arith.constant 1.41421354 : f32
    %294 = vector.broadcast %cst_101 : f32 to vector<16x64xf32>
    %295 = arith.divf %291, %294 : vector<16x64xf32>
    %296 = math.erf %295 : vector<16x64xf32>
    %cst_102 = arith.constant 1.000000e+00 : f32
    %297 = vector.broadcast %cst_102 : f32 to vector<16x64xf32>
    %298 = arith.addf %297, %296 : vector<16x64xf32>
    %299 = arith.mulf %293, %298 : vector<16x64xf32>
    %c1_103 = arith.constant 1 : index
    %c0_104 = arith.constant 0 : index
    %c0_105 = arith.constant 0 : index
    %300 = vector.load %arg7[%c1_103, %c0_104, %c0_105] : memref<2x64x32xf32, #tpu.memory_space<vmem>>, vector<1x64x32xf32>
    %301 = vector.shape_cast %300 : vector<1x64x32xf32> to vector<64x32xf32>
    %cst_106 = arith.constant dense<0.000000e+00> : vector<16x32xf32>
    %302 = tpu.matmul %299, %301, %cst_106 {dimension_numbers = #tpu.dot_dimension_numbers<[1], [0], [0], [1], [0, 0, 1, 1], [], []>} : vector<16x64xf32>, vector<64x32xf32>, vector<16x32xf32> -> vector<16x32xf32>
    %303 = vector.broadcast %176 : vector<1x32xf32> to vector<16x32xf32>
    %304 = arith.addf %302, %303 : vector<16x32xf32>
    %305 = arith.addf %304, %286 : vector<16x32xf32>
    %cst_107 = arith.constant dense<0.000000e+00> : vector<16xf32>
    %306 = vector.multi_reduction <add>, %305, %cst_107 [1] : vector<16x32xf32> to vector<16xf32>
    %307 = vector.shape_cast %306 : vector<16xf32> to vector<16x1xf32>
    %cst_108 = arith.constant 3.200000e+01 : f32
    %308 = vector.broadcast %cst_108 : f32 to vector<16x1xf32>
    %309 = arith.divf %307, %308 : vector<16x1xf32>
    %310 = vector.broadcast %309 : vector<16x1xf32> to vector<16x32xf32>
    %311 = arith.subf %305, %310 : vector<16x32xf32>
    %312 = arith.mulf %311, %311 : vector<16x32xf32>
    %cst_109 = arith.constant dense<0.000000e+00> : vector<16xf32>
    %313 = vector.multi_reduction <add>, %312, %cst_109 [1] : vector<16x32xf32> to vector<16xf32>
    %314 = vector.shape_cast %313 : vector<16xf32> to vector<16x1xf32>
    %cst_110 = arith.constant 3.200000e+01 : f32
    %315 = vector.broadcast %cst_110 : f32 to vector<16x1xf32>
    %316 = arith.divf %314, %315 : vector<16x1xf32>
    %317 = vector.broadcast %309 : vector<16x1xf32> to vector<16x32xf32>
    %318 = arith.subf %305, %317 : vector<16x32xf32>
    %cst_111 = arith.constant 9.99999996E-13 : f32
    %319 = vector.broadcast %cst_111 : f32 to vector<16x1xf32>
    %320 = arith.addf %316, %319 : vector<16x1xf32>
    %321 = math.rsqrt %320 : vector<16x1xf32>
    %322 = vector.broadcast %321 : vector<16x1xf32> to vector<16x32xf32>
    %323 = arith.mulf %318, %322 : vector<16x32xf32>
    %324 = vector.broadcast %177 : vector<1x32xf32> to vector<16x32xf32>
    %325 = arith.mulf %323, %324 : vector<16x32xf32>
    %326 = vector.broadcast %178 : vector<1x32xf32> to vector<16x32xf32>
    %327 = arith.addf %325, %326 : vector<16x32xf32>
    %328 = vector.shape_cast %327 : vector<16x32xf32> to vector<2x8x32xf32>
    %329 = vector.broadcast %0 : vector<2x8x1xf32> to vector<2x8x32xf32>
    %330 = arith.mulf %328, %329 : vector<2x8x32xf32>
    %c0_112 = arith.constant 0 : index
    %c0_113 = arith.constant 0 : index
    %c0_114 = arith.constant 0 : index
    %331 = vector.load %arg10[%c0_112, %c0_113, %c0_114] : memref<2x8x32xf32, #tpu.memory_space<vmem>>, vector<2x8x32xf32>
    tpu.vector_store %arg10[%c0_112, %c0_113, %c0_114], %330 {strides = array<i32>} : memref<2x8x32xf32, #tpu.memory_space<vmem>>, vector<2x8x32xf32>,
    %c0_115 = arith.constant 0 : index
    %c0_116 = arith.constant 0 : index
    %332 = vector.load %arg9[%c0_115, %c0_116] : memref<4x32xf32, #tpu.memory_space<vmem>>, vector<1x32xf32>
    %c1_117 = arith.constant 1 : index
    %c0_118 = arith.constant 0 : index
    %333 = vector.load %arg9[%c1_117, %c0_118] : memref<4x32xf32, #tpu.memory_space<vmem>>, vector<1x32xf32>
    %c2 = arith.constant 2 : index
    %c0_119 = arith.constant 0 : index
    %334 = vector.load %arg9[%c2, %c0_119] : memref<4x32xf32, #tpu.memory_space<vmem>>, vector<1x32xf32>
    %c3 = arith.constant 3 : index
    %c0_120 = arith.constant 0 : index
    %335 = vector.load %arg9[%c3, %c0_120] : memref<4x32xf32, #tpu.memory_space<vmem>>, vector<1x1xf32>
    %cst_121 = arith.constant dense<0.000000e+00> : vector<2x8xf32>
    %336 = vector.multi_reduction <add>, %330, %cst_121 [2] : vector<2x8x32xf32> to vector<2x8xf32>
    %337 = vector.shape_cast %336 : vector<2x8xf32> to vector<2x8x1xf32>
    %cst_122 = arith.constant 3.200000e+01 : f32
    %338 = vector.broadcast %cst_122 : f32 to vector<2x8x1xf32>
    %339 = arith.divf %337, %338 : vector<2x8x1xf32>
    %340 = vector.broadcast %339 : vector<2x8x1xf32> to vector<2x8x32xf32>
    %341 = arith.subf %330, %340 : vector<2x8x32xf32>
    %342 = arith.mulf %341, %341 : vector<2x8x32xf32>
    %cst_123 = arith.constant dense<0.000000e+00> : vector<2x8xf32>
    %343 = vector.multi_reduction <add>, %342, %cst_123 [2] : vector<2x8x32xf32> to vector<2x8xf32>
    %344 = vector.shape_cast %343 : vector<2x8xf32> to vector<2x8x1xf32>
    %cst_124 = arith.constant 3.200000e+01 : f32
    %345 = vector.broadcast %cst_124 : f32 to vector<2x8x1xf32>
    %346 = arith.divf %344, %345 : vector<2x8x1xf32>
    %347 = vector.broadcast %339 : vector<2x8x1xf32> to vector<2x8x32xf32>
    %348 = arith.subf %330, %347 : vector<2x8x32xf32>
    %cst_125 = arith.constant 9.99999997E-7 : f32
    %349 = vector.broadcast %cst_125 : f32 to vector<2x8x1xf32>
    %350 = arith.addf %346, %349 : vector<2x8x1xf32>
    %351 = math.rsqrt %350 : vector<2x8x1xf32>
    %352 = vector.broadcast %351 : vector<2x8x1xf32> to vector<2x8x32xf32>
    %353 = arith.mulf %348, %352 : vector<2x8x32xf32>
    %354 = vector.shape_cast %332 : vector<1x32xf32> to vector<1x1x32xf32>
    %355 = vector.broadcast %354 : vector<1x1x32xf32> to vector<2x8x32xf32>
    %356 = arith.mulf %353, %355 : vector<2x8x32xf32>
    %357 = vector.shape_cast %333 : vector<1x32xf32> to vector<1x1x32xf32>
    %358 = vector.broadcast %357 : vector<1x1x32xf32> to vector<2x8x32xf32>
    %359 = arith.addf %356, %358 : vector<2x8x32xf32>
    %360 = vector.shape_cast %334 : vector<1x32xf32> to vector<1x1x32xf32>
    %361 = vector.broadcast %360 : vector<1x1x32xf32> to vector<2x8x32xf32>
    %362 = arith.mulf %359, %361 : vector<2x8x32xf32>
    %cst_126 = arith.constant dense<0.000000e+00> : vector<2x8xf32>
    %363 = vector.multi_reduction <add>, %362, %cst_126 [2] : vector<2x8x32xf32> to vector<2x8xf32>
    %364 = vector.shape_cast %363 : vector<2x8xf32> to vector<2x8x1xf32>
    %365 = vector.shape_cast %335 : vector<1x1xf32> to vector<1x1x1xf32>
    %366 = vector.broadcast %365 : vector<1x1x1xf32> to vector<2x8x1xf32>
    %367 = arith.addf %364, %366 : vector<2x8x1xf32>
    %368 = arith.mulf %367, %0 : vector<2x8x1xf32>
    %c0_127 = arith.constant 0 : index
    %c0_128 = arith.constant 0 : index
    %c0_129 = arith.constant 0 : index
    %369 = vector.load %arg11[%c0_127, %c0_128, %c0_129] : memref<2x8x1xf32, #tpu.memory_space<vmem>>, vector<2x8x1xf32>
    tpu.vector_store %arg11[%c0_127, %c0_128, %c0_129], %368 {strides = array<i32>} : memref<2x8x1xf32, #tpu.memory_space<vmem>>, vector<2x8x1xf32>,
    return
  }
}

</mosaic_0001>

<llo_original>
// kernel: sum_encoder_forward.1
$region0: #{sum_encoder_forward.1}
  #allocation0 [shape = 'u32[]', space=smem, size = 0x4, offset = 0x4, fixed_abs, tag = 'smem constant byte address 0x4 - core index']
  #allocation1 [shape = 'u32[144,128]{1,0:T(1,128)}', space=vmem, size = 0x12000, scoped, tag = 'internal scratch']
  %s0 = inlined_call_operand.vmem [shape: f32[2,8,32], index: 0, kind: input, shape index: {}]
  %s1 = inlined_call_operand.vmem [shape: f32[2,8,1], index: 1, kind: input, shape index: {}]
  %s2 = inlined_call_operand.vmem [shape: f32[2,1,8], index: 2, kind: input, shape index: {}]
  %s3 = inlined_call_operand.vmem [shape: f32[8,32], index: 3, kind: input, shape index: {}]
  %s4 = inlined_call_operand.vmem [shape: f32[2,32,96], index: 4, kind: input, shape index: {}]
  %s5 = inlined_call_operand.vmem [shape: f32[2,32,32], index: 5, kind: input, shape index: {}]
  %s6 = inlined_call_operand.vmem [shape: f32[2,32,64], index: 6, kind: input, shape index: {}]
  %s7 = inlined_call_operand.vmem [shape: f32[2,64,32], index: 7, kind: input, shape index: {}]
  %s8 = inlined_call_operand.vmem [shape: f32[2,8,96], index: 8, kind: input, shape index: {}]
  %s9 = inlined_call_operand.vmem [shape: f32[4,32], index: 9, kind: input, shape index: {}]
  %s10 = inlined_call_operand.hbm [shape: f32[2,8,32], index: 10, kind: output, shape index: {0}]
  %s11 = inlined_call_operand.vmem [shape: f32[2,8,1], index: 11, kind: output, shape index: {1}]
  %12 = xla_tuple %s10, %s11
  %s13 = sld [smem:[#allocation0]]
  $region58: #{sum_encoder_forward.1} parent=0
    _
  %s15 = ssub.s32 1, %s13
  %s16 = scalar_select 0, %s15, %s13
  $region1: #{sum_encoder_forward.1} parent=0
    #allocation2 [shape = 'u8[8192]{0}', space=vmem, size = 0x2000, scoped, tag = 'output window, operand 0, single buffered']
    #allocation3 [shape = 's32[1]{0}', space=sflag, size = 0x4, scoped, tag = 'scoped memory for sum_encoder_forward.1']
    %17 = vsyncpa [#allocation3], 0
    // Predicated region
    $region2: #{sum_encoder_forward.1} parent=1 // pred_check
      _
    $region3: #{sum_encoder_forward.1} parent=1 // pred_check_branch
      %19 = sbr.rel (0) target = $region5
    $region4: #{sum_encoder_forward.1} parent=1 // pred_region
      _
    $region5: #{sum_encoder_forward.1} parent=1 // pred_fallthru
      _
    // Predicated region
    $region6: #{sum_encoder_forward.1} parent=1 // pred_check
      _
    $region7: #{sum_encoder_forward.1} parent=1 // pred_check_branch
      %21 = sbr.rel (0) target = $region9
    $region8: #{sum_encoder_forward.1} parent=1 // pred_region
      _
    $region9: #{sum_encoder_forward.1} parent=1 // pred_fallthru
      _
    // Predicated region
    $region10: #{sum_encoder_forward.1} parent=1 // pred_check
      _
    $region11: #{sum_encoder_forward.1} parent=1 // pred_check_branch
      %23 = sbr.rel (0) target = $region13
    $region12: #{sum_encoder_forward.1} parent=1 // pred_region
      _
    $region13: #{sum_encoder_forward.1} parent=1 // pred_fallthru
      _
    // Predicated region
    $region14: #{sum_encoder_forward.1} parent=1 // pred_check
      _
    $region15: #{sum_encoder_forward.1} parent=1 // pred_check_branch
      %25 = sbr.rel (0) target = $region17
    $region16: #{sum_encoder_forward.1} parent=1 // pred_region
      _
    $region17: #{sum_encoder_forward.1} parent=1 // pred_fallthru
      _
    // Predicated region
    $region18: #{sum_encoder_forward.1} parent=1 // pred_check
      _
    $region19: #{sum_encoder_forward.1} parent=1 // pred_check_branch
      %27 = sbr.rel (0) target = $region21
    $region20: #{sum_encoder_forward.1} parent=1 // pred_region
      _
    $region21: #{sum_encoder_forward.1} parent=1 // pred_fallthru
      _
    // Predicated region
    $region22: #{sum_encoder_forward.1} parent=1 // pred_check
      _
    $region23: #{sum_encoder_forward.1} parent=1 // pred_check_branch
      %29 = sbr.rel (0) target = $region25
    $region24: #{sum_encoder_forward.1} parent=1 // pred_region
      _
    $region25: #{sum_encoder_forward.1} parent=1 // pred_fallthru
      _
    // Predicated region
    $region26: #{sum_encoder_forward.1} parent=1 // pred_check
      _
    $region27: #{sum_encoder_forward.1} parent=1 // pred_check_branch
      %31 = sbr.rel (0) target = $region29
    $region28: #{sum_encoder_forward.1} parent=1 // pred_region
      _
    $region29: #{sum_encoder_forward.1} parent=1 // pred_fallthru
      _
    // Predicated region
    $region30: #{sum_encoder_forward.1} parent=1 // pred_check
      _
    $region31: #{sum_encoder_forward.1} parent=1 // pred_check_branch
      %33 = sbr.rel (0) target = $region33
    $region32: #{sum_encoder_forward.1} parent=1 // pred_region
      _
    $region33: #{sum_encoder_forward.1} parent=1 // pred_fallthru
      _
    // Predicated region
    $region34: #{sum_encoder_forward.1} parent=1 // pred_check
      _
    $region35: #{sum_encoder_forward.1} parent=1 // pred_check_branch
      %35 = sbr.rel (0) target = $region37
    $region36: #{sum_encoder_forward.1} parent=1 // pred_region
      _
    $region37: #{sum_encoder_forward.1} parent=1 // pred_fallthru
      _
    // Predicated region
    $region38: #{sum_encoder_forward.1} parent=1 // pred_check
      _
    $region39: #{sum_encoder_forward.1} parent=1 // pred_check_branch
      %37 = sbr.rel (0) target = $region41
    $region40: #{sum_encoder_forward.1} parent=1 // pred_region
      _
    $region41: #{sum_encoder_forward.1} parent=1 // pred_fallthru
      _
    %v38 = vld [vmem:[%s1] sm:$0xff]
    %v39 = vld [vmem:[%s1 + $0x8] sm:$0xff]
    %v40 = vld [vmem:[%s2] sm:$0x1]
    %v41 = vld [vmem:[%s2 + $0x1] sm:$0x1]
    %v42 = vld [vmem:[%s0] sm:$0xff]
    %v43 = vld [vmem:[%s0 + $0x8] sm:$0xff]
    %45 = vset.pattern.permute.xlu0 0
    %46 = vperm.xlu0 %45, %v38
    %v47 = vpop.permute.xlu0 %46
    %50 = vset.pattern.permute.xlu0 0
    %51 = vperm.xlu0 %50, %v39
    %v52 = vpop.permute.xlu0 %51
    %v54 = vmul.f32 %v42, %v47
    %v55 = vmul.f32 %v43, %v52
    %v56 = vld [vmem:[%s3] sm:$0xff]
    %v57 = vadd.f32 %v54, %v56
    %v58 = vadd.f32 %v55, %v56
    %v59 = vld [vmem:[%s8] sm:$0xff]
    %v60 = vld [vmem:[%s4] sm:$0xff]
    %v61 = vld [vmem:[%s4 + $0x8] sm:$0xff]
    %v62 = vld [vmem:[%s4 + $0x10] sm:$0xff]
    %v63 = vld [vmem:[%s4 + $0x18] sm:$0xff]
    %v64 = vlaneseq
    %v65 = vshrl.u32 %v64, 7
    %v66 = vsub.s32 0, %v65
    %v67 = vrot.slane %v59, %v66
    %vm68 = vcmask 261120
    %v70 = vsel %vm68, %v57, 0
    %v73 = vsel %vm68, %v58, 0
    %75 = vmatprep.subr.mxu0 0.0
    %76 = vmatpush1.msra.mxu0 0.0
    %77 = vmatprep.subr.mxu0 0.0
    %78 = vmatpush1.msra.mxu0 0.0
    %79 = vmatprep.subr.mxu0 0.0
    %80 = vmatpush1.msra.mxu0 0.0
    %81 = vmatprep.subr.mxu0 0.0
    %82 = vmatpush1.msra.mxu0 0.0
    %83 = vmatprep.subr.mxu0 0.0
    %84 = vmatpush1.msra.mxu0 0.0
    %85 = vmatprep.subr.mxu0 0.0
    %86 = vmatpush1.msra.mxu0 0.0
    %87 = vmatprep.subr.mxu0 0.0
    %88 = vmatpush1.msra.mxu0 0.0
    %89 = vmatprep.subr.mxu0 0.0
    %90 = vmatpush1.msra.mxu0 0.0
    %91 = vmatprep.subr.mxu0 0.0
    %92 = vmatpush1.msra.mxu0 0.0
    %93 = vmatprep.subr.mxu0 0.0
    %94 = vmatpush1.msra.mxu0 0.0
    %95 = vmatprep.subr.mxu0 0.0
    %96 = vmatpush1.msra.mxu0 0.0
    %97 = vmatprep.subr.mxu0 0.0
    %98 = vmatpush1.msra.mxu0 0.0
    %99 = vmatprep.subr.mxu0 0.0
    %100 = vmatpush1.msra.mxu0 %v63
    %101 = vmatprep.subr.mxu0 0.0
    %102 = vmatpush1.msra.mxu0 %v62
    %103 = vmatprep.subr.mxu0 0.0
    %104 = vmatpush1.msra.mxu0 %v61
    %105 = vmatprep.subr.mxu0 0.0
    %106 = vmatpush1.msra.mxu0 %v60
    %107 = vmatprep.subr.mxu0 0.0
    %108 = vmatpush2.msra.mxu0 0.0
    %109 = vmatprep.subr.mxu0 0.0
    %110 = vmatpush2.msra.mxu0 0.0
    %111 = vmatprep.subr.mxu0 0.0
    %112 = vmatpush2.msra.mxu0 0.0
    %113 = vmatprep.subr.mxu0 0.0
    %114 = vmatpush2.msra.mxu0 0.0
    %115 = vmatprep.subr.mxu0 0.0
    %116 = vmatpush2.msra.mxu0 0.0
    %117 = vmatprep.subr.mxu0 0.0
    %118 = vmatpush2.msra.mxu0 0.0
    %119 = vmatprep.subr.mxu0 0.0
    %120 = vmatpush2.msra.mxu0 0.0
    %121 = vmatprep.subr.mxu0 0.0
    %122 = vmatpush2.msra.mxu0 0.0
    %123 = vmatprep.subr.mxu0 0.0
    %124 = vmatpush2.msra.mxu0 0.0
    %125 = vmatprep.subr.mxu0 0.0
    %126 = vmatpush2.msra.mxu0 0.0
    %127 = vmatprep.subr.mxu0 0.0
    %128 = vmatpush2.msra.mxu0 0.0
    %129 = vmatprep.subr.mxu0 0.0
    %130 = vmatpush2.msra.mxu0 0.0
    %131 = vmatprep.subr.mxu0 0.0
    %132 = vmatpush2.msra.mxu0 0.0
    %133 = vmatprep.subr.mxu0 0.0
    %134 = vmatpush2.msra.mxu0 0.0
    %135 = vmatprep.subr.mxu0 0.0
    %136 = vmatpush2.msra.mxu0 0.0
    %137 = vmatprep.subr.mxu0 0.0
    %138 = vmatpush2.msra.mxu0 0.0
    %139 = vmatprep.mubr.f32.mxu0 0.0
    %140 = vmatmul.mubr.f32.gmra.mxu0 %v70
    %v141 = vpop.f32.mrf.mxu0
    %v142 = vadd.f32 %v67, %v141
    %v143 = vpop.f32.mrf.mxu0
    %144 = vmatprep.mubr.f32.mxu0 0.0
    %145 = vmatmul.mubr.f32.gmra.mxu0 %v73
    %v146 = vpop.f32.mrf.mxu0
    %v147 = vadd.f32 %v67, %v146
    %v148 = vpop.f32.mrf.mxu0
    %149 = vdwg.mxu0
    %151 = vrot.lane.b32.xlu0 %v142, 96
    %v152 = vpop.permute.xlu0 %151
    %vm153 = vcmask 64512
    %v154 = vsel %vm153, %v142, 0
    %v156 = vsel %vm153, %v152, 0
    %158 = vmatprep.subr.mxu0 0.0
    %159 = vmatpush1.xpose.msra.mxu0 0.0
    %160 = vmatprep.subr.mxu0 0.0
    %161 = vmatpush1.xpose.msra.mxu0 0.0
    %162 = vmatprep.subr.mxu0 0.0
    %163 = vmatpush1.xpose.msra.mxu0 0.0
    %164 = vmatprep.subr.mxu0 0.0
    %165 = vmatpush1.xpose.msra.mxu0 0.0
    %166 = vmatprep.subr.mxu0 0.0
    %167 = vmatpush1.xpose.msra.mxu0 0.0
    %168 = vmatprep.subr.mxu0 0.0
    %169 = vmatpush1.xpose.msra.mxu0 0.0
    %170 = vmatprep.subr.mxu0 0.0
    %171 = vmatpush1.xpose.msra.mxu0 0.0
    %172 = vmatprep.subr.mxu0 0.0
    %173 = vmatpush1.xpose.msra.mxu0 0.0
    %174 = vmatprep.subr.mxu0 0.0
    %175 = vmatpush1.xpose.msra.mxu0 0.0
    %176 = vmatprep.subr.mxu0 0.0
    %177 = vmatpush1.xpose.msra.mxu0 0.0
    %178 = vmatprep.subr.mxu0 0.0
    %179 = vmatpush1.xpose.msra.mxu0 0.0
    %180 = vmatprep.subr.mxu0 0.0
    %181 = vmatpush1.xpose.msra.mxu0 0.0
    %182 = vmatprep.subr.mxu0 0.0
    %183 = vmatpush1.xpose.msra.mxu0 0.0
    %184 = vmatprep.subr.mxu0 0.0
    %185 = vmatpush1.xpose.msra.mxu0 0.0
    %186 = vmatprep.subr.mxu0 0.0
    %187 = vmatpush1.xpose.msra.mxu0 0.0
    %188 = vmatprep.subr.mxu0 0.0
    %189 = vmatpush1.xpose.msra.mxu0 %v156
    %190 = vmatprep.subr.mxu0 0.0
    %191 = vmatpush2.xpose.msra.mxu0 0.0
    %192 = vmatprep.subr.mxu0 0.0
    %193 = vmatpush2.xpose.msra.mxu0 0.0
    %194 = vmatprep.subr.mxu0 0.0
    %195 = vmatpush2.xpose.msra.mxu0 0.0
    %196 = vmatprep.subr.mxu0 0.0
    %197 = vmatpush2.xpose.msra.mxu0 0.0
    %198 = vmatprep.subr.mxu0 0.0
    %199 = vmatpush2.xpose.msra.mxu0 0.0
    %200 = vmatprep.subr.mxu0 0.0
    %201 = vmatpush2.xpose.msra.mxu0 0.0
    %202 = vmatprep.subr.mxu0 0.0
    %203 = vmatpush2.xpose.msra.mxu0 0.0
    %204 = vmatprep.subr.mxu0 0.0
    %205 = vmatpush2.xpose.msra.mxu0 0.0
    %206 = vmatprep.subr.mxu0 0.0
    %207 = vmatpush2.xpose.msra.mxu0 0.0
    %208 = vmatprep.subr.mxu0 0.0
    %209 = vmatpush2.xpose.msra.mxu0 0.0
    %210 = vmatprep.subr.mxu0 0.0
    %211 = vmatpush2.xpose.msra.mxu0 0.0
    %212 = vmatprep.subr.mxu0 0.0
    %213 = vmatpush2.xpose.msra.mxu0 0.0
    %214 = vmatprep.subr.mxu0 0.0
    %215 = vmatpush2.xpose.msra.mxu0 0.0
    %216 = vmatprep.subr.mxu0 0.0
    %217 = vmatpush2.xpose.msra.mxu0 0.0
    %218 = vmatprep.subr.mxu0 0.0
    %219 = vmatpush2.xpose.msra.mxu0 0.0
    %220 = vmatprep.subr.mxu0 0.0
    %221 = vmatpush2.xpose.msra.mxu0 0.0
    %222 = vmatprep.mubr.f32.mxu0 0.0
    %223 = vmatmul.mubr.f32.gmra.mxu0 %v154
    %v224 = vpop.f32.mrf.mxu0
    %v225 = vadd.f32 0.0, %v224
    %v226 = vpop.f32.mrf.mxu0
    %227 = vdwg.mxu0
    %229 = vrot.lane.b32.xlu0 %v147, 96
    %v230 = vpop.permute.xlu0 %229
    %v231 = vsel %vm153, %v147, 0
    %v233 = vsel %vm153, %v230, 0
    %235 = vmatprep.subr.mxu0 0.0
    %236 = vmatpush1.xpose.msra.mxu0 0.0
    %237 = vmatprep.subr.mxu0 0.0
    %238 = vmatpush1.xpose.msra.mxu0 0.0
    %239 = vmatprep.subr.mxu0 0.0
    %240 = vmatpush1.xpose.msra.mxu0 0.0
    %241 = vmatprep.subr.mxu0 0.0
    %242 = vmatpush1.xpose.msra.mxu0 0.0
    %243 = vmatprep.subr.mxu0 0.0
    %244 = vmatpush1.xpose.msra.mxu0 0.0
    %245 = vmatprep.subr.mxu0 0.0
    %246 = vmatpush1.xpose.msra.mxu0 0.0
    %247 = vmatprep.subr.mxu0 0.0
    %248 = vmatpush1.xpose.msra.mxu0 0.0
    %249 = vmatprep.subr.mxu0 0.0
    %250 = vmatpush1.xpose.msra.mxu0 0.0
    %251 = vmatprep.subr.mxu0 0.0
    %252 = vmatpush1.xpose.msra.mxu0 0.0
    %253 = vmatprep.subr.mxu0 0.0
    %254 = vmatpush1.xpose.msra.mxu0 0.0
    %255 = vmatprep.subr.mxu0 0.0
    %256 = vmatpush1.xpose.msra.mxu0 0.0
    %257 = vmatprep.subr.mxu0 0.0
    %258 = vmatpush1.xpose.msra.mxu0 0.0
    %259 = vmatprep.subr.mxu0 0.0
    %260 = vmatpush1.xpose.msra.mxu0 0.0
    %261 = vmatprep.subr.mxu0 0.0
    %262 = vmatpush1.xpose.msra.mxu0 0.0
    %263 = vmatprep.subr.mxu0 0.0
    %264 = vmatpush1.xpose.msra.mxu0 0.0
    %265 = vmatprep.subr.mxu0 0.0
    %266 = vmatpush1.xpose.msra.mxu0 %v233
    %267 = vmatprep.subr.mxu0 0.0
    %268 = vmatpush2.xpose.msra.mxu0 0.0
    %269 = vmatprep.subr.mxu0 0.0
    %270 = vmatpush2.xpose.msra.mxu0 0.0
    %271 = vmatprep.subr.mxu0 0.0
    %272 = vmatpush2.xpose.msra.mxu0 0.0
    %273 = vmatprep.subr.mxu0 0.0
    %274 = vmatpush2.xpose.msra.mxu0 0.0
    %275 = vmatprep.subr.mxu0 0.0
    %276 = vmatpush2.xpose.msra.mxu0 0.0
    %277 = vmatprep.subr.mxu0 0.0
    %278 = vmatpush2.xpose.msra.mxu0 0.0
    %279 = vmatprep.subr.mxu0 0.0
    %280 = vmatpush2.xpose.msra.mxu0 0.0
    %281 = vmatprep.subr.mxu0 0.0
    %282 = vmatpush2.xpose.msra.mxu0 0.0
    %283 = vmatprep.subr.mxu0 0.0
    %284 = vmatpush2.xpose.msra.mxu0 0.0
    %285 = vmatprep.subr.mxu0 0.0
    %286 = vmatpush2.xpose.msra.mxu0 0.0
    %287 = vmatprep.subr.mxu0 0.0
    %288 = vmatpush2.xpose.msra.mxu0 0.0
    %289 = vmatprep.subr.mxu0 0.0
    %290 = vmatpush2.xpose.msra.mxu0 0.0
    %291 = vmatprep.subr.mxu0 0.0
    %292 = vmatpush2.xpose.msra.mxu0 0.0
    %293 = vmatprep.subr.mxu0 0.0
    %294 = vmatpush2.xpose.msra.mxu0 0.0
    %295 = vmatprep.subr.mxu0 0.0
    %296 = vmatpush2.xpose.msra.mxu0 0.0
    %297 = vmatprep.subr.mxu0 0.0
    %298 = vmatpush2.xpose.msra.mxu0 0.0
    %299 = vmatprep.mubr.f32.mxu0 0.0
    %300 = vmatmul.mubr.f32.gmra.mxu0 %v231
    %v301 = vpop.f32.mrf.mxu0
    %v302 = vadd.f32 0.0, %v301
    %v303 = vpop.f32.mrf.mxu0
    %304 = vdwg.mxu0
    %v305 = vmul.f32 %v225, 0.35355338
    %v306 = vmul.f32 %v302, 0.35355338
    %v309 = vlaneseq
    %v310 = vshrl.u32 %v309, 7
    %v311 = vsub.s32 0, %v310
    %v312 = vrot.slane %v40, %v311
    %v313 = vlaneseq
    %v314 = vshrl.u32 %v313, 7
    %v315 = vsub.s32 0, %v314
    %v316 = vrot.slane %v41, %v315
    %v319 = vadd.f32 %v305, %v312
    %v320 = vadd.f32 %v306, %v316
    %v321 = vsel %vm153, %v319, -inf
    %322 = vmax.xlane.f32.xlu0 %v321
    %v323 = vpop.xlane.xlu0 %322
    %v324 = vsel %vm153, %v320, -inf
    %325 = vmax.xlane.f32.xlu0 %v324
    %v326 = vpop.xlane.xlu0 %325
    %v327 = vsub.f32 %v319, %v323
    %v328 = vsub.f32 %v320, %v326
    %v329 = vmul.f32 %v327, 1.442695
    %v330 = vpow.pop %v329
    %v331 = vmul.f32 %v328, 1.442695
    %v332 = vpow.pop %v331
    %v333 = vsel %vm153, %v330, 0.0
    %334 = vadd.xlane.f32.xlu0 %v333
    %v335 = vpop.xlane.xlu0 %334
    %v336 = vsel %vm153, %v332, 0.0
    %337 = vadd.xlane.f32.xlu0 %v336
    %v338 = vpop.xlane.xlu0 %337
    %v339 = vrcp.pop %v335
    %v340 = vmul.f32 %v330, %v339
    %v341 = vrcp.pop %v338
    %v342 = vmul.f32 %v332, %v341
    %343 = vrot.lane.b32.xlu0 %v142, 64
    %v344 = vpop.permute.xlu0 %343
    %v347 = vsel %vm153, %v340, 0
    %349 = vmatprep.subr.mxu0 0.0
    %350 = vmatpush1.msra.mxu0 0.0
    %351 = vmatprep.subr.mxu0 0.0
    %352 = vmatpush1.msra.mxu0 0.0
    %353 = vmatprep.subr.mxu0 0.0
    %354 = vmatpush1.msra.mxu0 0.0
    %355 = vmatprep.subr.mxu0 0.0
    %356 = vmatpush1.msra.mxu0 0.0
    %357 = vmatprep.subr.mxu0 0.0
    %358 = vmatpush1.msra.mxu0 0.0
    %359 = vmatprep.subr.mxu0 0.0
    %360 = vmatpush1.msra.mxu0 0.0
    %361 = vmatprep.subr.mxu0 0.0
    %362 = vmatpush1.msra.mxu0 0.0
    %363 = vmatprep.subr.mxu0 0.0
    %364 = vmatpush1.msra.mxu0 0.0
    %365 = vmatprep.subr.mxu0 0.0
    %366 = vmatpush1.msra.mxu0 0.0
    %367 = vmatprep.subr.mxu0 0.0
    %368 = vmatpush1.msra.mxu0 0.0
    %369 = vmatprep.subr.mxu0 0.0
    %370 = vmatpush1.msra.mxu0 0.0
    %371 = vmatprep.subr.mxu0 0.0
    %372 = vmatpush1.msra.mxu0 0.0
    %373 = vmatprep.subr.mxu0 0.0
    %374 = vmatpush1.msra.mxu0 0.0
    %375 = vmatprep.subr.mxu0 0.0
    %376 = vmatpush1.msra.mxu0 0.0
    %377 = vmatprep.subr.mxu0 0.0
    %378 = vmatpush1.msra.mxu0 0.0
    %379 = vmatprep.subr.mxu0 0.0
    %380 = vmatpush1.msra.mxu0 %v344
    %381 = vmatprep.subr.mxu0 0.0
    %382 = vmatpush2.msra.mxu0 0.0
    %383 = vmatprep.subr.mxu0 0.0
    %384 = vmatpush2.msra.mxu0 0.0
    %385 = vmatprep.subr.mxu0 0.0
    %386 = vmatpush2.msra.mxu0 0.0
    %387 = vmatprep.subr.mxu0 0.0
    %388 = vmatpush2.msra.mxu0 0.0
    %389 = vmatprep.subr.mxu0 0.0
    %390 = vmatpush2.msra.mxu0 0.0
    %391 = vmatprep.subr.mxu0 0.0
    %392 = vmatpush2.msra.mxu0 0.0
    %393 = vmatprep.subr.mxu0 0.0
    %394 = vmatpush2.msra.mxu0 0.0
    %395 = vmatprep.subr.mxu0 0.0
    %396 = vmatpush2.msra.mxu0 0.0
    %397 = vmatprep.subr.mxu0 0.0
    %398 = vmatpush2.msra.mxu0 0.0
    %399 = vmatprep.subr.mxu0 0.0
    %400 = vmatpush2.msra.mxu0 0.0
    %401 = vmatprep.subr.mxu0 0.0
    %402 = vmatpush2.msra.mxu0 0.0
    %403 = vmatprep.subr.mxu0 0.0
    %404 = vmatpush2.msra.mxu0 0.0
    %405 = vmatprep.subr.mxu0 0.0
    %406 = vmatpush2.msra.mxu0 0.0
    %407 = vmatprep.subr.mxu0 0.0
    %408 = vmatpush2.msra.mxu0 0.0
    %409 = vmatprep.subr.mxu0 0.0
    %410 = vmatpush2.msra.mxu0 0.0
    %411 = vmatprep.subr.mxu0 0.0
    %412 = vmatpush2.msra.mxu0 0.0
    %413 = vmatprep.mubr.f32.mxu0 0.0
    %414 = vmatmul.mubr.f32.gmra.mxu0 %v347
    %v415 = vpop.f32.mrf.mxu0
    %v416 = vadd.f32 0.0, %v415
    %v417 = vpop.f32.mrf.mxu0
    %418 = vdwg.mxu0
    %419 = vrot.lane.b32.xlu0 %v147, 64
    %v420 = vpop.permute.xlu0 %419
    %v423 = vsel %vm153, %v342, 0
    %425 = vmatprep.subr.mxu0 0.0
    %426 = vmatpush1.msra.mxu0 0.0
    %427 = vmatprep.subr.mxu0 0.0
    %428 = vmatpush1.msra.mxu0 0.0
    %429 = vmatprep.subr.mxu0 0.0
    %430 = vmatpush1.msra.mxu0 0.0
    %431 = vmatprep.subr.mxu0 0.0
    %432 = vmatpush1.msra.mxu0 0.0
    %433 = vmatprep.subr.mxu0 0.0
    %434 = vmatpush1.msra.mxu0 0.0
    %435 = vmatprep.subr.mxu0 0.0
    %436 = vmatpush1.msra.mxu0 0.0
    %437 = vmatprep.subr.mxu0 0.0
    %438 = vmatpush1.msra.mxu0 0.0
    %439 = vmatprep.subr.mxu0 0.0
    %440 = vmatpush1.msra.mxu0 0.0
    %441 = vmatprep.subr.mxu0 0.0
    %442 = vmatpush1.msra.mxu0 0.0
    %443 = vmatprep.subr.mxu0 0.0
    %444 = vmatpush1.msra.mxu0 0.0
    %445 = vmatprep.subr.mxu0 0.0
    %446 = vmatpush1.msra.mxu0 0.0
    %447 = vmatprep.subr.mxu0 0.0
    %448 = vmatpush1.msra.mxu0 0.0
    %449 = vmatprep.subr.mxu0 0.0
    %450 = vmatpush1.msra.mxu0 0.0
    %451 = vmatprep.subr.mxu0 0.0
    %452 = vmatpush1.msra.mxu0 0.0
    %453 = vmatprep.subr.mxu0 0.0
    %454 = vmatpush1.msra.mxu0 0.0
    %455 = vmatprep.subr.mxu0 0.0
    %456 = vmatpush1.msra.mxu0 %v420
    %457 = vmatprep.subr.mxu0 0.0
    %458 = vmatpush2.msra.mxu0 0.0
    %459 = vmatprep.subr.mxu0 0.0
    %460 = vmatpush2.msra.mxu0 0.0
    %461 = vmatprep.subr.mxu0 0.0
    %462 = vmatpush2.msra.mxu0 0.0
    %463 = vmatprep.subr.mxu0 0.0
    %464 = vmatpush2.msra.mxu0 0.0
    %465 = vmatprep.subr.mxu0 0.0
    %466 = vmatpush2.msra.mxu0 0.0
    %467 = vmatprep.subr.mxu0 0.0
    %468 = vmatpush2.msra.mxu0 0.0
    %469 = vmatprep.subr.mxu0 0.0
    %470 = vmatpush2.msra.mxu0 0.0
    %471 = vmatprep.subr.mxu0 0.0
    %472 = vmatpush2.msra.mxu0 0.0
    %473 = vmatprep.subr.mxu0 0.0
    %474 = vmatpush2.msra.mxu0 0.0
    %475 = vmatprep.subr.mxu0 0.0
    %476 = vmatpush2.msra.mxu0 0.0
    %477 = vmatprep.subr.mxu0 0.0
    %478 = vmatpush2.msra.mxu0 0.0
    %479 = vmatprep.subr.mxu0 0.0
    %480 = vmatpush2.msra.mxu0 0.0
    %481 = vmatprep.subr.mxu0 0.0
    %482 = vmatpush2.msra.mxu0 0.0
    %483 = vmatprep.subr.mxu0 0.0
    %484 = vmatpush2.msra.mxu0 0.0
    %485 = vmatprep.subr.mxu0 0.0
    %486 = vmatpush2.msra.mxu0 0.0
    %487 = vmatprep.subr.mxu0 0.0
    %488 = vmatpush2.msra.mxu0 0.0
    %489 = vmatprep.mubr.f32.mxu0 0.0
    %490 = vmatmul.mubr.f32.gmra.mxu0 %v423
    %v491 = vpop.f32.mrf.mxu0
    %v492 = vadd.f32 0.0, %v491
    %v493 = vpop.f32.mrf.mxu0
    %494 = vdwg.mxu0
    %495 = vrot.lane.b32.xlu0 %v142, 120
    %v496 = vpop.permute.xlu0 %495
    %497 = vrot.lane.b32.xlu0 %v142, 88
    %v498 = vpop.permute.xlu0 %497
    %v499 = vsel %vm153, %v496, 0
    %v501 = vsel %vm153, %v498, 0
    %503 = vmatprep.subr.mxu0 0.0
    %504 = vmatpush1.xpose.msra.mxu0 0.0
    %505 = vmatprep.subr.mxu0 0.0
    %506 = vmatpush1.xpose.msra.mxu0 0.0
    %507 = vmatprep.subr.mxu0 0.0
    %508 = vmatpush1.xpose.msra.mxu0 0.0
    %509 = vmatprep.subr.mxu0 0.0
    %510 = vmatpush1.xpose.msra.mxu0 0.0
    %511 = vmatprep.subr.mxu0 0.0
    %512 = vmatpush1.xpose.msra.mxu0 0.0
    %513 = vmatprep.subr.mxu0 0.0
    %514 = vmatpush1.xpose.msra.mxu0 0.0
    %515 = vmatprep.subr.mxu0 0.0
    %516 = vmatpush1.xpose.msra.mxu0 0.0
    %517 = vmatprep.subr.mxu0 0.0
    %518 = vmatpush1.xpose.msra.mxu0 0.0
    %519 = vmatprep.subr.mxu0 0.0
    %520 = vmatpush1.xpose.msra.mxu0 0.0
    %521 = vmatprep.subr.mxu0 0.0
    %522 = vmatpush1.xpose.msra.mxu0 0.0
    %523 = vmatprep.subr.mxu0 0.0
    %524 = vmatpush1.xpose.msra.mxu0 0.0
    %525 = vmatprep.subr.mxu0 0.0
    %526 = vmatpush1.xpose.msra.mxu0 0.0
    %527 = vmatprep.subr.mxu0 0.0
    %528 = vmatpush1.xpose.msra.mxu0 0.0
    %529 = vmatprep.subr.mxu0 0.0
    %530 = vmatpush1.xpose.msra.mxu0 0.0
    %531 = vmatprep.subr.mxu0 0.0
    %532 = vmatpush1.xpose.msra.mxu0 0.0
    %533 = vmatprep.subr.mxu0 0.0
    %534 = vmatpush1.xpose.msra.mxu0 %v501
    %535 = vmatprep.subr.mxu0 0.0
    %536 = vmatpush2.xpose.msra.mxu0 0.0
    %537 = vmatprep.subr.mxu0 0.0
    %538 = vmatpush2.xpose.msra.mxu0 0.0
    %539 = vmatprep.subr.mxu0 0.0
    %540 = vmatpush2.xpose.msra.mxu0 0.0
    %541 = vmatprep.subr.mxu0 0.0
    %542 = vmatpush2.xpose.msra.mxu0 0.0
    %543 = vmatprep.subr.mxu0 0.0
    %544 = vmatpush2.xpose.msra.mxu0 0.0
    %545 = vmatprep.subr.mxu0 0.0
    %546 = vmatpush2.xpose.msra.mxu0 0.0
    %547 = vmatprep.subr.mxu0 0.0
    %548 = vmatpush2.xpose.msra.mxu0 0.0
    %549 = vmatprep.subr.mxu0 0.0
    %550 = vmatpush2.xpose.msra.mxu0 0.0
    %551 = vmatprep.subr.mxu0 0.0
    %552 = vmatpush2.xpose.msra.mxu0 0.0
    %553 = vmatprep.subr.mxu0 0.0
    %554 = vmatpush2.xpose.msra.mxu0 0.0
    %555 = vmatprep.subr.mxu0 0.0
    %556 = vmatpush2.xpose.msra.mxu0 0.0
    %557 = vmatprep.subr.mxu0 0.0
    %558 = vmatpush2.xpose.msra.mxu0 0.0
    %559 = vmatprep.subr.mxu0 0.0
    %560 = vmatpush2.xpose.msra.mxu0 0.0
    %561 = vmatprep.subr.mxu0 0.0
    %562 = vmatpush2.xpose.msra.mxu0 0.0
    %563 = vmatprep.subr.mxu0 0.0
    %564 = vmatpush2.xpose.msra.mxu0 0.0
    %565 = vmatprep.subr.mxu0 0.0
    %566 = vmatpush2.xpose.msra.mxu0 0.0
    %567 = vmatprep.mubr.f32.mxu0 0.0
    %568 = vmatmul.mubr.f32.gmra.mxu0 %v499
    %v569 = vpop.f32.mrf.mxu0
    %v570 = vadd.f32 0.0, %v569
    %v571 = vpop.f32.mrf.mxu0
    %572 = vdwg.mxu0
    %573 = vrot.lane.b32.xlu0 %v147, 120
    %v574 = vpop.permute.xlu0 %573
    %575 = vrot.lane.b32.xlu0 %v147, 88
    %v576 = vpop.permute.xlu0 %575
    %v577 = vsel %vm153, %v574, 0
    %v579 = vsel %vm153, %v576, 0
    %581 = vmatprep.subr.mxu0 0.0
    %582 = vmatpush1.xpose.msra.mxu0 0.0
    %583 = vmatprep.subr.mxu0 0.0
    %584 = vmatpush1.xpose.msra.mxu0 0.0
    %585 = vmatprep.subr.mxu0 0.0
    %586 = vmatpush1.xpose.msra.mxu0 0.0
    %587 = vmatprep.subr.mxu0 0.0
    %588 = vmatpush1.xpose.msra.mxu0 0.0
    %589 = vmatprep.subr.mxu0 0.0
    %590 = vmatpush1.xpose.msra.mxu0 0.0
    %591 = vmatprep.subr.mxu0 0.0
    %592 = vmatpush1.xpose.msra.mxu0 0.0
    %593 = vmatprep.subr.mxu0 0.0
    %594 = vmatpush1.xpose.msra.mxu0 0.0
    %595 = vmatprep.subr.mxu0 0.0
    %596 = vmatpush1.xpose.msra.mxu0 0.0
    %597 = vmatprep.subr.mxu0 0.0
    %598 = vmatpush1.xpose.msra.mxu0 0.0
    %599 = vmatprep.subr.mxu0 0.0
    %600 = vmatpush1.xpose.msra.mxu0 0.0
    %601 = vmatprep.subr.mxu0 0.0
    %602 = vmatpush1.xpose.msra.mxu0 0.0
    %603 = vmatprep.subr.mxu0 0.0
    %604 = vmatpush1.xpose.msra.mxu0 0.0
    %605 = vmatprep.subr.mxu0 0.0
    %606 = vmatpush1.xpose.msra.mxu0 0.0
    %607 = vmatprep.subr.mxu0 0.0
    %608 = vmatpush1.xpose.msra.mxu0 0.0
    %609 = vmatprep.subr.mxu0 0.0
    %610 = vmatpush1.xpose.msra.mxu0 0.0
    %611 = vmatprep.subr.mxu0 0.0
    %612 = vmatpush1.xpose.msra.mxu0 %v579
    %613 = vmatprep.subr.mxu0 0.0
    %614 = vmatpush2.xpose.msra.mxu0 0.0
    %615 = vmatprep.subr.mxu0 0.0
    %616 = vmatpush2.xpose.msra.mxu0 0.0
    %617 = vmatprep.subr.mxu0 0.0
    %618 = vmatpush2.xpose.msra.mxu0 0.0
    %619 = vmatprep.subr.mxu0 0.0
    %620 = vmatpush2.xpose.msra.mxu0 0.0
    %621 = vmatprep.subr.mxu0 0.0
    %622 = vmatpush2.xpose.msra.mxu0 0.0
    %623 = vmatprep.subr.mxu0 0.0
    %624 = vmatpush2.xpose.msra.mxu0 0.0
    %625 = vmatprep.subr.mxu0 0.0
    %626 = vmatpush2.xpose.msra.mxu0 0.0
    %627 = vmatprep.subr.mxu0 0.0
    %628 = vmatpush2.xpose.msra.mxu0 0.0
    %629 = vmatprep.subr.mxu0 0.0
    %630 = vmatpush2.xpose.msra.mxu0 0.0
    %631 = vmatprep.subr.mxu0 0.0
    %632 = vmatpush2.xpose.msra.mxu0 0.0
    %633 = vmatprep.subr.mxu0 0.0
    %634 = vmatpush2.xpose.msra.mxu0 0.0
    %635 = vmatprep.subr.mxu0 0.0
    %636 = vmatpush2.xpose.msra.mxu0 0.0
    %637 = vmatprep.subr.mxu0 0.0
    %638 = vmatpush2.xpose.msra.mxu0 0.0
    %639 = vmatprep.subr.mxu0 0.0
    %640 = vmatpush2.xpose.msra.mxu0 0.0
    %641 = vmatprep.subr.mxu0 0.0
    %642 = vmatpush2.xpose.msra.mxu0 0.0
    %643 = vmatprep.subr.mxu0 0.0
    %644 = vmatpush2.xpose.msra.mxu0 0.0
    %645 = vmatprep.mubr.f32.mxu0 0.0
    %646 = vmatmul.mubr.f32.gmra.mxu0 %v577
    %v647 = vpop.f32.mrf.mxu0
    %v648 = vadd.f32 0.0, %v647
    %v649 = vpop.f32.mrf.mxu0
    %650 = vdwg.mxu0
    %v651 = vmul.f32 %v570, 0.35355338
    %v652 = vmul.f32 %v648, 0.35355338
    %v653 = vadd.f32 %v651, %v312
    %v654 = vadd.f32 %v652, %v316
    %v655 = vsel %vm153, %v653, -inf
    %656 = vmax.xlane.f32.xlu0 %v655
    %v657 = vpop.xlane.xlu0 %656
    %v658 = vsel %vm153, %v654, -inf
    %659 = vmax.xlane.f32.xlu0 %v658
    %v660 = vpop.xlane.xlu0 %659
    %v661 = vsub.f32 %v653, %v657
    %v662 = vsub.f32 %v654, %v660
    %v663 = vmul.f32 %v661, 1.442695
    %v664 = vpow.pop %v663
    %v665 = vmul.f32 %v662, 1.442695
    %v666 = vpow.pop %v665
    %v667 = vsel %vm153, %v664, 0.0
    %668 = vadd.xlane.f32.xlu0 %v667
    %v669 = vpop.xlane.xlu0 %668
    %v670 = vsel %vm153, %v666, 0.0
    %671 = vadd.xlane.f32.xlu0 %v670
    %v672 = vpop.xlane.xlu0 %671
    %v673 = vrcp.pop %v669
    %v674 = vmul.f32 %v664, %v673
    %v675 = vrcp.pop %v672
    %v676 = vmul.f32 %v666, %v675
    %677 = vrot.lane.b32.xlu0 %v142, 56
    %v678 = vpop.permute.xlu0 %677
    %v681 = vsel %vm153, %v674, 0
    %683 = vmatprep.subr.mxu0 0.0
    %684 = vmatpush1.msra.mxu0 0.0
    %685 = vmatprep.subr.mxu0 0.0
    %686 = vmatpush1.msra.mxu0 0.0
    %687 = vmatprep.subr.mxu0 0.0
    %688 = vmatpush1.msra.mxu0 0.0
    %689 = vmatprep.subr.mxu0 0.0
    %690 = vmatpush1.msra.mxu0 0.0
    %691 = vmatprep.subr.mxu0 0.0
    %692 = vmatpush1.msra.mxu0 0.0
    %693 = vmatprep.subr.mxu0 0.0
    %694 = vmatpush1.msra.mxu0 0.0
    %695 = vmatprep.subr.mxu0 0.0
    %696 = vmatpush1.msra.mxu0 0.0
    %697 = vmatprep.subr.mxu0 0.0
    %698 = vmatpush1.msra.mxu0 0.0
    %699 = vmatprep.subr.mxu0 0.0
    %700 = vmatpush1.msra.mxu0 0.0
    %701 = vmatprep.subr.mxu0 0.0
    %702 = vmatpush1.msra.mxu0 0.0
    %703 = vmatprep.subr.mxu0 0.0
    %704 = vmatpush1.msra.mxu0 0.0
    %705 = vmatprep.subr.mxu0 0.0
    %706 = vmatpush1.msra.mxu0 0.0
    %707 = vmatprep.subr.mxu0 0.0
    %708 = vmatpush1.msra.mxu0 0.0
    %709 = vmatprep.subr.mxu0 0.0
    %710 = vmatpush1.msra.mxu0 0.0
    %711 = vmatprep.subr.mxu0 0.0
    %712 = vmatpush1.msra.mxu0 0.0
    %713 = vmatprep.subr.mxu0 0.0
    %714 = vmatpush1.msra.mxu0 %v678
    %715 = vmatprep.subr.mxu0 0.0
    %716 = vmatpush2.msra.mxu0 0.0
    %717 = vmatprep.subr.mxu0 0.0
    %718 = vmatpush2.msra.mxu0 0.0
    %719 = vmatprep.subr.mxu0 0.0
    %720 = vmatpush2.msra.mxu0 0.0
    %721 = vmatprep.subr.mxu0 0.0
    %722 = vmatpush2.msra.mxu0 0.0
    %723 = vmatprep.subr.mxu0 0.0
    %724 = vmatpush2.msra.mxu0 0.0
    %725 = vmatprep.subr.mxu0 0.0
    %726 = vmatpush2.msra.mxu0 0.0
    %727 = vmatprep.subr.mxu0 0.0
    %728 = vmatpush2.msra.mxu0 0.0
    %729 = vmatprep.subr.mxu0 0.0
    %730 = vmatpush2.msra.mxu0 0.0
    %731 = vmatprep.subr.mxu0 0.0
    %732 = vmatpush2.msra.mxu0 0.0
    %733 = vmatprep.subr.mxu0 0.0
    %734 = vmatpush2.msra.mxu0 0.0
    %735 = vmatprep.subr.mxu0 0.0
    %736 = vmatpush2.msra.mxu0 0.0
    %737 = vmatprep.subr.mxu0 0.0
    %738 = vmatpush2.msra.mxu0 0.0
    %739 = vmatprep.subr.mxu0 0.0
    %740 = vmatpush2.msra.mxu0 0.0
    %741 = vmatprep.subr.mxu0 0.0
    %742 = vmatpush2.msra.mxu0 0.0
    %743 = vmatprep.subr.mxu0 0.0
    %744 = vmatpush2.msra.mxu0 0.0
    %745 = vmatprep.subr.mxu0 0.0
    %746 = vmatpush2.msra.mxu0 0.0
    %747 = vmatprep.mubr.f32.mxu0 0.0
    %748 = vmatmul.mubr.f32.gmra.mxu0 %v681
    %v749 = vpop.f32.mrf.mxu0
    %v750 = vadd.f32 0.0, %v749
    %v751 = vpop.f32.mrf.mxu0
    %752 = vdwg.mxu0
    %753 = vrot.lane.b32.xlu0 %v147, 56
    %v754 = vpop.permute.xlu0 %753
    %v757 = vsel %vm153, %v676, 0
    %759 = vmatprep.subr.mxu0 0.0
    %760 = vmatpush1.msra.mxu0 0.0
    %761 = vmatprep.subr.mxu0 0.0
    %762 = vmatpush1.msra.mxu0 0.0
    %763 = vmatprep.subr.mxu0 0.0
    %764 = vmatpush1.msra.mxu0 0.0
    %765 = vmatprep.subr.mxu0 0.0
    %766 = vmatpush1.msra.mxu0 0.0
    %767 = vmatprep.subr.mxu0 0.0
    %768 = vmatpush1.msra.mxu0 0.0
    %769 = vmatprep.subr.mxu0 0.0
    %770 = vmatpush1.msra.mxu0 0.0
    %771 = vmatprep.subr.mxu0 0.0
    %772 = vmatpush1.msra.mxu0 0.0
    %773 = vmatprep.subr.mxu0 0.0
    %774 = vmatpush1.msra.mxu0 0.0
    %775 = vmatprep.subr.mxu0 0.0
    %776 = vmatpush1.msra.mxu0 0.0
    %777 = vmatprep.subr.mxu0 0.0
    %778 = vmatpush1.msra.mxu0 0.0
    %779 = vmatprep.subr.mxu0 0.0
    %780 = vmatpush1.msra.mxu0 0.0
    %781 = vmatprep.subr.mxu0 0.0
    %782 = vmatpush1.msra.mxu0 0.0
    %783 = vmatprep.subr.mxu0 0.0
    %784 = vmatpush1.msra.mxu0 0.0
    %785 = vmatprep.subr.mxu0 0.0
    %786 = vmatpush1.msra.mxu0 0.0
    %787 = vmatprep.subr.mxu0 0.0
    %788 = vmatpush1.msra.mxu0 0.0
    %789 = vmatprep.subr.mxu0 0.0
    %790 = vmatpush1.msra.mxu0 %v754
    %791 = vmatprep.subr.mxu0 0.0
    %792 = vmatpush2.msra.mxu0 0.0
    %793 = vmatprep.subr.mxu0 0.0
    %794 = vmatpush2.msra.mxu0 0.0
    %795 = vmatprep.subr.mxu0 0.0
    %796 = vmatpush2.msra.mxu0 0.0
    %797 = vmatprep.subr.mxu0 0.0
    %798 = vmatpush2.msra.mxu0 0.0
    %799 = vmatprep.subr.mxu0 0.0
    %800 = vmatpush2.msra.mxu0 0.0
    %801 = vmatprep.subr.mxu0 0.0
    %802 = vmatpush2.msra.mxu0 0.0
    %803 = vmatprep.subr.mxu0 0.0
    %804 = vmatpush2.msra.mxu0 0.0
    %805 = vmatprep.subr.mxu0 0.0
    %806 = vmatpush2.msra.mxu0 0.0
    %807 = vmatprep.subr.mxu0 0.0
    %808 = vmatpush2.msra.mxu0 0.0
    %809 = vmatprep.subr.mxu0 0.0
    %810 = vmatpush2.msra.mxu0 0.0
    %811 = vmatprep.subr.mxu0 0.0
    %812 = vmatpush2.msra.mxu0 0.0
    %813 = vmatprep.subr.mxu0 0.0
    %814 = vmatpush2.msra.mxu0 0.0
    %815 = vmatprep.subr.mxu0 0.0
    %816 = vmatpush2.msra.mxu0 0.0
    %817 = vmatprep.subr.mxu0 0.0
    %818 = vmatpush2.msra.mxu0 0.0
    %819 = vmatprep.subr.mxu0 0.0
    %820 = vmatpush2.msra.mxu0 0.0
    %821 = vmatprep.subr.mxu0 0.0
    %822 = vmatpush2.msra.mxu0 0.0
    %823 = vmatprep.mubr.f32.mxu0 0.0
    %824 = vmatmul.mubr.f32.gmra.mxu0 %v757
    %v825 = vpop.f32.mrf.mxu0
    %v826 = vadd.f32 0.0, %v825
    %v827 = vpop.f32.mrf.mxu0
    %828 = vdwg.mxu0
    %829 = vrot.lane.b32.xlu0 %v142, 112
    %v830 = vpop.permute.xlu0 %829
    %831 = vrot.lane.b32.xlu0 %v142, 80
    %v832 = vpop.permute.xlu0 %831
    %v833 = vsel %vm153, %v830, 0
    %v835 = vsel %vm153, %v832, 0
    %837 = vmatprep.subr.mxu0 0.0
    %838 = vmatpush1.xpose.msra.mxu0 0.0
    %839 = vmatprep.subr.mxu0 0.0
    %840 = vmatpush1.xpose.msra.mxu0 0.0
    %841 = vmatprep.subr.mxu0 0.0
    %842 = vmatpush1.xpose.msra.mxu0 0.0
    %843 = vmatprep.subr.mxu0 0.0
    %844 = vmatpush1.xpose.msra.mxu0 0.0
    %845 = vmatprep.subr.mxu0 0.0
    %846 = vmatpush1.xpose.msra.mxu0 0.0
    %847 = vmatprep.subr.mxu0 0.0
    %848 = vmatpush1.xpose.msra.mxu0 0.0
    %849 = vmatprep.subr.mxu0 0.0
    %850 = vmatpush1.xpose.msra.mxu0 0.0
    %851 = vmatprep.subr.mxu0 0.0
    %852 = vmatpush1.xpose.msra.mxu0 0.0
    %853 = vmatprep.subr.mxu0 0.0
    %854 = vmatpush1.xpose.msra.mxu0 0.0
    %855 = vmatprep.subr.mxu0 0.0
    %856 = vmatpush1.xpose.msra.mxu0 0.0
    %857 = vmatprep.subr.mxu0 0.0
    %858 = vmatpush1.xpose.msra.mxu0 0.0
    %859 = vmatprep.subr.mxu0 0.0
    %860 = vmatpush1.xpose.msra.mxu0 0.0
    %861 = vmatprep.subr.mxu0 0.0
    %862 = vmatpush1.xpose.msra.mxu0 0.0
    %863 = vmatprep.subr.mxu0 0.0
    %864 = vmatpush1.xpose.msra.mxu0 0.0
    %865 = vmatprep.subr.mxu0 0.0
    %866 = vmatpush1.xpose.msra.mxu0 0.0
    %867 = vmatprep.subr.mxu0 0.0
    %868 = vmatpush1.xpose.msra.mxu0 %v835
    %869 = vmatprep.subr.mxu0 0.0
    %870 = vmatpush2.xpose.msra.mxu0 0.0
    %871 = vmatprep.subr.mxu0 0.0
    %872 = vmatpush2.xpose.msra.mxu0 0.0
    %873 = vmatprep.subr.mxu0 0.0
    %874 = vmatpush2.xpose.msra.mxu0 0.0
    %875 = vmatprep.subr.mxu0 0.0
    %876 = vmatpush2.xpose.msra.mxu0 0.0
    %877 = vmatprep.subr.mxu0 0.0
    %878 = vmatpush2.xpose.msra.mxu0 0.0
    %879 = vmatprep.subr.mxu0 0.0
    %880 = vmatpush2.xpose.msra.mxu0 0.0
    %881 = vmatprep.subr.mxu0 0.0
    %882 = vmatpush2.xpose.msra.mxu0 0.0
    %883 = vmatprep.subr.mxu0 0.0
    %884 = vmatpush2.xpose.msra.mxu0 0.0
    %885 = vmatprep.subr.mxu0 0.0
    %886 = vmatpush2.xpose.msra.mxu0 0.0
    %887 = vmatprep.subr.mxu0 0.0
    %888 = vmatpush2.xpose.msra.mxu0 0.0
    %889 = vmatprep.subr.mxu0 0.0
    %890 = vmatpush2.xpose.msra.mxu0 0.0
    %891 = vmatprep.subr.mxu0 0.0
    %892 = vmatpush2.xpose.msra.mxu0 0.0
    %893 = vmatprep.subr.mxu0 0.0
    %894 = vmatpush2.xpose.msra.mxu0 0.0
    %895 = vmatprep.subr.mxu0 0.0
    %896 = vmatpush2.xpose.msra.mxu0 0.0
    %897 = vmatprep.subr.mxu0 0.0
    %898 = vmatpush2.xpose.msra.mxu0 0.0
    %899 = vmatprep.subr.mxu0 0.0
    %900 = vmatpush2.xpose.msra.mxu0 0.0
    %901 = vmatprep.mubr.f32.mxu0 0.0
    %902 = vmatmul.mubr.f32.gmra.mxu0 %v833
    %v903 = vpop.f32.mrf.mxu0
    %v904 = vadd.f32 0.0, %v903
    %v905 = vpop.f32.mrf.mxu0
    %906 = vdwg.mxu0
    %907 = vrot.lane.b32.xlu0 %v147, 112
    %v908 = vpop.permute.xlu0 %907
    %909 = vrot.lane.b32.xlu0 %v147, 80
    %v910 = vpop.permute.xlu0 %909
    %v911 = vsel %vm153, %v908, 0
    %v913 = vsel %vm153, %v910, 0
    %915 = vmatprep.subr.mxu0 0.0
    %916 = vmatpush1.xpose.msra.mxu0 0.0
    %917 = vmatprep.subr.mxu0 0.0
    %918 = vmatpush1.xpose.msra.mxu0 0.0
    %919 = vmatprep.subr.mxu0 0.0
    %920 = vmatpush1.xpose.msra.mxu0 0.0
    %921 = vmatprep.subr.mxu0 0.0
    %922 = vmatpush1.xpose.msra.mxu0 0.0
    %923 = vmatprep.subr.mxu0 0.0
    %924 = vmatpush1.xpose.msra.mxu0 0.0
    %925 = vmatprep.subr.mxu0 0.0
    %926 = vmatpush1.xpose.msra.mxu0 0.0
    %927 = vmatprep.subr.mxu0 0.0
    %928 = vmatpush1.xpose.msra.mxu0 0.0
    %929 = vmatprep.subr.mxu0 0.0
    %930 = vmatpush1.xpose.msra.mxu0 0.0
    %931 = vmatprep.subr.mxu0 0.0
    %932 = vmatpush1.xpose.msra.mxu0 0.0
    %933 = vmatprep.subr.mxu0 0.0
    %934 = vmatpush1.xpose.msra.mxu0 0.0
    %935 = vmatprep.subr.mxu0 0.0
    %936 = vmatpush1.xpose.msra.mxu0 0.0
    %937 = vmatprep.subr.mxu0 0.0
    %938 = vmatpush1.xpose.msra.mxu0 0.0
    %939 = vmatprep.subr.mxu0 0.0
    %940 = vmatpush1.xpose.msra.mxu0 0.0
    %941 = vmatprep.subr.mxu0 0.0
    %942 = vmatpush1.xpose.msra.mxu0 0.0
    %943 = vmatprep.subr.mxu0 0.0
    %944 = vmatpush1.xpose.msra.mxu0 0.0
    %945 = vmatprep.subr.mxu0 0.0
    %946 = vmatpush1.xpose.msra.mxu0 %v913
    %947 = vmatprep.subr.mxu0 0.0
    %948 = vmatpush2.xpose.msra.mxu0 0.0
    %949 = vmatprep.subr.mxu0 0.0
    %950 = vmatpush2.xpose.msra.mxu0 0.0
    %951 = vmatprep.subr.mxu0 0.0
    %952 = vmatpush2.xpose.msra.mxu0 0.0
    %953 = vmatprep.subr.mxu0 0.0
    %954 = vmatpush2.xpose.msra.mxu0 0.0
    %955 = vmatprep.subr.mxu0 0.0
    %956 = vmatpush2.xpose.msra.mxu0 0.0
    %957 = vmatprep.subr.mxu0 0.0
    %958 = vmatpush2.xpose.msra.mxu0 0.0
    %959 = vmatprep.subr.mxu0 0.0
    %960 = vmatpush2.xpose.msra.mxu0 0.0
    %961 = vmatprep.subr.mxu0 0.0
    %962 = vmatpush2.xpose.msra.mxu0 0.0
    %963 = vmatprep.subr.mxu0 0.0
    %964 = vmatpush2.xpose.msra.mxu0 0.0
    %965 = vmatprep.subr.mxu0 0.0
    %966 = vmatpush2.xpose.msra.mxu0 0.0
    %967 = vmatprep.subr.mxu0 0.0
    %968 = vmatpush2.xpose.msra.mxu0 0.0
    %969 = vmatprep.subr.mxu0 0.0
    %970 = vmatpush2.xpose.msra.mxu0 0.0
    %971 = vmatprep.subr.mxu0 0.0
    %972 = vmatpush2.xpose.msra.mxu0 0.0
    %973 = vmatprep.subr.mxu0 0.0
    %974 = vmatpush2.xpose.msra.mxu0 0.0
    %975 = vmatprep.subr.mxu0 0.0
    %976 = vmatpush2.xpose.msra.mxu0 0.0
    %977 = vmatprep.subr.mxu0 0.0
    %978 = vmatpush2.xpose.msra.mxu0 0.0
    %979 = vmatprep.mubr.f32.mxu0 0.0
    %980 = vmatmul.mubr.f32.gmra.mxu0 %v911
    %v981 = vpop.f32.mrf.mxu0
    %v982 = vadd.f32 0.0, %v981
    %v983 = vpop.f32.mrf.mxu0
    %984 = vdwg.mxu0
    %v985 = vmul.f32 %v904, 0.35355338
    %v986 = vmul.f32 %v982, 0.35355338
    %v987 = vadd.f32 %v985, %v312
    %v988 = vadd.f32 %v986, %v316
    %v989 = vsel %vm153, %v987, -inf
    %990 = vmax.xlane.f32.xlu0 %v989
    %v991 = vpop.xlane.xlu0 %990
    %v992 = vsel %vm153, %v988, -inf
    %993 = vmax.xlane.f32.xlu0 %v992
    %v994 = vpop.xlane.xlu0 %993
    %v995 = vsub.f32 %v987, %v991
    %v996 = vsub.f32 %v988, %v994
    %v997 = vmul.f32 %v995, 1.442695
    %v998 = vpow.pop %v997
    %v999 = vmul.f32 %v996, 1.442695
    %v1000 = vpow.pop %v999
    %v1001 = vsel %vm153, %v998, 0.0
    %1002 = vadd.xlane.f32.xlu0 %v1001
    %v1003 = vpop.xlane.xlu0 %1002
    %v1004 = vsel %vm153, %v1000, 0.0
    %1005 = vadd.xlane.f32.xlu0 %v1004
    %v1006 = vpop.xlane.xlu0 %1005
    %v1007 = vrcp.pop %v1003
    %v1008 = vmul.f32 %v998, %v1007
    %v1009 = vrcp.pop %v1006
    %v1010 = vmul.f32 %v1000, %v1009
    %1011 = vrot.lane.b32.xlu0 %v142, 48
    %v1012 = vpop.permute.xlu0 %1011
    %v1015 = vsel %vm153, %v1008, 0
    %1017 = vmatprep.subr.mxu0 0.0
    %1018 = vmatpush1.msra.mxu0 0.0
    %1019 = vmatprep.subr.mxu0 0.0
    %1020 = vmatpush1.msra.mxu0 0.0
    %1021 = vmatprep.subr.mxu0 0.0
    %1022 = vmatpush1.msra.mxu0 0.0
    %1023 = vmatprep.subr.mxu0 0.0
    %1024 = vmatpush1.msra.mxu0 0.0
    %1025 = vmatprep.subr.mxu0 0.0
    %1026 = vmatpush1.msra.mxu0 0.0
    %1027 = vmatprep.subr.mxu0 0.0
    %1028 = vmatpush1.msra.mxu0 0.0
    %1029 = vmatprep.subr.mxu0 0.0
    %1030 = vmatpush1.msra.mxu0 0.0
    %1031 = vmatprep.subr.mxu0 0.0
    %1032 = vmatpush1.msra.mxu0 0.0
    %1033 = vmatprep.subr.mxu0 0.0
    %1034 = vmatpush1.msra.mxu0 0.0
    %1035 = vmatprep.subr.mxu0 0.0
    %1036 = vmatpush1.msra.mxu0 0.0
    %1037 = vmatprep.subr.mxu0 0.0
    %1038 = vmatpush1.msra.mxu0 0.0
    %1039 = vmatprep.subr.mxu0 0.0
    %1040 = vmatpush1.msra.mxu0 0.0
    %1041 = vmatprep.subr.mxu0 0.0
    %1042 = vmatpush1.msra.mxu0 0.0
    %1043 = vmatprep.subr.mxu0 0.0
    %1044 = vmatpush1.msra.mxu0 0.0
    %1045 = vmatprep.subr.mxu0 0.0
    %1046 = vmatpush1.msra.mxu0 0.0
    %1047 = vmatprep.subr.mxu0 0.0
    %1048 = vmatpush1.msra.mxu0 %v1012
    %1049 = vmatprep.subr.mxu0 0.0
    %1050 = vmatpush2.msra.mxu0 0.0
    %1051 = vmatprep.subr.mxu0 0.0
    %1052 = vmatpush2.msra.mxu0 0.0
    %1053 = vmatprep.subr.mxu0 0.0
    %1054 = vmatpush2.msra.mxu0 0.0
    %1055 = vmatprep.subr.mxu0 0.0
    %1056 = vmatpush2.msra.mxu0 0.0
    %1057 = vmatprep.subr.mxu0 0.0
    %1058 = vmatpush2.msra.mxu0 0.0
    %1059 = vmatprep.subr.mxu0 0.0
    %1060 = vmatpush2.msra.mxu0 0.0
    %1061 = vmatprep.subr.mxu0 0.0
    %1062 = vmatpush2.msra.mxu0 0.0
    %1063 = vmatprep.subr.mxu0 0.0
    %1064 = vmatpush2.msra.mxu0 0.0
    %1065 = vmatprep.subr.mxu0 0.0
    %1066 = vmatpush2.msra.mxu0 0.0
    %1067 = vmatprep.subr.mxu0 0.0
    %1068 = vmatpush2.msra.mxu0 0.0
    %1069 = vmatprep.subr.mxu0 0.0
    %1070 = vmatpush2.msra.mxu0 0.0
    %1071 = vmatprep.subr.mxu0 0.0
    %1072 = vmatpush2.msra.mxu0 0.0
    %1073 = vmatprep.subr.mxu0 0.0
    %1074 = vmatpush2.msra.mxu0 0.0
    %1075 = vmatprep.subr.mxu0 0.0
    %1076 = vmatpush2.msra.mxu0 0.0
    %1077 = vmatprep.subr.mxu0 0.0
    %1078 = vmatpush2.msra.mxu0 0.0
    %1079 = vmatprep.subr.mxu0 0.0
    %1080 = vmatpush2.msra.mxu0 0.0
    %1081 = vmatprep.mubr.f32.mxu0 0.0
    %1082 = vmatmul.mubr.f32.gmra.mxu0 %v1015
    %v1083 = vpop.f32.mrf.mxu0
    %v1084 = vadd.f32 0.0, %v1083
    %v1085 = vpop.f32.mrf.mxu0
    %1086 = vdwg.mxu0
    %1087 = vrot.lane.b32.xlu0 %v147, 48
    %v1088 = vpop.permute.xlu0 %1087
    %v1091 = vsel %vm153, %v1010, 0
    %1093 = vmatprep.subr.mxu0 0.0
    %1094 = vmatpush1.msra.mxu0 0.0
    %1095 = vmatprep.subr.mxu0 0.0
    %1096 = vmatpush1.msra.mxu0 0.0
    %1097 = vmatprep.subr.mxu0 0.0
    %1098 = vmatpush1.msra.mxu0 0.0
    %1099 = vmatprep.subr.mxu0 0.0
    %1100 = vmatpush1.msra.mxu0 0.0
    %1101 = vmatprep.subr.mxu0 0.0
    %1102 = vmatpush1.msra.mxu0 0.0
    %1103 = vmatprep.subr.mxu0 0.0
    %1104 = vmatpush1.msra.mxu0 0.0
    %1105 = vmatprep.subr.mxu0 0.0
    %1106 = vmatpush1.msra.mxu0 0.0
    %1107 = vmatprep.subr.mxu0 0.0
    %1108 = vmatpush1.msra.mxu0 0.0
    %1109 = vmatprep.subr.mxu0 0.0
    %1110 = vmatpush1.msra.mxu0 0.0
    %1111 = vmatprep.subr.mxu0 0.0
    %1112 = vmatpush1.msra.mxu0 0.0
    %1113 = vmatprep.subr.mxu0 0.0
    %1114 = vmatpush1.msra.mxu0 0.0
    %1115 = vmatprep.subr.mxu0 0.0
    %1116 = vmatpush1.msra.mxu0 0.0
    %1117 = vmatprep.subr.mxu0 0.0
    %1118 = vmatpush1.msra.mxu0 0.0
    %1119 = vmatprep.subr.mxu0 0.0
    %1120 = vmatpush1.msra.mxu0 0.0
    %1121 = vmatprep.subr.mxu0 0.0
    %1122 = vmatpush1.msra.mxu0 0.0
    %1123 = vmatprep.subr.mxu0 0.0
    %1124 = vmatpush1.msra.mxu0 %v1088
    %1125 = vmatprep.subr.mxu0 0.0
    %1126 = vmatpush2.msra.mxu0 0.0
    %1127 = vmatprep.subr.mxu0 0.0
    %1128 = vmatpush2.msra.mxu0 0.0
    %1129 = vmatprep.subr.mxu0 0.0
    %1130 = vmatpush2.msra.mxu0 0.0
    %1131 = vmatprep.subr.mxu0 0.0
    %1132 = vmatpush2.msra.mxu0 0.0
    %1133 = vmatprep.subr.mxu0 0.0
    %1134 = vmatpush2.msra.mxu0 0.0
    %1135 = vmatprep.subr.mxu0 0.0
    %1136 = vmatpush2.msra.mxu0 0.0
    %1137 = vmatprep.subr.mxu0 0.0
    %1138 = vmatpush2.msra.mxu0 0.0
    %1139 = vmatprep.subr.mxu0 0.0
    %1140 = vmatpush2.msra.mxu0 0.0
    %1141 = vmatprep.subr.mxu0 0.0
    %1142 = vmatpush2.msra.mxu0 0.0
    %1143 = vmatprep.subr.mxu0 0.0
    %1144 = vmatpush2.msra.mxu0 0.0
    %1145 = vmatprep.subr.mxu0 0.0
    %1146 = vmatpush2.msra.mxu0 0.0
    %1147 = vmatprep.subr.mxu0 0.0
    %1148 = vmatpush2.msra.mxu0 0.0
    %1149 = vmatprep.subr.mxu0 0.0
    %1150 = vmatpush2.msra.mxu0 0.0
    %1151 = vmatprep.subr.mxu0 0.0
    %1152 = vmatpush2.msra.mxu0 0.0
    %1153 = vmatprep.subr.mxu0 0.0
    %1154 = vmatpush2.msra.mxu0 0.0
    %1155 = vmatprep.subr.mxu0 0.0
    %1156 = vmatpush2.msra.mxu0 0.0
    %1157 = vmatprep.mubr.f32.mxu0 0.0
    %1158 = vmatmul.mubr.f32.gmra.mxu0 %v1091
    %v1159 = vpop.f32.mrf.mxu0
    %v1160 = vadd.f32 0.0, %v1159
    %v1161 = vpop.f32.mrf.mxu0
    %1162 = vdwg.mxu0
    %1163 = vrot.lane.b32.xlu0 %v142, 104
    %v1164 = vpop.permute.xlu0 %1163
    %1165 = vrot.lane.b32.xlu0 %v142, 72
    %v1166 = vpop.permute.xlu0 %1165
    %v1167 = vsel %vm153, %v1164, 0
    %v1169 = vsel %vm153, %v1166, 0
    %1171 = vmatprep.subr.mxu0 0.0
    %1172 = vmatpush1.xpose.msra.mxu0 0.0
    %1173 = vmatprep.subr.mxu0 0.0
    %1174 = vmatpush1.xpose.msra.mxu0 0.0
    %1175 = vmatprep.subr.mxu0 0.0
    %1176 = vmatpush1.xpose.msra.mxu0 0.0
    %1177 = vmatprep.subr.mxu0 0.0
    %1178 = vmatpush1.xpose.msra.mxu0 0.0
    %1179 = vmatprep.subr.mxu0 0.0
    %1180 = vmatpush1.xpose.msra.mxu0 0.0
    %1181 = vmatprep.subr.mxu0 0.0
    %1182 = vmatpush1.xpose.msra.mxu0 0.0
    %1183 = vmatprep.subr.mxu0 0.0
    %1184 = vmatpush1.xpose.msra.mxu0 0.0
    %1185 = vmatprep.subr.mxu0 0.0
    %1186 = vmatpush1.xpose.msra.mxu0 0.0
    %1187 = vmatprep.subr.mxu0 0.0
    %1188 = vmatpush1.xpose.msra.mxu0 0.0
    %1189 = vmatprep.subr.mxu0 0.0
    %1190 = vmatpush1.xpose.msra.mxu0 0.0
    %1191 = vmatprep.subr.mxu0 0.0
    %1192 = vmatpush1.xpose.msra.mxu0 0.0
    %1193 = vmatprep.subr.mxu0 0.0
    %1194 = vmatpush1.xpose.msra.mxu0 0.0
    %1195 = vmatprep.subr.mxu0 0.0
    %1196 = vmatpush1.xpose.msra.mxu0 0.0
    %1197 = vmatprep.subr.mxu0 0.0
    %1198 = vmatpush1.xpose.msra.mxu0 0.0
    %1199 = vmatprep.subr.mxu0 0.0
    %1200 = vmatpush1.xpose.msra.mxu0 0.0
    %1201 = vmatprep.subr.mxu0 0.0
    %1202 = vmatpush1.xpose.msra.mxu0 %v1169
    %1203 = vmatprep.subr.mxu0 0.0
    %1204 = vmatpush2.xpose.msra.mxu0 0.0
    %1205 = vmatprep.subr.mxu0 0.0
    %1206 = vmatpush2.xpose.msra.mxu0 0.0
    %1207 = vmatprep.subr.mxu0 0.0
    %1208 = vmatpush2.xpose.msra.mxu0 0.0
    %1209 = vmatprep.subr.mxu0 0.0
    %1210 = vmatpush2.xpose.msra.mxu0 0.0
    %1211 = vmatprep.subr.mxu0 0.0
    %1212 = vmatpush2.xpose.msra.mxu0 0.0
    %1213 = vmatprep.subr.mxu0 0.0
    %1214 = vmatpush2.xpose.msra.mxu0 0.0
    %1215 = vmatprep.subr.mxu0 0.0
    %1216 = vmatpush2.xpose.msra.mxu0 0.0
    %1217 = vmatprep.subr.mxu0 0.0
    %1218 = vmatpush2.xpose.msra.mxu0 0.0
    %1219 = vmatprep.subr.mxu0 0.0
    %1220 = vmatpush2.xpose.msra.mxu0 0.0
    %1221 = vmatprep.subr.mxu0 0.0
    %1222 = vmatpush2.xpose.msra.mxu0 0.0
    %1223 = vmatprep.subr.mxu0 0.0
    %1224 = vmatpush2.xpose.msra.mxu0 0.0
    %1225 = vmatprep.subr.mxu0 0.0
    %1226 = vmatpush2.xpose.msra.mxu0 0.0
    %1227 = vmatprep.subr.mxu0 0.0
    %1228 = vmatpush2.xpose.msra.mxu0 0.0
    %1229 = vmatprep.subr.mxu0 0.0
    %1230 = vmatpush2.xpose.msra.mxu0 0.0
    %1231 = vmatprep.subr.mxu0 0.0
    %1232 = vmatpush2.xpose.msra.mxu0 0.0
    %1233 = vmatprep.subr.mxu0 0.0
    %1234 = vmatpush2.xpose.msra.mxu0 0.0
    %1235 = vmatprep.mubr.f32.mxu0 0.0
    %1236 = vmatmul.mubr.f32.gmra.mxu0 %v1167
    %v1237 = vpop.f32.mrf.mxu0
    %v1238 = vadd.f32 0.0, %v1237
    %v1239 = vpop.f32.mrf.mxu0
    %1240 = vdwg.mxu0
    %1241 = vrot.lane.b32.xlu0 %v147, 104
    %v1242 = vpop.permute.xlu0 %1241
    %1243 = vrot.lane.b32.xlu0 %v147, 72
    %v1244 = vpop.permute.xlu0 %1243
    %v1245 = vsel %vm153, %v1242, 0
    %v1247 = vsel %vm153, %v1244, 0
    %1249 = vmatprep.subr.mxu0 0.0
    %1250 = vmatpush1.xpose.msra.mxu0 0.0
    %1251 = vmatprep.subr.mxu0 0.0
    %1252 = vmatpush1.xpose.msra.mxu0 0.0
    %1253 = vmatprep.subr.mxu0 0.0
    %1254 = vmatpush1.xpose.msra.mxu0 0.0
    %1255 = vmatprep.subr.mxu0 0.0
    %1256 = vmatpush1.xpose.msra.mxu0 0.0
    %1257 = vmatprep.subr.mxu0 0.0
    %1258 = vmatpush1.xpose.msra.mxu0 0.0
    %1259 = vmatprep.subr.mxu0 0.0
    %1260 = vmatpush1.xpose.msra.mxu0 0.0
    %1261 = vmatprep.subr.mxu0 0.0
    %1262 = vmatpush1.xpose.msra.mxu0 0.0
    %1263 = vmatprep.subr.mxu0 0.0
    %1264 = vmatpush1.xpose.msra.mxu0 0.0
    %1265 = vmatprep.subr.mxu0 0.0
    %1266 = vmatpush1.xpose.msra.mxu0 0.0
    %1267 = vmatprep.subr.mxu0 0.0
    %1268 = vmatpush1.xpose.msra.mxu0 0.0
    %1269 = vmatprep.subr.mxu0 0.0
    %1270 = vmatpush1.xpose.msra.mxu0 0.0
    %1271 = vmatprep.subr.mxu0 0.0
    %1272 = vmatpush1.xpose.msra.mxu0 0.0
    %1273 = vmatprep.subr.mxu0 0.0
    %1274 = vmatpush1.xpose.msra.mxu0 0.0
    %1275 = vmatprep.subr.mxu0 0.0
    %1276 = vmatpush1.xpose.msra.mxu0 0.0
    %1277 = vmatprep.subr.mxu0 0.0
    %1278 = vmatpush1.xpose.msra.mxu0 0.0
    %1279 = vmatprep.subr.mxu0 0.0
    %1280 = vmatpush1.xpose.msra.mxu0 %v1247
    %1281 = vmatprep.subr.mxu0 0.0
    %1282 = vmatpush2.xpose.msra.mxu0 0.0
    %1283 = vmatprep.subr.mxu0 0.0
    %1284 = vmatpush2.xpose.msra.mxu0 0.0
    %1285 = vmatprep.subr.mxu0 0.0
    %1286 = vmatpush2.xpose.msra.mxu0 0.0
    %1287 = vmatprep.subr.mxu0 0.0
    %1288 = vmatpush2.xpose.msra.mxu0 0.0
    %1289 = vmatprep.subr.mxu0 0.0
    %1290 = vmatpush2.xpose.msra.mxu0 0.0
    %1291 = vmatprep.subr.mxu0 0.0
    %1292 = vmatpush2.xpose.msra.mxu0 0.0
    %1293 = vmatprep.subr.mxu0 0.0
    %1294 = vmatpush2.xpose.msra.mxu0 0.0
    %1295 = vmatprep.subr.mxu0 0.0
    %1296 = vmatpush2.xpose.msra.mxu0 0.0
    %1297 = vmatprep.subr.mxu0 0.0
    %1298 = vmatpush2.xpose.msra.mxu0 0.0
    %1299 = vmatprep.subr.mxu0 0.0
    %1300 = vmatpush2.xpose.msra.mxu0 0.0
    %1301 = vmatprep.subr.mxu0 0.0
    %1302 = vmatpush2.xpose.msra.mxu0 0.0
    %1303 = vmatprep.subr.mxu0 0.0
    %1304 = vmatpush2.xpose.msra.mxu0 0.0
    %1305 = vmatprep.subr.mxu0 0.0
    %1306 = vmatpush2.xpose.msra.mxu0 0.0
    %1307 = vmatprep.subr.mxu0 0.0
    %1308 = vmatpush2.xpose.msra.mxu0 0.0
    %1309 = vmatprep.subr.mxu0 0.0
    %1310 = vmatpush2.xpose.msra.mxu0 0.0
    %1311 = vmatprep.subr.mxu0 0.0
    %1312 = vmatpush2.xpose.msra.mxu0 0.0
    %1313 = vmatprep.mubr.f32.mxu0 0.0
    %1314 = vmatmul.mubr.f32.gmra.mxu0 %v1245
    %v1315 = vpop.f32.mrf.mxu0
    %v1316 = vadd.f32 0.0, %v1315
    %v1317 = vpop.f32.mrf.mxu0
    %1318 = vdwg.mxu0
    %v1319 = vmul.f32 %v1238, 0.35355338
    %v1320 = vmul.f32 %v1316, 0.35355338
    %v1321 = vadd.f32 %v1319, %v312
    %v1322 = vadd.f32 %v1320, %v316
    %v1323 = vsel %vm153, %v1321, -inf
    %1324 = vmax.xlane.f32.xlu0 %v1323
    %v1325 = vpop.xlane.xlu0 %1324
    %v1326 = vsel %vm153, %v1322, -inf
    %1327 = vmax.xlane.f32.xlu0 %v1326
    %v1328 = vpop.xlane.xlu0 %1327
    %v1329 = vsub.f32 %v1321, %v1325
    %v1330 = vsub.f32 %v1322, %v1328
    %v1331 = vmul.f32 %v1329, 1.442695
    %v1332 = vpow.pop %v1331
    %v1333 = vmul.f32 %v1330, 1.442695
    %v1334 = vpow.pop %v1333
    %v1335 = vsel %vm153, %v1332, 0.0
    %1336 = vadd.xlane.f32.xlu0 %v1335
    %v1337 = vpop.xlane.xlu0 %1336
    %v1338 = vsel %vm153, %v1334, 0.0
    %1339 = vadd.xlane.f32.xlu0 %v1338
    %v1340 = vpop.xlane.xlu0 %1339
    %v1341 = vrcp.pop %v1337
    %v1342 = vmul.f32 %v1332, %v1341
    %v1343 = vrcp.pop %v1340
    %v1344 = vmul.f32 %v1334, %v1343
    %1345 = vrot.lane.b32.xlu0 %v142, 40
    %v1346 = vpop.permute.xlu0 %1345
    %v1349 = vsel %vm153, %v1342, 0
    %1351 = vmatprep.subr.mxu0 0.0
    %1352 = vmatpush1.msra.mxu0 0.0
    %1353 = vmatprep.subr.mxu0 0.0
    %1354 = vmatpush1.msra.mxu0 0.0
    %1355 = vmatprep.subr.mxu0 0.0
    %1356 = vmatpush1.msra.mxu0 0.0
    %1357 = vmatprep.subr.mxu0 0.0
    %1358 = vmatpush1.msra.mxu0 0.0
    %1359 = vmatprep.subr.mxu0 0.0
    %1360 = vmatpush1.msra.mxu0 0.0
    %1361 = vmatprep.subr.mxu0 0.0
    %1362 = vmatpush1.msra.mxu0 0.0
    %1363 = vmatprep.subr.mxu0 0.0
    %1364 = vmatpush1.msra.mxu0 0.0
    %1365 = vmatprep.subr.mxu0 0.0
    %1366 = vmatpush1.msra.mxu0 0.0
    %1367 = vmatprep.subr.mxu0 0.0
    %1368 = vmatpush1.msra.mxu0 0.0
    %1369 = vmatprep.subr.mxu0 0.0
    %1370 = vmatpush1.msra.mxu0 0.0
    %1371 = vmatprep.subr.mxu0 0.0
    %1372 = vmatpush1.msra.mxu0 0.0
    %1373 = vmatprep.subr.mxu0 0.0
    %1374 = vmatpush1.msra.mxu0 0.0
    %1375 = vmatprep.subr.mxu0 0.0
    %1376 = vmatpush1.msra.mxu0 0.0
    %1377 = vmatprep.subr.mxu0 0.0
    %1378 = vmatpush1.msra.mxu0 0.0
    %1379 = vmatprep.subr.mxu0 0.0
    %1380 = vmatpush1.msra.mxu0 0.0
    %1381 = vmatprep.subr.mxu0 0.0
    %1382 = vmatpush1.msra.mxu0 %v1346
    %1383 = vmatprep.subr.mxu0 0.0
    %1384 = vmatpush2.msra.mxu0 0.0
    %1385 = vmatprep.subr.mxu0 0.0
    %1386 = vmatpush2.msra.mxu0 0.0
    %1387 = vmatprep.subr.mxu0 0.0
    %1388 = vmatpush2.msra.mxu0 0.0
    %1389 = vmatprep.subr.mxu0 0.0
    %1390 = vmatpush2.msra.mxu0 0.0
    %1391 = vmatprep.subr.mxu0 0.0
    %1392 = vmatpush2.msra.mxu0 0.0
    %1393 = vmatprep.subr.mxu0 0.0
    %1394 = vmatpush2.msra.mxu0 0.0
    %1395 = vmatprep.subr.mxu0 0.0
    %1396 = vmatpush2.msra.mxu0 0.0
    %1397 = vmatprep.subr.mxu0 0.0
    %1398 = vmatpush2.msra.mxu0 0.0
    %1399 = vmatprep.subr.mxu0 0.0
    %1400 = vmatpush2.msra.mxu0 0.0
    %1401 = vmatprep.subr.mxu0 0.0
    %1402 = vmatpush2.msra.mxu0 0.0
    %1403 = vmatprep.subr.mxu0 0.0
    %1404 = vmatpush2.msra.mxu0 0.0
    %1405 = vmatprep.subr.mxu0 0.0
    %1406 = vmatpush2.msra.mxu0 0.0
    %1407 = vmatprep.subr.mxu0 0.0
    %1408 = vmatpush2.msra.mxu0 0.0
    %1409 = vmatprep.subr.mxu0 0.0
    %1410 = vmatpush2.msra.mxu0 0.0
    %1411 = vmatprep.subr.mxu0 0.0
    %1412 = vmatpush2.msra.mxu0 0.0
    %1413 = vmatprep.subr.mxu0 0.0
    %1414 = vmatpush2.msra.mxu0 0.0
    %1415 = vmatprep.mubr.f32.mxu0 0.0
    %1416 = vmatmul.mubr.f32.gmra.mxu0 %v1349
    %v1417 = vpop.f32.mrf.mxu0
    %v1418 = vadd.f32 0.0, %v1417
    %v1419 = vpop.f32.mrf.mxu0
    %1420 = vdwg.mxu0
    %1421 = vrot.lane.b32.xlu0 %v147, 40
    %v1422 = vpop.permute.xlu0 %1421
    %v1425 = vsel %vm153, %v1344, 0
    %1427 = vmatprep.subr.mxu0 0.0
    %1428 = vmatpush1.msra.mxu0 0.0
    %1429 = vmatprep.subr.mxu0 0.0
    %1430 = vmatpush1.msra.mxu0 0.0
    %1431 = vmatprep.subr.mxu0 0.0
    %1432 = vmatpush1.msra.mxu0 0.0
    %1433 = vmatprep.subr.mxu0 0.0
    %1434 = vmatpush1.msra.mxu0 0.0
    %1435 = vmatprep.subr.mxu0 0.0
    %1436 = vmatpush1.msra.mxu0 0.0
    %1437 = vmatprep.subr.mxu0 0.0
    %1438 = vmatpush1.msra.mxu0 0.0
    %1439 = vmatprep.subr.mxu0 0.0
    %1440 = vmatpush1.msra.mxu0 0.0
    %1441 = vmatprep.subr.mxu0 0.0
    %1442 = vmatpush1.msra.mxu0 0.0
    %1443 = vmatprep.subr.mxu0 0.0
    %1444 = vmatpush1.msra.mxu0 0.0
    %1445 = vmatprep.subr.mxu0 0.0
    %1446 = vmatpush1.msra.mxu0 0.0
    %1447 = vmatprep.subr.mxu0 0.0
    %1448 = vmatpush1.msra.mxu0 0.0
    %1449 = vmatprep.subr.mxu0 0.0
    %1450 = vmatpush1.msra.mxu0 0.0
    %1451 = vmatprep.subr.mxu0 0.0
    %1452 = vmatpush1.msra.mxu0 0.0
    %1453 = vmatprep.subr.mxu0 0.0
    %1454 = vmatpush1.msra.mxu0 0.0
    %1455 = vmatprep.subr.mxu0 0.0
    %1456 = vmatpush1.msra.mxu0 0.0
    %1457 = vmatprep.subr.mxu0 0.0
    %1458 = vmatpush1.msra.mxu0 %v1422
    %1459 = vmatprep.subr.mxu0 0.0
    %1460 = vmatpush2.msra.mxu0 0.0
    %1461 = vmatprep.subr.mxu0 0.0
    %1462 = vmatpush2.msra.mxu0 0.0
    %1463 = vmatprep.subr.mxu0 0.0
    %1464 = vmatpush2.msra.mxu0 0.0
    %1465 = vmatprep.subr.mxu0 0.0
    %1466 = vmatpush2.msra.mxu0 0.0
    %1467 = vmatprep.subr.mxu0 0.0
    %1468 = vmatpush2.msra.mxu0 0.0
    %1469 = vmatprep.subr.mxu0 0.0
    %1470 = vmatpush2.msra.mxu0 0.0
    %1471 = vmatprep.subr.mxu0 0.0
    %1472 = vmatpush2.msra.mxu0 0.0
    %1473 = vmatprep.subr.mxu0 0.0
    %1474 = vmatpush2.msra.mxu0 0.0
    %1475 = vmatprep.subr.mxu0 0.0
    %1476 = vmatpush2.msra.mxu0 0.0
    %1477 = vmatprep.subr.mxu0 0.0
    %1478 = vmatpush2.msra.mxu0 0.0
    %1479 = vmatprep.subr.mxu0 0.0
    %1480 = vmatpush2.msra.mxu0 0.0
    %1481 = vmatprep.subr.mxu0 0.0
    %1482 = vmatpush2.msra.mxu0 0.0
    %1483 = vmatprep.subr.mxu0 0.0
    %1484 = vmatpush2.msra.mxu0 0.0
    %1485 = vmatprep.subr.mxu0 0.0
    %1486 = vmatpush2.msra.mxu0 0.0
    %1487 = vmatprep.subr.mxu0 0.0
    %1488 = vmatpush2.msra.mxu0 0.0
    %1489 = vmatprep.subr.mxu0 0.0
    %1490 = vmatpush2.msra.mxu0 0.0
    %1491 = vmatprep.mubr.f32.mxu0 0.0
    %1492 = vmatmul.mubr.f32.gmra.mxu0 %v1425
    %v1493 = vpop.f32.mrf.mxu0
    %v1494 = vadd.f32 0.0, %v1493
    %v1495 = vpop.f32.mrf.mxu0
    %1496 = vdwg.mxu0
    %1499 = vrot.lane.b32.xlu0 %v750, 8
    %v1500 = vpop.permute.xlu0 %1499
    %1501 = vrot.lane.b32.xlu0 %v826, 8
    %v1502 = vpop.permute.xlu0 %1501
    %1507 = vrot.lane.b32.xlu0 %v1084, 16
    %v1508 = vpop.permute.xlu0 %1507
    %1509 = vrot.lane.b32.xlu0 %v1160, 16
    %v1510 = vpop.permute.xlu0 %1509
    %1515 = vrot.lane.b32.xlu0 %v1418, 24
    %v1516 = vpop.permute.xlu0 %1515
    %1517 = vrot.lane.b32.xlu0 %v1494, 24
    %v1518 = vpop.permute.xlu0 %1517
    %v1521 = vsel %vm153, %v416, %v1500
    %v1522 = vsel %vm153, %v492, %v1502
    %vm1523 = vcmask 130048
    %v1524 = vsel %vm1523, %v1521, %v1508
    %v1525 = vsel %vm1523, %v1522, %v1510
    %vm1526 = vcmask 195584
    %v1527 = vsel %vm1526, %v1524, %v1516
    %v1528 = vsel %vm1526, %v1525, %v1518
    %v1529 = vld [vmem:[%s5] sm:$0xff]
    %v1530 = vld [vmem:[%s5 + $0x8] sm:$0xff]
    %v1531 = vld [vmem:[%s5 + $0x10] sm:$0xff]
    %v1532 = vld [vmem:[%s5 + $0x18] sm:$0xff]
    %v1533 = vlaneseq
    %v1534 = vshrl.u32 %v1533, 7
    %v1535 = vsub.s32 1, %v1534
    %v1536 = vrot.slane %v59, %v1535
    %v1538 = vsel %vm68, %v1527, 0
    %v1541 = vsel %vm68, %v1528, 0
    %1543 = vmatprep.subr.mxu0 0.0
    %1544 = vmatpush1.msra.mxu0 0.0
    %1545 = vmatprep.subr.mxu0 0.0
    %1546 = vmatpush1.msra.mxu0 0.0
    %1547 = vmatprep.subr.mxu0 0.0
    %1548 = vmatpush1.msra.mxu0 0.0
    %1549 = vmatprep.subr.mxu0 0.0
    %1550 = vmatpush1.msra.mxu0 0.0
    %1551 = vmatprep.subr.mxu0 0.0
    %1552 = vmatpush1.msra.mxu0 0.0
    %1553 = vmatprep.subr.mxu0 0.0
    %1554 = vmatpush1.msra.mxu0 0.0
    %1555 = vmatprep.subr.mxu0 0.0
    %1556 = vmatpush1.msra.mxu0 0.0
    %1557 = vmatprep.subr.mxu0 0.0
    %1558 = vmatpush1.msra.mxu0 0.0
    %1559 = vmatprep.subr.mxu0 0.0
    %1560 = vmatpush1.msra.mxu0 0.0
    %1561 = vmatprep.subr.mxu0 0.0
    %1562 = vmatpush1.msra.mxu0 0.0
    %1563 = vmatprep.subr.mxu0 0.0
    %1564 = vmatpush1.msra.mxu0 0.0
    %1565 = vmatprep.subr.mxu0 0.0
    %1566 = vmatpush1.msra.mxu0 0.0
    %1567 = vmatprep.subr.mxu0 0.0
    %1568 = vmatpush1.msra.mxu0 %v1532
    %1569 = vmatprep.subr.mxu0 0.0
    %1570 = vmatpush1.msra.mxu0 %v1531
    %1571 = vmatprep.subr.mxu0 0.0
    %1572 = vmatpush1.msra.mxu0 %v1530
    %1573 = vmatprep.subr.mxu0 0.0
    %1574 = vmatpush1.msra.mxu0 %v1529
    %1575 = vmatprep.subr.mxu0 0.0
    %1576 = vmatpush2.msra.mxu0 0.0
    %1577 = vmatprep.subr.mxu0 0.0
    %1578 = vmatpush2.msra.mxu0 0.0
    %1579 = vmatprep.subr.mxu0 0.0
    %1580 = vmatpush2.msra.mxu0 0.0
    %1581 = vmatprep.subr.mxu0 0.0
    %1582 = vmatpush2.msra.mxu0 0.0
    %1583 = vmatprep.subr.mxu0 0.0
    %1584 = vmatpush2.msra.mxu0 0.0
    %1585 = vmatprep.subr.mxu0 0.0
    %1586 = vmatpush2.msra.mxu0 0.0
    %1587 = vmatprep.subr.mxu0 0.0
    %1588 = vmatpush2.msra.mxu0 0.0
    %1589 = vmatprep.subr.mxu0 0.0
    %1590 = vmatpush2.msra.mxu0 0.0
    %1591 = vmatprep.subr.mxu0 0.0
    %1592 = vmatpush2.msra.mxu0 0.0
    %1593 = vmatprep.subr.mxu0 0.0
    %1594 = vmatpush2.msra.mxu0 0.0
    %1595 = vmatprep.subr.mxu0 0.0
    %1596 = vmatpush2.msra.mxu0 0.0
    %1597 = vmatprep.subr.mxu0 0.0
    %1598 = vmatpush2.msra.mxu0 0.0
    %1599 = vmatprep.subr.mxu0 0.0
    %1600 = vmatpush2.msra.mxu0 0.0
    %1601 = vmatprep.subr.mxu0 0.0
    %1602 = vmatpush2.msra.mxu0 0.0
    %1603 = vmatprep.subr.mxu0 0.0
    %1604 = vmatpush2.msra.mxu0 0.0
    %1605 = vmatprep.subr.mxu0 0.0
    %1606 = vmatpush2.msra.mxu0 0.0
    %1607 = vmatprep.mubr.f32.mxu0 0.0
    %1608 = vmatmul.mubr.f32.gmra.mxu0 %v1538
    %v1609 = vpop.f32.mrf.mxu0
    %v1610 = vadd.f32 %v1536, %v1609
    %v1611 = vpop.f32.mrf.mxu0
    %1612 = vmatprep.mubr.f32.mxu0 0.0
    %1613 = vmatmul.mubr.f32.gmra.mxu0 %v1541
    %v1614 = vpop.f32.mrf.mxu0
    %v1615 = vadd.f32 %v1536, %v1614
    %v1616 = vpop.f32.mrf.mxu0
    %1617 = vdwg.mxu0
    %v1618 = vadd.f32 %v1610, %v57
    %v1619 = vadd.f32 %v1615, %v58
    %v1620 = vsel %vm68, %v1618, 0.0
    %1621 = vadd.xlane.f32.xlu0 %v1620
    %v1622 = vpop.xlane.xlu0 %1621
    %v1623 = vsel %vm68, %v1619, 0.0
    %1624 = vadd.xlane.f32.xlu0 %v1623
    %v1625 = vpop.xlane.xlu0 %1624
    %v1626 = vrcp.pop 32.0
    %v1627 = vmul.f32 %v1622, %v1626
    %v1628 = vmul.f32 %v1625, %v1626
    %v1629 = vsub.f32 %v1618, %v1627
    %v1630 = vsub.f32 %v1619, %v1628
    %v1631 = vmul.f32 %v1629, %v1629
    %v1632 = vmul.f32 %v1630, %v1630
    %v1633 = vsel %vm68, %v1631, 0.0
    %1634 = vadd.xlane.f32.xlu0 %v1633
    %v1635 = vpop.xlane.xlu0 %1634
    %v1636 = vsel %vm68, %v1632, 0.0
    %1637 = vadd.xlane.f32.xlu0 %v1636
    %v1638 = vpop.xlane.xlu0 %1637
    %v1639 = vmul.f32 %v1635, %v1626
    %v1640 = vmul.f32 %v1638, %v1626
    %v1641 = vadd.f32 %v1639, 1e-12
    %v1642 = vadd.f32 %v1640, 1e-12
    %v1643 = vrsqrt.pop %v1641
    %v1644 = vrsqrt.pop %v1642
    %v1645 = vmul.f32 %v1629, %v1643
    %v1646 = vmul.f32 %v1630, %v1644
    %v1647 = vlaneseq
    %v1648 = vshrl.u32 %v1647, 7
    %v1649 = vsub.s32 2, %v1648
    %v1650 = vrot.slane %v59, %v1649
    %v1651 = vmul.f32 %v1645, %v1650
    %v1652 = vmul.f32 %v1646, %v1650
    %v1653 = vlaneseq
    %v1654 = vshrl.u32 %v1653, 7
    %v1655 = vsub.s32 3, %v1654
    %v1656 = vrot.slane %v59, %v1655
    %v1657 = vadd.f32 %v1651, %v1656
    %v1658 = vadd.f32 %v1652, %v1656
    %v1659 = vld [vmem:[%s6] sm:$0xff]
    %v1660 = vld [vmem:[%s6 + $0x8] sm:$0xff]
    %v1661 = vld [vmem:[%s6 + $0x10] sm:$0xff]
    %v1662 = vld [vmem:[%s6 + $0x18] sm:$0xff]
    %v1663 = vlaneseq
    %v1664 = vshrl.u32 %v1663, 7
    %v1665 = vsub.s32 4, %v1664
    %v1666 = vrot.slane %v59, %v1665
    %v1668 = vsel %vm68, %v1657, 0
    %v1671 = vsel %vm68, %v1658, 0
    %1673 = vmatprep.subr.mxu0 0.0
    %1674 = vmatpush1.msra.mxu0 0.0
    %1675 = vmatprep.subr.mxu0 0.0
    %1676 = vmatpush1.msra.mxu0 0.0
    %1677 = vmatprep.subr.mxu0 0.0
    %1678 = vmatpush1.msra.mxu0 0.0
    %1679 = vmatprep.subr.mxu0 0.0
    %1680 = vmatpush1.msra.mxu0 0.0
    %1681 = vmatprep.subr.mxu0 0.0
    %1682 = vmatpush1.msra.mxu0 0.0
    %1683 = vmatprep.subr.mxu0 0.0
    %1684 = vmatpush1.msra.mxu0 0.0
    %1685 = vmatprep.subr.mxu0 0.0
    %1686 = vmatpush1.msra.mxu0 0.0
    %1687 = vmatprep.subr.mxu0 0.0
    %1688 = vmatpush1.msra.mxu0 0.0
    %1689 = vmatprep.subr.mxu0 0.0
    %1690 = vmatpush1.msra.mxu0 0.0
    %1691 = vmatprep.subr.mxu0 0.0
    %1692 = vmatpush1.msra.mxu0 0.0
    %1693 = vmatprep.subr.mxu0 0.0
    %1694 = vmatpush1.msra.mxu0 0.0
    %1695 = vmatprep.subr.mxu0 0.0
    %1696 = vmatpush1.msra.mxu0 0.0
    %1697 = vmatprep.subr.mxu0 0.0
    %1698 = vmatpush1.msra.mxu0 %v1662
    %1699 = vmatprep.subr.mxu0 0.0
    %1700 = vmatpush1.msra.mxu0 %v1661
    %1701 = vmatprep.subr.mxu0 0.0
    %1702 = vmatpush1.msra.mxu0 %v1660
    %1703 = vmatprep.subr.mxu0 0.0
    %1704 = vmatpush1.msra.mxu0 %v1659
    %1705 = vmatprep.subr.mxu0 0.0
    %1706 = vmatpush2.msra.mxu0 0.0
    %1707 = vmatprep.subr.mxu0 0.0
    %1708 = vmatpush2.msra.mxu0 0.0
    %1709 = vmatprep.subr.mxu0 0.0
    %1710 = vmatpush2.msra.mxu0 0.0
    %1711 = vmatprep.subr.mxu0 0.0
    %1712 = vmatpush2.msra.mxu0 0.0
    %1713 = vmatprep.subr.mxu0 0.0
    %1714 = vmatpush2.msra.mxu0 0.0
    %1715 = vmatprep.subr.mxu0 0.0
    %1716 = vmatpush2.msra.mxu0 0.0
    %1717 = vmatprep.subr.mxu0 0.0
    %1718 = vmatpush2.msra.mxu0 0.0
    %1719 = vmatprep.subr.mxu0 0.0
    %1720 = vmatpush2.msra.mxu0 0.0
    %1721 = vmatprep.subr.mxu0 0.0
    %1722 = vmatpush2.msra.mxu0 0.0
    %1723 = vmatprep.subr.mxu0 0.0
    %1724 = vmatpush2.msra.mxu0 0.0
    %1725 = vmatprep.subr.mxu0 0.0
    %1726 = vmatpush2.msra.mxu0 0.0
    %1727 = vmatprep.subr.mxu0 0.0
    %1728 = vmatpush2.msra.mxu0 0.0
    %1729 = vmatprep.subr.mxu0 0.0
    %1730 = vmatpush2.msra.mxu0 0.0
    %1731 = vmatprep.subr.mxu0 0.0
    %1732 = vmatpush2.msra.mxu0 0.0
    %1733 = vmatprep.subr.mxu0 0.0
    %1734 = vmatpush2.msra.mxu0 0.0
    %1735 = vmatprep.subr.mxu0 0.0
    %1736 = vmatpush2.msra.mxu0 0.0
    %1737 = vmatprep.mubr.f32.mxu0 0.0
    %1738 = vmatmul.mubr.f32.gmra.mxu0 %v1668
    %v1739 = vpop.f32.mrf.mxu0
    %v1740 = vadd.f32 %v1666, %v1739
    %v1741 = vpop.f32.mrf.mxu0
    %1742 = vmatprep.mubr.f32.mxu0 0.0
    %1743 = vmatmul.mubr.f32.gmra.mxu0 %v1671
    %v1744 = vpop.f32.mrf.mxu0
    %v1745 = vadd.f32 %v1666, %v1744
    %v1746 = vpop.f32.mrf.mxu0
    %1747 = vdwg.mxu0
    %v1748 = vmul.f32 %v1740, 0.5
    %v1749 = vmul.f32 %v1745, 0.5
    %v1750 = vrcp.pop 1.4142135
    %v1751 = vmul.f32 %v1740, %v1750
    %v1752 = vmul.f32 %v1745, %v1750
    %v1753 = verf.f32.pop %v1751
    %v1754 = verf.f32.pop %v1752
    %v1755 = vadd.f32 %v1753, 1.0
    %v1756 = vadd.f32 %v1754, 1.0
    %v1757 = vmul.f32 %v1748, %v1755
    %v1758 = vmul.f32 %v1749, %v1756
    %v1759 = vld [vmem:[%s7] sm:$0xff]
    %v1760 = vld [vmem:[%s7 + $0x8] sm:$0xff]
    %v1761 = vld [vmem:[%s7 + $0x10] sm:$0xff]
    %v1762 = vld [vmem:[%s7 + $0x18] sm:$0xff]
    %v1763 = vld [vmem:[%s7 + $0x20] sm:$0xff]
    %v1764 = vld [vmem:[%s7 + $0x28] sm:$0xff]
    %v1765 = vld [vmem:[%s7 + $0x30] sm:$0xff]
    %v1766 = vld [vmem:[%s7 + $0x38] sm:$0xff]
    %v1767 = vlaneseq
    %v1768 = vshrl.u32 %v1767, 7
    %v1769 = vsub.s32 5, %v1768
    %v1770 = vrot.slane %v59, %v1769
    %vm1771 = vcmask 523264
    %v1773 = vsel %vm1771, %v1757, 0
    %v1776 = vsel %vm1771, %v1758, 0
    %1778 = vmatprep.subr.mxu0 0.0
    %1779 = vmatpush1.msra.mxu0 0.0
    %1780 = vmatprep.subr.mxu0 0.0
    %1781 = vmatpush1.msra.mxu0 0.0
    %1782 = vmatprep.subr.mxu0 0.0
    %1783 = vmatpush1.msra.mxu0 0.0
    %1784 = vmatprep.subr.mxu0 0.0
    %1785 = vmatpush1.msra.mxu0 0.0
    %1786 = vmatprep.subr.mxu0 0.0
    %1787 = vmatpush1.msra.mxu0 0.0
    %1788 = vmatprep.subr.mxu0 0.0
    %1789 = vmatpush1.msra.mxu0 0.0
    %1790 = vmatprep.subr.mxu0 0.0
    %1791 = vmatpush1.msra.mxu0 0.0
    %1792 = vmatprep.subr.mxu0 0.0
    %1793 = vmatpush1.msra.mxu0 0.0
    %1794 = vmatprep.subr.mxu0 0.0
    %1795 = vmatpush1.msra.mxu0 %v1766
    %1796 = vmatprep.subr.mxu0 0.0
    %1797 = vmatpush1.msra.mxu0 %v1765
    %1798 = vmatprep.subr.mxu0 0.0
    %1799 = vmatpush1.msra.mxu0 %v1764
    %1800 = vmatprep.subr.mxu0 0.0
    %1801 = vmatpush1.msra.mxu0 %v1763
    %1802 = vmatprep.subr.mxu0 0.0
    %1803 = vmatpush1.msra.mxu0 %v1762
    %1804 = vmatprep.subr.mxu0 0.0
    %1805 = vmatpush1.msra.mxu0 %v1761
    %1806 = vmatprep.subr.mxu0 0.0
    %1807 = vmatpush1.msra.mxu0 %v1760
    %1808 = vmatprep.subr.mxu0 0.0
    %1809 = vmatpush1.msra.mxu0 %v1759
    %1810 = vmatprep.subr.mxu0 0.0
    %1811 = vmatpush2.msra.mxu0 0.0
    %1812 = vmatprep.subr.mxu0 0.0
    %1813 = vmatpush2.msra.mxu0 0.0
    %1814 = vmatprep.subr.mxu0 0.0
    %1815 = vmatpush2.msra.mxu0 0.0
    %1816 = vmatprep.subr.mxu0 0.0
    %1817 = vmatpush2.msra.mxu0 0.0
    %1818 = vmatprep.subr.mxu0 0.0
    %1819 = vmatpush2.msra.mxu0 0.0
    %1820 = vmatprep.subr.mxu0 0.0
    %1821 = vmatpush2.msra.mxu0 0.0
    %1822 = vmatprep.subr.mxu0 0.0
    %1823 = vmatpush2.msra.mxu0 0.0
    %1824 = vmatprep.subr.mxu0 0.0
    %1825 = vmatpush2.msra.mxu0 0.0
    %1826 = vmatprep.subr.mxu0 0.0
    %1827 = vmatpush2.msra.mxu0 0.0
    %1828 = vmatprep.subr.mxu0 0.0
    %1829 = vmatpush2.msra.mxu0 0.0
    %1830 = vmatprep.subr.mxu0 0.0
    %1831 = vmatpush2.msra.mxu0 0.0
    %1832 = vmatprep.subr.mxu0 0.0
    %1833 = vmatpush2.msra.mxu0 0.0
    %1834 = vmatprep.subr.mxu0 0.0
    %1835 = vmatpush2.msra.mxu0 0.0
    %1836 = vmatprep.subr.mxu0 0.0
    %1837 = vmatpush2.msra.mxu0 0.0
    %1838 = vmatprep.subr.mxu0 0.0
    %1839 = vmatpush2.msra.mxu0 0.0
    %1840 = vmatprep.subr.mxu0 0.0
    %1841 = vmatpush2.msra.mxu0 0.0
    %1842 = vmatprep.mubr.f32.mxu0 0.0
    %1843 = vmatmul.mubr.f32.gmra.mxu0 %v1773
    %v1844 = vpop.f32.mrf.mxu0
    %v1845 = vadd.f32 %v1770, %v1844
    %v1846 = vpop.f32.mrf.mxu0
    %1847 = vmatprep.mubr.f32.mxu0 0.0
    %1848 = vmatmul.mubr.f32.gmra.mxu0 %v1776
    %v1849 = vpop.f32.mrf.mxu0
    %v1850 = vadd.f32 %v1770, %v1849
    %v1851 = vpop.f32.mrf.mxu0
    %1852 = vdwg.mxu0
    %v1853 = vadd.f32 %v1845, %v1657
    %v1854 = vadd.f32 %v1850, %v1658
    %v1855 = vsel %vm68, %v1853, 0.0
    %1856 = vadd.xlane.f32.xlu0 %v1855
    %v1857 = vpop.xlane.xlu0 %1856
    %v1858 = vsel %vm68, %v1854, 0.0
    %1859 = vadd.xlane.f32.xlu0 %v1858
    %v1860 = vpop.xlane.xlu0 %1859
    %v1861 = vmul.f32 %v1857, %v1626
    %v1862 = vmul.f32 %v1860, %v1626
    %v1863 = vsub.f32 %v1853, %v1861
    %v1864 = vsub.f32 %v1854, %v1862
    %v1865 = vmul.f32 %v1863, %v1863
    %v1866 = vmul.f32 %v1864, %v1864
    %v1867 = vsel %vm68, %v1865, 0.0
    %1868 = vadd.xlane.f32.xlu0 %v1867
    %v1869 = vpop.xlane.xlu0 %1868
    %v1870 = vsel %vm68, %v1866, 0.0
    %1871 = vadd.xlane.f32.xlu0 %v1870
    %v1872 = vpop.xlane.xlu0 %1871
    %v1873 = vmul.f32 %v1869, %v1626
    %v1874 = vmul.f32 %v1872, %v1626
    %v1875 = vadd.f32 %v1873, 1e-12
    %v1876 = vadd.f32 %v1874, 1e-12
    %v1877 = vrsqrt.pop %v1875
    %v1878 = vrsqrt.pop %v1876
    %v1879 = vmul.f32 %v1863, %v1877
    %v1880 = vmul.f32 %v1864, %v1878
    %v1881 = vlaneseq
    %v1882 = vshrl.u32 %v1881, 7
    %v1883 = vsub.s32 6, %v1882
    %v1884 = vrot.slane %v59, %v1883
    %v1885 = vmul.f32 %v1879, %v1884
    %v1886 = vmul.f32 %v1880, %v1884
    %v1887 = vlaneseq
    %v1888 = vshrl.u32 %v1887, 7
    %v1889 = vsub.s32 7, %v1888
    %v1890 = vrot.slane %v59, %v1889
    %v1891 = vadd.f32 %v1885, %v1890
    %v1892 = vadd.f32 %v1886, %v1890
    %s1893 = scalar_lea.vmem %s8, 8
    %v1894 = vld [vmem:[%s1893] sm:$0xff]
    %s1895 = scalar_lea.vmem %s4, 32
    %v1896 = vld [vmem:[%s1895] sm:$0xff]
    %v1897 = vld [vmem:[%s1895 + $0x8] sm:$0xff]
    %v1898 = vld [vmem:[%s1895 + $0x10] sm:$0xff]
    %v1899 = vld [vmem:[%s1895 + $0x18] sm:$0xff]
    %v1900 = vlaneseq
    %v1901 = vshrl.u32 %v1900, 7
    %v1902 = vsub.s32 0, %v1901
    %v1903 = vrot.slane %v1894, %v1902
    %v1905 = vsel %vm68, %v1891, 0
    %v1908 = vsel %vm68, %v1892, 0
    %1910 = vmatprep.subr.mxu0 0.0
    %1911 = vmatpush1.msra.mxu0 0.0
    %1912 = vmatprep.subr.mxu0 0.0
    %1913 = vmatpush1.msra.mxu0 0.0
    %1914 = vmatprep.subr.mxu0 0.0
    %1915 = vmatpush1.msra.mxu0 0.0
    %1916 = vmatprep.subr.mxu0 0.0
    %1917 = vmatpush1.msra.mxu0 0.0
    %1918 = vmatprep.subr.mxu0 0.0
    %1919 = vmatpush1.msra.mxu0 0.0
    %1920 = vmatprep.subr.mxu0 0.0
    %1921 = vmatpush1.msra.mxu0 0.0
    %1922 = vmatprep.subr.mxu0 0.0
    %1923 = vmatpush1.msra.mxu0 0.0
    %1924 = vmatprep.subr.mxu0 0.0
    %1925 = vmatpush1.msra.mxu0 0.0
    %1926 = vmatprep.subr.mxu0 0.0
    %1927 = vmatpush1.msra.mxu0 0.0
    %1928 = vmatprep.subr.mxu0 0.0
    %1929 = vmatpush1.msra.mxu0 0.0
    %1930 = vmatprep.subr.mxu0 0.0
    %1931 = vmatpush1.msra.mxu0 0.0
    %1932 = vmatprep.subr.mxu0 0.0
    %1933 = vmatpush1.msra.mxu0 0.0
    %1934 = vmatprep.subr.mxu0 0.0
    %1935 = vmatpush1.msra.mxu0 %v1899
    %1936 = vmatprep.subr.mxu0 0.0
    %1937 = vmatpush1.msra.mxu0 %v1898
    %1938 = vmatprep.subr.mxu0 0.0
    %1939 = vmatpush1.msra.mxu0 %v1897
    %1940 = vmatprep.subr.mxu0 0.0
    %1941 = vmatpush1.msra.mxu0 %v1896
    %1942 = vmatprep.subr.mxu0 0.0
    %1943 = vmatpush2.msra.mxu0 0.0
    %1944 = vmatprep.subr.mxu0 0.0
    %1945 = vmatpush2.msra.mxu0 0.0
    %1946 = vmatprep.subr.mxu0 0.0
    %1947 = vmatpush2.msra.mxu0 0.0
    %1948 = vmatprep.subr.mxu0 0.0
    %1949 = vmatpush2.msra.mxu0 0.0
    %1950 = vmatprep.subr.mxu0 0.0
    %1951 = vmatpush2.msra.mxu0 0.0
    %1952 = vmatprep.subr.mxu0 0.0
    %1953 = vmatpush2.msra.mxu0 0.0
    %1954 = vmatprep.subr.mxu0 0.0
    %1955 = vmatpush2.msra.mxu0 0.0
    %1956 = vmatprep.subr.mxu0 0.0
    %1957 = vmatpush2.msra.mxu0 0.0
    %1958 = vmatprep.subr.mxu0 0.0
    %1959 = vmatpush2.msra.mxu0 0.0
    %1960 = vmatprep.subr.mxu0 0.0
    %1961 = vmatpush2.msra.mxu0 0.0
    %1962 = vmatprep.subr.mxu0 0.0
    %1963 = vmatpush2.msra.mxu0 0.0
    %1964 = vmatprep.subr.mxu0 0.0
    %1965 = vmatpush2.msra.mxu0 0.0
    %1966 = vmatprep.subr.mxu0 0.0
    %1967 = vmatpush2.msra.mxu0 0.0
    %1968 = vmatprep.subr.mxu0 0.0
    %1969 = vmatpush2.msra.mxu0 0.0
    %1970 = vmatprep.subr.mxu0 0.0
    %1971 = vmatpush2.msra.mxu0 0.0
    %1972 = vmatprep.subr.mxu0 0.0
    %1973 = vmatpush2.msra.mxu0 0.0
    %1974 = vmatprep.mubr.f32.mxu0 0.0
    %1975 = vmatmul.mubr.f32.gmra.mxu0 %v1905
    %v1976 = vpop.f32.mrf.mxu0
    %v1977 = vadd.f32 %v1903, %v1976
    %v1978 = vpop.f32.mrf.mxu0
    %1979 = vmatprep.mubr.f32.mxu0 0.0
    %1980 = vmatmul.mubr.f32.gmra.mxu0 %v1908
    %v1981 = vpop.f32.mrf.mxu0
    %v1982 = vadd.f32 %v1903, %v1981
    %v1983 = vpop.f32.mrf.mxu0
    %1984 = vdwg.mxu0
    %1986 = vrot.lane.b32.xlu0 %v1977, 96
    %v1987 = vpop.permute.xlu0 %1986
    %v1988 = vsel %vm153, %v1977, 0
    %v1990 = vsel %vm153, %v1987, 0
    %1992 = vmatprep.subr.mxu0 0.0
    %1993 = vmatpush1.xpose.msra.mxu0 0.0
    %1994 = vmatprep.subr.mxu0 0.0
    %1995 = vmatpush1.xpose.msra.mxu0 0.0
    %1996 = vmatprep.subr.mxu0 0.0
    %1997 = vmatpush1.xpose.msra.mxu0 0.0
    %1998 = vmatprep.subr.mxu0 0.0
    %1999 = vmatpush1.xpose.msra.mxu0 0.0
    %2000 = vmatprep.subr.mxu0 0.0
    %2001 = vmatpush1.xpose.msra.mxu0 0.0
    %2002 = vmatprep.subr.mxu0 0.0
    %2003 = vmatpush1.xpose.msra.mxu0 0.0
    %2004 = vmatprep.subr.mxu0 0.0
    %2005 = vmatpush1.xpose.msra.mxu0 0.0
    %2006 = vmatprep.subr.mxu0 0.0
    %2007 = vmatpush1.xpose.msra.mxu0 0.0
    %2008 = vmatprep.subr.mxu0 0.0
    %2009 = vmatpush1.xpose.msra.mxu0 0.0
    %2010 = vmatprep.subr.mxu0 0.0
    %2011 = vmatpush1.xpose.msra.mxu0 0.0
    %2012 = vmatprep.subr.mxu0 0.0
    %2013 = vmatpush1.xpose.msra.mxu0 0.0
    %2014 = vmatprep.subr.mxu0 0.0
    %2015 = vmatpush1.xpose.msra.mxu0 0.0
    %2016 = vmatprep.subr.mxu0 0.0
    %2017 = vmatpush1.xpose.msra.mxu0 0.0
    %2018 = vmatprep.subr.mxu0 0.0
    %2019 = vmatpush1.xpose.msra.mxu0 0.0
    %2020 = vmatprep.subr.mxu0 0.0
    %2021 = vmatpush1.xpose.msra.mxu0 0.0
    %2022 = vmatprep.subr.mxu0 0.0
    %2023 = vmatpush1.xpose.msra.mxu0 %v1990
    %2024 = vmatprep.subr.mxu0 0.0
    %2025 = vmatpush2.xpose.msra.mxu0 0.0
    %2026 = vmatprep.subr.mxu0 0.0
    %2027 = vmatpush2.xpose.msra.mxu0 0.0
    %2028 = vmatprep.subr.mxu0 0.0
    %2029 = vmatpush2.xpose.msra.mxu0 0.0
    %2030 = vmatprep.subr.mxu0 0.0
    %2031 = vmatpush2.xpose.msra.mxu0 0.0
    %2032 = vmatprep.subr.mxu0 0.0
    %2033 = vmatpush2.xpose.msra.mxu0 0.0
    %2034 = vmatprep.subr.mxu0 0.0
    %2035 = vmatpush2.xpose.msra.mxu0 0.0
    %2036 = vmatprep.subr.mxu0 0.0
    %2037 = vmatpush2.xpose.msra.mxu0 0.0
    %2038 = vmatprep.subr.mxu0 0.0
    %2039 = vmatpush2.xpose.msra.mxu0 0.0
    %2040 = vmatprep.subr.mxu0 0.0
    %2041 = vmatpush2.xpose.msra.mxu0 0.0
    %2042 = vmatprep.subr.mxu0 0.0
    %2043 = vmatpush2.xpose.msra.mxu0 0.0
    %2044 = vmatprep.subr.mxu0 0.0
    %2045 = vmatpush2.xpose.msra.mxu0 0.0
    %2046 = vmatprep.subr.mxu0 0.0
    %2047 = vmatpush2.xpose.msra.mxu0 0.0
    %2048 = vmatprep.subr.mxu0 0.0
    %2049 = vmatpush2.xpose.msra.mxu0 0.0
    %2050 = vmatprep.subr.mxu0 0.0
    %2051 = vmatpush2.xpose.msra.mxu0 0.0
    %2052 = vmatprep.subr.mxu0 0.0
    %2053 = vmatpush2.xpose.msra.mxu0 0.0
    %2054 = vmatprep.subr.mxu0 0.0
    %2055 = vmatpush2.xpose.msra.mxu0 0.0
    %2056 = vmatprep.mubr.f32.mxu0 0.0
    %2057 = vmatmul.mubr.f32.gmra.mxu0 %v1988
    %v2058 = vpop.f32.mrf.mxu0
    %v2059 = vadd.f32 0.0, %v2058
    %v2060 = vpop.f32.mrf.mxu0
    %2061 = vdwg.mxu0
    %2063 = vrot.lane.b32.xlu0 %v1982, 96
    %v2064 = vpop.permute.xlu0 %2063
    %v2065 = vsel %vm153, %v1982, 0
    %v2067 = vsel %vm153, %v2064, 0
    %2069 = vmatprep.subr.mxu0 0.0
    %2070 = vmatpush1.xpose.msra.mxu0 0.0
    %2071 = vmatprep.subr.mxu0 0.0
    %2072 = vmatpush1.xpose.msra.mxu0 0.0
    %2073 = vmatprep.subr.mxu0 0.0
    %2074 = vmatpush1.xpose.msra.mxu0 0.0
    %2075 = vmatprep.subr.mxu0 0.0
    %2076 = vmatpush1.xpose.msra.mxu0 0.0
    %2077 = vmatprep.subr.mxu0 0.0
    %2078 = vmatpush1.xpose.msra.mxu0 0.0
    %2079 = vmatprep.subr.mxu0 0.0
    %2080 = vmatpush1.xpose.msra.mxu0 0.0
    %2081 = vmatprep.subr.mxu0 0.0
    %2082 = vmatpush1.xpose.msra.mxu0 0.0
    %2083 = vmatprep.subr.mxu0 0.0
    %2084 = vmatpush1.xpose.msra.mxu0 0.0
    %2085 = vmatprep.subr.mxu0 0.0
    %2086 = vmatpush1.xpose.msra.mxu0 0.0
    %2087 = vmatprep.subr.mxu0 0.0
    %2088 = vmatpush1.xpose.msra.mxu0 0.0
    %2089 = vmatprep.subr.mxu0 0.0
    %2090 = vmatpush1.xpose.msra.mxu0 0.0
    %2091 = vmatprep.subr.mxu0 0.0
    %2092 = vmatpush1.xpose.msra.mxu0 0.0
    %2093 = vmatprep.subr.mxu0 0.0
    %2094 = vmatpush1.xpose.msra.mxu0 0.0
    %2095 = vmatprep.subr.mxu0 0.0
    %2096 = vmatpush1.xpose.msra.mxu0 0.0
    %2097 = vmatprep.subr.mxu0 0.0
    %2098 = vmatpush1.xpose.msra.mxu0 0.0
    %2099 = vmatprep.subr.mxu0 0.0
    %2100 = vmatpush1.xpose.msra.mxu0 %v2067
    %2101 = vmatprep.subr.mxu0 0.0
    %2102 = vmatpush2.xpose.msra.mxu0 0.0
    %2103 = vmatprep.subr.mxu0 0.0
    %2104 = vmatpush2.xpose.msra.mxu0 0.0
    %2105 = vmatprep.subr.mxu0 0.0
    %2106 = vmatpush2.xpose.msra.mxu0 0.0
    %2107 = vmatprep.subr.mxu0 0.0
    %2108 = vmatpush2.xpose.msra.mxu0 0.0
    %2109 = vmatprep.subr.mxu0 0.0
    %2110 = vmatpush2.xpose.msra.mxu0 0.0
    %2111 = vmatprep.subr.mxu0 0.0
    %2112 = vmatpush2.xpose.msra.mxu0 0.0
    %2113 = vmatprep.subr.mxu0 0.0
    %2114 = vmatpush2.xpose.msra.mxu0 0.0
    %2115 = vmatprep.subr.mxu0 0.0
    %2116 = vmatpush2.xpose.msra.mxu0 0.0
    %2117 = vmatprep.subr.mxu0 0.0
    %2118 = vmatpush2.xpose.msra.mxu0 0.0
    %2119 = vmatprep.subr.mxu0 0.0
    %2120 = vmatpush2.xpose.msra.mxu0 0.0
    %2121 = vmatprep.subr.mxu0 0.0
    %2122 = vmatpush2.xpose.msra.mxu0 0.0
    %2123 = vmatprep.subr.mxu0 0.0
    %2124 = vmatpush2.xpose.msra.mxu0 0.0
    %2125 = vmatprep.subr.mxu0 0.0
    %2126 = vmatpush2.xpose.msra.mxu0 0.0
    %2127 = vmatprep.subr.mxu0 0.0
    %2128 = vmatpush2.xpose.msra.mxu0 0.0
    %2129 = vmatprep.subr.mxu0 0.0
    %2130 = vmatpush2.xpose.msra.mxu0 0.0
    %2131 = vmatprep.subr.mxu0 0.0
    %2132 = vmatpush2.xpose.msra.mxu0 0.0
    %2133 = vmatprep.mubr.f32.mxu0 0.0
    %2134 = vmatmul.mubr.f32.gmra.mxu0 %v2065
    %v2135 = vpop.f32.mrf.mxu0
    %v2136 = vadd.f32 0.0, %v2135
    %v2137 = vpop.f32.mrf.mxu0
    %2138 = vdwg.mxu0
    %v2139 = vmul.f32 %v2059, 0.35355338
    %v2140 = vmul.f32 %v2136, 0.35355338
    %v2141 = vadd.f32 %v2139, %v312
    %v2142 = vadd.f32 %v2140, %v316
    %v2143 = vsel %vm153, %v2141, -inf
    %2144 = vmax.xlane.f32.xlu0 %v2143
    %v2145 = vpop.xlane.xlu0 %2144
    %v2146 = vsel %vm153, %v2142, -inf
    %2147 = vmax.xlane.f32.xlu0 %v2146
    %v2148 = vpop.xlane.xlu0 %2147
    %v2149 = vsub.f32 %v2141, %v2145
    %v2150 = vsub.f32 %v2142, %v2148
    %v2151 = vmul.f32 %v2149, 1.442695
    %v2152 = vpow.pop %v2151
    %v2153 = vmul.f32 %v2150, 1.442695
    %v2154 = vpow.pop %v2153
    %v2155 = vsel %vm153, %v2152, 0.0
    %2156 = vadd.xlane.f32.xlu0 %v2155
    %v2157 = vpop.xlane.xlu0 %2156
    %v2158 = vsel %vm153, %v2154, 0.0
    %2159 = vadd.xlane.f32.xlu0 %v2158
    %v2160 = vpop.xlane.xlu0 %2159
    %v2161 = vrcp.pop %v2157
    %v2162 = vmul.f32 %v2152, %v2161
    %v2163 = vrcp.pop %v2160
    %v2164 = vmul.f32 %v2154, %v2163
    %2165 = vrot.lane.b32.xlu0 %v1977, 64
    %v2166 = vpop.permute.xlu0 %2165
    %v2169 = vsel %vm153, %v2162, 0
    %2171 = vmatprep.subr.mxu0 0.0
    %2172 = vmatpush1.msra.mxu0 0.0
    %2173 = vmatprep.subr.mxu0 0.0
    %2174 = vmatpush1.msra.mxu0 0.0
    %2175 = vmatprep.subr.mxu0 0.0
    %2176 = vmatpush1.msra.mxu0 0.0
    %2177 = vmatprep.subr.mxu0 0.0
    %2178 = vmatpush1.msra.mxu0 0.0
    %2179 = vmatprep.subr.mxu0 0.0
    %2180 = vmatpush1.msra.mxu0 0.0
    %2181 = vmatprep.subr.mxu0 0.0
    %2182 = vmatpush1.msra.mxu0 0.0
    %2183 = vmatprep.subr.mxu0 0.0
    %2184 = vmatpush1.msra.mxu0 0.0
    %2185 = vmatprep.subr.mxu0 0.0
    %2186 = vmatpush1.msra.mxu0 0.0
    %2187 = vmatprep.subr.mxu0 0.0
    %2188 = vmatpush1.msra.mxu0 0.0
    %2189 = vmatprep.subr.mxu0 0.0
    %2190 = vmatpush1.msra.mxu0 0.0
    %2191 = vmatprep.subr.mxu0 0.0
    %2192 = vmatpush1.msra.mxu0 0.0
    %2193 = vmatprep.subr.mxu0 0.0
    %2194 = vmatpush1.msra.mxu0 0.0
    %2195 = vmatprep.subr.mxu0 0.0
    %2196 = vmatpush1.msra.mxu0 0.0
    %2197 = vmatprep.subr.mxu0 0.0
    %2198 = vmatpush1.msra.mxu0 0.0
    %2199 = vmatprep.subr.mxu0 0.0
    %2200 = vmatpush1.msra.mxu0 0.0
    %2201 = vmatprep.subr.mxu0 0.0
    %2202 = vmatpush1.msra.mxu0 %v2166
    %2203 = vmatprep.subr.mxu0 0.0
    %2204 = vmatpush2.msra.mxu0 0.0
    %2205 = vmatprep.subr.mxu0 0.0
    %2206 = vmatpush2.msra.mxu0 0.0
    %2207 = vmatprep.subr.mxu0 0.0
    %2208 = vmatpush2.msra.mxu0 0.0
    %2209 = vmatprep.subr.mxu0 0.0
    %2210 = vmatpush2.msra.mxu0 0.0
    %2211 = vmatprep.subr.mxu0 0.0
    %2212 = vmatpush2.msra.mxu0 0.0
    %2213 = vmatprep.subr.mxu0 0.0
    %2214 = vmatpush2.msra.mxu0 0.0
    %2215 = vmatprep.subr.mxu0 0.0
    %2216 = vmatpush2.msra.mxu0 0.0
    %2217 = vmatprep.subr.mxu0 0.0
    %2218 = vmatpush2.msra.mxu0 0.0
    %2219 = vmatprep.subr.mxu0 0.0
    %2220 = vmatpush2.msra.mxu0 0.0
    %2221 = vmatprep.subr.mxu0 0.0
    %2222 = vmatpush2.msra.mxu0 0.0
    %2223 = vmatprep.subr.mxu0 0.0
    %2224 = vmatpush2.msra.mxu0 0.0
    %2225 = vmatprep.subr.mxu0 0.0
    %2226 = vmatpush2.msra.mxu0 0.0
    %2227 = vmatprep.subr.mxu0 0.0
    %2228 = vmatpush2.msra.mxu0 0.0
    %2229 = vmatprep.subr.mxu0 0.0
    %2230 = vmatpush2.msra.mxu0 0.0
    %2231 = vmatprep.subr.mxu0 0.0
    %2232 = vmatpush2.msra.mxu0 0.0
    %2233 = vmatprep.subr.mxu0 0.0
    %2234 = vmatpush2.msra.mxu0 0.0
    %2235 = vmatprep.mubr.f32.mxu0 0.0
    %2236 = vmatmul.mubr.f32.gmra.mxu0 %v2169
    %v2237 = vpop.f32.mrf.mxu0
    %v2238 = vadd.f32 0.0, %v2237
    %v2239 = vpop.f32.mrf.mxu0
    %2240 = vdwg.mxu0
    %2241 = vrot.lane.b32.xlu0 %v1982, 64
    %v2242 = vpop.permute.xlu0 %2241
    %v2245 = vsel %vm153, %v2164, 0
    %2247 = vmatprep.subr.mxu0 0.0
    %2248 = vmatpush1.msra.mxu0 0.0
    %2249 = vmatprep.subr.mxu0 0.0
    %2250 = vmatpush1.msra.mxu0 0.0
    %2251 = vmatprep.subr.mxu0 0.0
    %2252 = vmatpush1.msra.mxu0 0.0
    %2253 = vmatprep.subr.mxu0 0.0
    %2254 = vmatpush1.msra.mxu0 0.0
    %2255 = vmatprep.subr.mxu0 0.0
    %2256 = vmatpush1.msra.mxu0 0.0
    %2257 = vmatprep.subr.mxu0 0.0
    %2258 = vmatpush1.msra.mxu0 0.0
    %2259 = vmatprep.subr.mxu0 0.0
    %2260 = vmatpush1.msra.mxu0 0.0
    %2261 = vmatprep.subr.mxu0 0.0
    %2262 = vmatpush1.msra.mxu0 0.0
    %2263 = vmatprep.subr.mxu0 0.0
    %2264 = vmatpush1.msra.mxu0 0.0
    %2265 = vmatprep.subr.mxu0 0.0
    %2266 = vmatpush1.msra.mxu0 0.0
    %2267 = vmatprep.subr.mxu0 0.0
    %2268 = vmatpush1.msra.mxu0 0.0
    %2269 = vmatprep.subr.mxu0 0.0
    %2270 = vmatpush1.msra.mxu0 0.0
    %2271 = vmatprep.subr.mxu0 0.0
    %2272 = vmatpush1.msra.mxu0 0.0
    %2273 = vmatprep.subr.mxu0 0.0
    %2274 = vmatpush1.msra.mxu0 0.0
    %2275 = vmatprep.subr.mxu0 0.0
    %2276 = vmatpush1.msra.mxu0 0.0
    %2277 = vmatprep.subr.mxu0 0.0
    %2278 = vmatpush1.msra.mxu0 %v2242
    %2279 = vmatprep.subr.mxu0 0.0
    %2280 = vmatpush2.msra.mxu0 0.0
    %2281 = vmatprep.subr.mxu0 0.0
    %2282 = vmatpush2.msra.mxu0 0.0
    %2283 = vmatprep.subr.mxu0 0.0
    %2284 = vmatpush2.msra.mxu0 0.0
    %2285 = vmatprep.subr.mxu0 0.0
    %2286 = vmatpush2.msra.mxu0 0.0
    %2287 = vmatprep.subr.mxu0 0.0
    %2288 = vmatpush2.msra.mxu0 0.0
    %2289 = vmatprep.subr.mxu0 0.0
    %2290 = vmatpush2.msra.mxu0 0.0
    %2291 = vmatprep.subr.mxu0 0.0
    %2292 = vmatpush2.msra.mxu0 0.0
    %2293 = vmatprep.subr.mxu0 0.0
    %2294 = vmatpush2.msra.mxu0 0.0
    %2295 = vmatprep.subr.mxu0 0.0
    %2296 = vmatpush2.msra.mxu0 0.0
    %2297 = vmatprep.subr.mxu0 0.0
    %2298 = vmatpush2.msra.mxu0 0.0
    %2299 = vmatprep.subr.mxu0 0.0
    %2300 = vmatpush2.msra.mxu0 0.0
    %2301 = vmatprep.subr.mxu0 0.0
    %2302 = vmatpush2.msra.mxu0 0.0
    %2303 = vmatprep.subr.mxu0 0.0
    %2304 = vmatpush2.msra.mxu0 0.0
    %2305 = vmatprep.subr.mxu0 0.0
    %2306 = vmatpush2.msra.mxu0 0.0
    %2307 = vmatprep.subr.mxu0 0.0
    %2308 = vmatpush2.msra.mxu0 0.0
    %2309 = vmatprep.subr.mxu0 0.0
    %2310 = vmatpush2.msra.mxu0 0.0
    %2311 = vmatprep.mubr.f32.mxu0 0.0
    %2312 = vmatmul.mubr.f32.gmra.mxu0 %v2245
    %v2313 = vpop.f32.mrf.mxu0
    %v2314 = vadd.f32 0.0, %v2313
    %v2315 = vpop.f32.mrf.mxu0
    %2316 = vdwg.mxu0
    %2317 = vrot.lane.b32.xlu0 %v1977, 120
    %v2318 = vpop.permute.xlu0 %2317
    %2319 = vrot.lane.b32.xlu0 %v1977, 88
    %v2320 = vpop.permute.xlu0 %2319
    %v2321 = vsel %vm153, %v2318, 0
    %v2323 = vsel %vm153, %v2320, 0
    %2325 = vmatprep.subr.mxu0 0.0
    %2326 = vmatpush1.xpose.msra.mxu0 0.0
    %2327 = vmatprep.subr.mxu0 0.0
    %2328 = vmatpush1.xpose.msra.mxu0 0.0
    %2329 = vmatprep.subr.mxu0 0.0
    %2330 = vmatpush1.xpose.msra.mxu0 0.0
    %2331 = vmatprep.subr.mxu0 0.0
    %2332 = vmatpush1.xpose.msra.mxu0 0.0
    %2333 = vmatprep.subr.mxu0 0.0
    %2334 = vmatpush1.xpose.msra.mxu0 0.0
    %2335 = vmatprep.subr.mxu0 0.0
    %2336 = vmatpush1.xpose.msra.mxu0 0.0
    %2337 = vmatprep.subr.mxu0 0.0
    %2338 = vmatpush1.xpose.msra.mxu0 0.0
    %2339 = vmatprep.subr.mxu0 0.0
    %2340 = vmatpush1.xpose.msra.mxu0 0.0
    %2341 = vmatprep.subr.mxu0 0.0
    %2342 = vmatpush1.xpose.msra.mxu0 0.0
    %2343 = vmatprep.subr.mxu0 0.0
    %2344 = vmatpush1.xpose.msra.mxu0 0.0
    %2345 = vmatprep.subr.mxu0 0.0
    %2346 = vmatpush1.xpose.msra.mxu0 0.0
    %2347 = vmatprep.subr.mxu0 0.0
    %2348 = vmatpush1.xpose.msra.mxu0 0.0
    %2349 = vmatprep.subr.mxu0 0.0
    %2350 = vmatpush1.xpose.msra.mxu0 0.0
    %2351 = vmatprep.subr.mxu0 0.0
    %2352 = vmatpush1.xpose.msra.mxu0 0.0
    %2353 = vmatprep.subr.mxu0 0.0
    %2354 = vmatpush1.xpose.msra.mxu0 0.0
    %2355 = vmatprep.subr.mxu0 0.0
    %2356 = vmatpush1.xpose.msra.mxu0 %v2323
    %2357 = vmatprep.subr.mxu0 0.0
    %2358 = vmatpush2.xpose.msra.mxu0 0.0
    %2359 = vmatprep.subr.mxu0 0.0
    %2360 = vmatpush2.xpose.msra.mxu0 0.0
    %2361 = vmatprep.subr.mxu0 0.0
    %2362 = vmatpush2.xpose.msra.mxu0 0.0
    %2363 = vmatprep.subr.mxu0 0.0
    %2364 = vmatpush2.xpose.msra.mxu0 0.0
    %2365 = vmatprep.subr.mxu0 0.0
    %2366 = vmatpush2.xpose.msra.mxu0 0.0
    %2367 = vmatprep.subr.mxu0 0.0
    %2368 = vmatpush2.xpose.msra.mxu0 0.0
    %2369 = vmatprep.subr.mxu0 0.0
    %2370 = vmatpush2.xpose.msra.mxu0 0.0
    %2371 = vmatprep.subr.mxu0 0.0
    %2372 = vmatpush2.xpose.msra.mxu0 0.0
    %2373 = vmatprep.subr.mxu0 0.0
    %2374 = vmatpush2.xpose.msra.mxu0 0.0
    %2375 = vmatprep.subr.mxu0 0.0
    %2376 = vmatpush2.xpose.msra.mxu0 0.0
    %2377 = vmatprep.subr.mxu0 0.0
    %2378 = vmatpush2.xpose.msra.mxu0 0.0
    %2379 = vmatprep.subr.mxu0 0.0
    %2380 = vmatpush2.xpose.msra.mxu0 0.0
    %2381 = vmatprep.subr.mxu0 0.0
    %2382 = vmatpush2.xpose.msra.mxu0 0.0
    %2383 = vmatprep.subr.mxu0 0.0
    %2384 = vmatpush2.xpose.msra.mxu0 0.0
    %2385 = vmatprep.subr.mxu0 0.0
    %2386 = vmatpush2.xpose.msra.mxu0 0.0
    %2387 = vmatprep.subr.mxu0 0.0
    %2388 = vmatpush2.xpose.msra.mxu0 0.0
    %2389 = vmatprep.mubr.f32.mxu0 0.0
    %2390 = vmatmul.mubr.f32.gmra.mxu0 %v2321
    %v2391 = vpop.f32.mrf.mxu0
    %v2392 = vadd.f32 0.0, %v2391
    %v2393 = vpop.f32.mrf.mxu0
    %2394 = vdwg.mxu0
    %2395 = vrot.lane.b32.xlu0 %v1982, 120
    %v2396 = vpop.permute.xlu0 %2395
    %2397 = vrot.lane.b32.xlu0 %v1982, 88
    %v2398 = vpop.permute.xlu0 %2397
    %v2399 = vsel %vm153, %v2396, 0
    %v2401 = vsel %vm153, %v2398, 0
    %2403 = vmatprep.subr.mxu0 0.0
    %2404 = vmatpush1.xpose.msra.mxu0 0.0
    %2405 = vmatprep.subr.mxu0 0.0
    %2406 = vmatpush1.xpose.msra.mxu0 0.0
    %2407 = vmatprep.subr.mxu0 0.0
    %2408 = vmatpush1.xpose.msra.mxu0 0.0
    %2409 = vmatprep.subr.mxu0 0.0
    %2410 = vmatpush1.xpose.msra.mxu0 0.0
    %2411 = vmatprep.subr.mxu0 0.0
    %2412 = vmatpush1.xpose.msra.mxu0 0.0
    %2413 = vmatprep.subr.mxu0 0.0
    %2414 = vmatpush1.xpose.msra.mxu0 0.0
    %2415 = vmatprep.subr.mxu0 0.0
    %2416 = vmatpush1.xpose.msra.mxu0 0.0
    %2417 = vmatprep.subr.mxu0 0.0
    %2418 = vmatpush1.xpose.msra.mxu0 0.0
    %2419 = vmatprep.subr.mxu0 0.0
    %2420 = vmatpush1.xpose.msra.mxu0 0.0
    %2421 = vmatprep.subr.mxu0 0.0
    %2422 = vmatpush1.xpose.msra.mxu0 0.0
    %2423 = vmatprep.subr.mxu0 0.0
    %2424 = vmatpush1.xpose.msra.mxu0 0.0
    %2425 = vmatprep.subr.mxu0 0.0
    %2426 = vmatpush1.xpose.msra.mxu0 0.0
    %2427 = vmatprep.subr.mxu0 0.0
    %2428 = vmatpush1.xpose.msra.mxu0 0.0
    %2429 = vmatprep.subr.mxu0 0.0
    %2430 = vmatpush1.xpose.msra.mxu0 0.0
    %2431 = vmatprep.subr.mxu0 0.0
    %2432 = vmatpush1.xpose.msra.mxu0 0.0
    %2433 = vmatprep.subr.mxu0 0.0
    %2434 = vmatpush1.xpose.msra.mxu0 %v2401
    %2435 = vmatprep.subr.mxu0 0.0
    %2436 = vmatpush2.xpose.msra.mxu0 0.0
    %2437 = vmatprep.subr.mxu0 0.0
    %2438 = vmatpush2.xpose.msra.mxu0 0.0
    %2439 = vmatprep.subr.mxu0 0.0
    %2440 = vmatpush2.xpose.msra.mxu0 0.0
    %2441 = vmatprep.subr.mxu0 0.0
    %2442 = vmatpush2.xpose.msra.mxu0 0.0
    %2443 = vmatprep.subr.mxu0 0.0
    %2444 = vmatpush2.xpose.msra.mxu0 0.0
    %2445 = vmatprep.subr.mxu0 0.0
    %2446 = vmatpush2.xpose.msra.mxu0 0.0
    %2447 = vmatprep.subr.mxu0 0.0
    %2448 = vmatpush2.xpose.msra.mxu0 0.0
    %2449 = vmatprep.subr.mxu0 0.0
    %2450 = vmatpush2.xpose.msra.mxu0 0.0
    %2451 = vmatprep.subr.mxu0 0.0
    %2452 = vmatpush2.xpose.msra.mxu0 0.0
    %2453 = vmatprep.subr.mxu0 0.0
    %2454 = vmatpush2.xpose.msra.mxu0 0.0
    %2455 = vmatprep.subr.mxu0 0.0
    %2456 = vmatpush2.xpose.msra.mxu0 0.0
    %2457 = vmatprep.subr.mxu0 0.0
    %2458 = vmatpush2.xpose.msra.mxu0 0.0
    %2459 = vmatprep.subr.mxu0 0.0
    %2460 = vmatpush2.xpose.msra.mxu0 0.0
    %2461 = vmatprep.subr.mxu0 0.0
    %2462 = vmatpush2.xpose.msra.mxu0 0.0
    %2463 = vmatprep.subr.mxu0 0.0
    %2464 = vmatpush2.xpose.msra.mxu0 0.0
    %2465 = vmatprep.subr.mxu0 0.0
    %2466 = vmatpush2.xpose.msra.mxu0 0.0
    %2467 = vmatprep.mubr.f32.mxu0 0.0
    %2468 = vmatmul.mubr.f32.gmra.mxu0 %v2399
    %v2469 = vpop.f32.mrf.mxu0
    %v2470 = vadd.f32 0.0, %v2469
    %v2471 = vpop.f32.mrf.mxu0
    %2472 = vdwg.mxu0
    %v2473 = vmul.f32 %v2392, 0.35355338
    %v2474 = vmul.f32 %v2470, 0.35355338
    %v2475 = vadd.f32 %v2473, %v312
    %v2476 = vadd.f32 %v2474, %v316
    %v2477 = vsel %vm153, %v2475, -inf
    %2478 = vmax.xlane.f32.xlu0 %v2477
    %v2479 = vpop.xlane.xlu0 %2478
    %v2480 = vsel %vm153, %v2476, -inf
    %2481 = vmax.xlane.f32.xlu0 %v2480
    %v2482 = vpop.xlane.xlu0 %2481
    %v2483 = vsub.f32 %v2475, %v2479
    %v2484 = vsub.f32 %v2476, %v2482
    %v2485 = vmul.f32 %v2483, 1.442695
    %v2486 = vpow.pop %v2485
    %v2487 = vmul.f32 %v2484, 1.442695
    %v2488 = vpow.pop %v2487
    %v2489 = vsel %vm153, %v2486, 0.0
    %2490 = vadd.xlane.f32.xlu0 %v2489
    %v2491 = vpop.xlane.xlu0 %2490
    %v2492 = vsel %vm153, %v2488, 0.0
    %2493 = vadd.xlane.f32.xlu0 %v2492
    %v2494 = vpop.xlane.xlu0 %2493
    %v2495 = vrcp.pop %v2491
    %v2496 = vmul.f32 %v2486, %v2495
    %v2497 = vrcp.pop %v2494
    %v2498 = vmul.f32 %v2488, %v2497
    %2499 = vrot.lane.b32.xlu0 %v1977, 56
    %v2500 = vpop.permute.xlu0 %2499
    %v2503 = vsel %vm153, %v2496, 0
    %2505 = vmatprep.subr.mxu0 0.0
    %2506 = vmatpush1.msra.mxu0 0.0
    %2507 = vmatprep.subr.mxu0 0.0
    %2508 = vmatpush1.msra.mxu0 0.0
    %2509 = vmatprep.subr.mxu0 0.0
    %2510 = vmatpush1.msra.mxu0 0.0
    %2511 = vmatprep.subr.mxu0 0.0
    %2512 = vmatpush1.msra.mxu0 0.0
    %2513 = vmatprep.subr.mxu0 0.0
    %2514 = vmatpush1.msra.mxu0 0.0
    %2515 = vmatprep.subr.mxu0 0.0
    %2516 = vmatpush1.msra.mxu0 0.0
    %2517 = vmatprep.subr.mxu0 0.0
    %2518 = vmatpush1.msra.mxu0 0.0
    %2519 = vmatprep.subr.mxu0 0.0
    %2520 = vmatpush1.msra.mxu0 0.0
    %2521 = vmatprep.subr.mxu0 0.0
    %2522 = vmatpush1.msra.mxu0 0.0
    %2523 = vmatprep.subr.mxu0 0.0
    %2524 = vmatpush1.msra.mxu0 0.0
    %2525 = vmatprep.subr.mxu0 0.0
    %2526 = vmatpush1.msra.mxu0 0.0
    %2527 = vmatprep.subr.mxu0 0.0
    %2528 = vmatpush1.msra.mxu0 0.0
    %2529 = vmatprep.subr.mxu0 0.0
    %2530 = vmatpush1.msra.mxu0 0.0
    %2531 = vmatprep.subr.mxu0 0.0
    %2532 = vmatpush1.msra.mxu0 0.0
    %2533 = vmatprep.subr.mxu0 0.0
    %2534 = vmatpush1.msra.mxu0 0.0
    %2535 = vmatprep.subr.mxu0 0.0
    %2536 = vmatpush1.msra.mxu0 %v2500
    %2537 = vmatprep.subr.mxu0 0.0
    %2538 = vmatpush2.msra.mxu0 0.0
    %2539 = vmatprep.subr.mxu0 0.0
    %2540 = vmatpush2.msra.mxu0 0.0
    %2541 = vmatprep.subr.mxu0 0.0
    %2542 = vmatpush2.msra.mxu0 0.0
    %2543 = vmatprep.subr.mxu0 0.0
    %2544 = vmatpush2.msra.mxu0 0.0
    %2545 = vmatprep.subr.mxu0 0.0
    %2546 = vmatpush2.msra.mxu0 0.0
    %2547 = vmatprep.subr.mxu0 0.0
    %2548 = vmatpush2.msra.mxu0 0.0
    %2549 = vmatprep.subr.mxu0 0.0
    %2550 = vmatpush2.msra.mxu0 0.0
    %2551 = vmatprep.subr.mxu0 0.0
    %2552 = vmatpush2.msra.mxu0 0.0
    %2553 = vmatprep.subr.mxu0 0.0
    %2554 = vmatpush2.msra.mxu0 0.0
    %2555 = vmatprep.subr.mxu0 0.0
    %2556 = vmatpush2.msra.mxu0 0.0
    %2557 = vmatprep.subr.mxu0 0.0
    %2558 = vmatpush2.msra.mxu0 0.0
    %2559 = vmatprep.subr.mxu0 0.0
    %2560 = vmatpush2.msra.mxu0 0.0
    %2561 = vmatprep.subr.mxu0 0.0
    %2562 = vmatpush2.msra.mxu0 0.0
    %2563 = vmatprep.subr.mxu0 0.0
    %2564 = vmatpush2.msra.mxu0 0.0
    %2565 = vmatprep.subr.mxu0 0.0
    %2566 = vmatpush2.msra.mxu0 0.0
    %2567 = vmatprep.subr.mxu0 0.0
    %2568 = vmatpush2.msra.mxu0 0.0
    %2569 = vmatprep.mubr.f32.mxu0 0.0
    %2570 = vmatmul.mubr.f32.gmra.mxu0 %v2503
    %v2571 = vpop.f32.mrf.mxu0
    %v2572 = vadd.f32 0.0, %v2571
    %v2573 = vpop.f32.mrf.mxu0
    %2574 = vdwg.mxu0
    %2575 = vrot.lane.b32.xlu0 %v1982, 56
    %v2576 = vpop.permute.xlu0 %2575
    %v2579 = vsel %vm153, %v2498, 0
    %2581 = vmatprep.subr.mxu0 0.0
    %2582 = vmatpush1.msra.mxu0 0.0
    %2583 = vmatprep.subr.mxu0 0.0
    %2584 = vmatpush1.msra.mxu0 0.0
    %2585 = vmatprep.subr.mxu0 0.0
    %2586 = vmatpush1.msra.mxu0 0.0
    %2587 = vmatprep.subr.mxu0 0.0
    %2588 = vmatpush1.msra.mxu0 0.0
    %2589 = vmatprep.subr.mxu0 0.0
    %2590 = vmatpush1.msra.mxu0 0.0
    %2591 = vmatprep.subr.mxu0 0.0
    %2592 = vmatpush1.msra.mxu0 0.0
    %2593 = vmatprep.subr.mxu0 0.0
    %2594 = vmatpush1.msra.mxu0 0.0
    %2595 = vmatprep.subr.mxu0 0.0
    %2596 = vmatpush1.msra.mxu0 0.0
    %2597 = vmatprep.subr.mxu0 0.0
    %2598 = vmatpush1.msra.mxu0 0.0
    %2599 = vmatprep.subr.mxu0 0.0
    %2600 = vmatpush1.msra.mxu0 0.0
    %2601 = vmatprep.subr.mxu0 0.0
    %2602 = vmatpush1.msra.mxu0 0.0
    %2603 = vmatprep.subr.mxu0 0.0
    %2604 = vmatpush1.msra.mxu0 0.0
    %2605 = vmatprep.subr.mxu0 0.0
    %2606 = vmatpush1.msra.mxu0 0.0
    %2607 = vmatprep.subr.mxu0 0.0
    %2608 = vmatpush1.msra.mxu0 0.0
    %2609 = vmatprep.subr.mxu0 0.0
    %2610 = vmatpush1.msra.mxu0 0.0
    %2611 = vmatprep.subr.mxu0 0.0
    %2612 = vmatpush1.msra.mxu0 %v2576
    %2613 = vmatprep.subr.mxu0 0.0
    %2614 = vmatpush2.msra.mxu0 0.0
    %2615 = vmatprep.subr.mxu0 0.0
    %2616 = vmatpush2.msra.mxu0 0.0
    %2617 = vmatprep.subr.mxu0 0.0
    %2618 = vmatpush2.msra.mxu0 0.0
    %2619 = vmatprep.subr.mxu0 0.0
    %2620 = vmatpush2.msra.mxu0 0.0
    %2621 = vmatprep.subr.mxu0 0.0
    %2622 = vmatpush2.msra.mxu0 0.0
    %2623 = vmatprep.subr.mxu0 0.0
    %2624 = vmatpush2.msra.mxu0 0.0
    %2625 = vmatprep.subr.mxu0 0.0
    %2626 = vmatpush2.msra.mxu0 0.0
    %2627 = vmatprep.subr.mxu0 0.0
    %2628 = vmatpush2.msra.mxu0 0.0
    %2629 = vmatprep.subr.mxu0 0.0
    %2630 = vmatpush2.msra.mxu0 0.0
    %2631 = vmatprep.subr.mxu0 0.0
    %2632 = vmatpush2.msra.mxu0 0.0
    %2633 = vmatprep.subr.mxu0 0.0
    %2634 = vmatpush2.msra.mxu0 0.0
    %2635 = vmatprep.subr.mxu0 0.0
    %2636 = vmatpush2.msra.mxu0 0.0
    %2637 = vmatprep.subr.mxu0 0.0
    %2638 = vmatpush2.msra.mxu0 0.0
    %2639 = vmatprep.subr.mxu0 0.0
    %2640 = vmatpush2.msra.mxu0 0.0
    %2641 = vmatprep.subr.mxu0 0.0
    %2642 = vmatpush2.msra.mxu0 0.0
    %2643 = vmatprep.subr.mxu0 0.0
    %2644 = vmatpush2.msra.mxu0 0.0
    %2645 = vmatprep.mubr.f32.mxu0 0.0
    %2646 = vmatmul.mubr.f32.gmra.mxu0 %v2579
    %v2647 = vpop.f32.mrf.mxu0
    %v2648 = vadd.f32 0.0, %v2647
    %v2649 = vpop.f32.mrf.mxu0
    %2650 = vdwg.mxu0
    %2651 = vrot.lane.b32.xlu0 %v1977, 112
    %v2652 = vpop.permute.xlu0 %2651
    %2653 = vrot.lane.b32.xlu0 %v1977, 80
    %v2654 = vpop.permute.xlu0 %2653
    %v2655 = vsel %vm153, %v2652, 0
    %v2657 = vsel %vm153, %v2654, 0
    %2659 = vmatprep.subr.mxu0 0.0
    %2660 = vmatpush1.xpose.msra.mxu0 0.0
    %2661 = vmatprep.subr.mxu0 0.0
    %2662 = vmatpush1.xpose.msra.mxu0 0.0
    %2663 = vmatprep.subr.mxu0 0.0
    %2664 = vmatpush1.xpose.msra.mxu0 0.0
    %2665 = vmatprep.subr.mxu0 0.0
    %2666 = vmatpush1.xpose.msra.mxu0 0.0
    %2667 = vmatprep.subr.mxu0 0.0
    %2668 = vmatpush1.xpose.msra.mxu0 0.0
    %2669 = vmatprep.subr.mxu0 0.0
    %2670 = vmatpush1.xpose.msra.mxu0 0.0
    %2671 = vmatprep.subr.mxu0 0.0
    %2672 = vmatpush1.xpose.msra.mxu0 0.0
    %2673 = vmatprep.subr.mxu0 0.0
    %2674 = vmatpush1.xpose.msra.mxu0 0.0
    %2675 = vmatprep.subr.mxu0 0.0
    %2676 = vmatpush1.xpose.msra.mxu0 0.0
    %2677 = vmatprep.subr.mxu0 0.0
    %2678 = vmatpush1.xpose.msra.mxu0 0.0
    %2679 = vmatprep.subr.mxu0 0.0
    %2680 = vmatpush1.xpose.msra.mxu0 0.0
    %2681 = vmatprep.subr.mxu0 0.0
    %2682 = vmatpush1.xpose.msra.mxu0 0.0
    %2683 = vmatprep.subr.mxu0 0.0
    %2684 = vmatpush1.xpose.msra.mxu0 0.0
    %2685 = vmatprep.subr.mxu0 0.0
    %2686 = vmatpush1.xpose.msra.mxu0 0.0
    %2687 = vmatprep.subr.mxu0 0.0
    %2688 = vmatpush1.xpose.msra.mxu0 0.0
    %2689 = vmatprep.subr.mxu0 0.0
    %2690 = vmatpush1.xpose.msra.mxu0 %v2657
    %2691 = vmatprep.subr.mxu0 0.0
    %2692 = vmatpush2.xpose.msra.mxu0 0.0
    %2693 = vmatprep.subr.mxu0 0.0
    %2694 = vmatpush2.xpose.msra.mxu0 0.0
    %2695 = vmatprep.subr.mxu0 0.0
    %2696 = vmatpush2.xpose.msra.mxu0 0.0
    %2697 = vmatprep.subr.mxu0 0.0
    %2698 = vmatpush2.xpose.msra.mxu0 0.0
    %2699 = vmatprep.subr.mxu0 0.0
    %2700 = vmatpush2.xpose.msra.mxu0 0.0
    %2701 = vmatprep.subr.mxu0 0.0
    %2702 = vmatpush2.xpose.msra.mxu0 0.0
    %2703 = vmatprep.subr.mxu0 0.0
    %2704 = vmatpush2.xpose.msra.mxu0 0.0
    %2705 = vmatprep.subr.mxu0 0.0
    %2706 = vmatpush2.xpose.msra.mxu0 0.0
    %2707 = vmatprep.subr.mxu0 0.0
    %2708 = vmatpush2.xpose.msra.mxu0 0.0
    %2709 = vmatprep.subr.mxu0 0.0
    %2710 = vmatpush2.xpose.msra.mxu0 0.0
    %2711 = vmatprep.subr.mxu0 0.0
    %2712 = vmatpush2.xpose.msra.mxu0 0.0
    %2713 = vmatprep.subr.mxu0 0.0
    %2714 = vmatpush2.xpose.msra.mxu0 0.0
    %2715 = vmatprep.subr.mxu0 0.0
    %2716 = vmatpush2.xpose.msra.mxu0 0.0
    %2717 = vmatprep.subr.mxu0 0.0
    %2718 = vmatpush2.xpose.msra.mxu0 0.0
    %2719 = vmatprep.subr.mxu0 0.0
    %2720 = vmatpush2.xpose.msra.mxu0 0.0
    %2721 = vmatprep.subr.mxu0 0.0
    %2722 = vmatpush2.xpose.msra.mxu0 0.0
    %2723 = vmatprep.mubr.f32.mxu0 0.0
    %2724 = vmatmul.mubr.f32.gmra.mxu0 %v2655
    %v2725 = vpop.f32.mrf.mxu0
    %v2726 = vadd.f32 0.0, %v2725
    %v2727 = vpop.f32.mrf.mxu0
    %2728 = vdwg.mxu0
    %2729 = vrot.lane.b32.xlu0 %v1982, 112
    %v2730 = vpop.permute.xlu0 %2729
    %2731 = vrot.lane.b32.xlu0 %v1982, 80
    %v2732 = vpop.permute.xlu0 %2731
    %v2733 = vsel %vm153, %v2730, 0
    %v2735 = vsel %vm153, %v2732, 0
    %2737 = vmatprep.subr.mxu0 0.0
    %2738 = vmatpush1.xpose.msra.mxu0 0.0
    %2739 = vmatprep.subr.mxu0 0.0
    %2740 = vmatpush1.xpose.msra.mxu0 0.0
    %2741 = vmatprep.subr.mxu0 0.0
    %2742 = vmatpush1.xpose.msra.mxu0 0.0
    %2743 = vmatprep.subr.mxu0 0.0
    %2744 = vmatpush1.xpose.msra.mxu0 0.0
    %2745 = vmatprep.subr.mxu0 0.0
    %2746 = vmatpush1.xpose.msra.mxu0 0.0
    %2747 = vmatprep.subr.mxu0 0.0
    %2748 = vmatpush1.xpose.msra.mxu0 0.0
    %2749 = vmatprep.subr.mxu0 0.0
    %2750 = vmatpush1.xpose.msra.mxu0 0.0
    %2751 = vmatprep.subr.mxu0 0.0
    %2752 = vmatpush1.xpose.msra.mxu0 0.0
    %2753 = vmatprep.subr.mxu0 0.0
    %2754 = vmatpush1.xpose.msra.mxu0 0.0
    %2755 = vmatprep.subr.mxu0 0.0
    %2756 = vmatpush1.xpose.msra.mxu0 0.0
    %2757 = vmatprep.subr.mxu0 0.0
    %2758 = vmatpush1.xpose.msra.mxu0 0.0
    %2759 = vmatprep.subr.mxu0 0.0
    %2760 = vmatpush1.xpose.msra.mxu0 0.0
    %2761 = vmatprep.subr.mxu0 0.0
    %2762 = vmatpush1.xpose.msra.mxu0 0.0
    %2763 = vmatprep.subr.mxu0 0.0
    %2764 = vmatpush1.xpose.msra.mxu0 0.0
    %2765 = vmatprep.subr.mxu0 0.0
    %2766 = vmatpush1.xpose.msra.mxu0 0.0
    %2767 = vmatprep.subr.mxu0 0.0
    %2768 = vmatpush1.xpose.msra.mxu0 %v2735
    %2769 = vmatprep.subr.mxu0 0.0
    %2770 = vmatpush2.xpose.msra.mxu0 0.0
    %2771 = vmatprep.subr.mxu0 0.0
    %2772 = vmatpush2.xpose.msra.mxu0 0.0
    %2773 = vmatprep.subr.mxu0 0.0
    %2774 = vmatpush2.xpose.msra.mxu0 0.0
    %2775 = vmatprep.subr.mxu0 0.0
    %2776 = vmatpush2.xpose.msra.mxu0 0.0
    %2777 = vmatprep.subr.mxu0 0.0
    %2778 = vmatpush2.xpose.msra.mxu0 0.0
    %2779 = vmatprep.subr.mxu0 0.0
    %2780 = vmatpush2.xpose.msra.mxu0 0.0
    %2781 = vmatprep.subr.mxu0 0.0
    %2782 = vmatpush2.xpose.msra.mxu0 0.0
    %2783 = vmatprep.subr.mxu0 0.0
    %2784 = vmatpush2.xpose.msra.mxu0 0.0
    %2785 = vmatprep.subr.mxu0 0.0
    %2786 = vmatpush2.xpose.msra.mxu0 0.0
    %2787 = vmatprep.subr.mxu0 0.0
    %2788 = vmatpush2.xpose.msra.mxu0 0.0
    %2789 = vmatprep.subr.mxu0 0.0
    %2790 = vmatpush2.xpose.msra.mxu0 0.0
    %2791 = vmatprep.subr.mxu0 0.0
    %2792 = vmatpush2.xpose.msra.mxu0 0.0
    %2793 = vmatprep.subr.mxu0 0.0
    %2794 = vmatpush2.xpose.msra.mxu0 0.0
    %2795 = vmatprep.subr.mxu0 0.0
    %2796 = vmatpush2.xpose.msra.mxu0 0.0
    %2797 = vmatprep.subr.mxu0 0.0
    %2798 = vmatpush2.xpose.msra.mxu0 0.0
    %2799 = vmatprep.subr.mxu0 0.0
    %2800 = vmatpush2.xpose.msra.mxu0 0.0
    %2801 = vmatprep.mubr.f32.mxu0 0.0
    %2802 = vmatmul.mubr.f32.gmra.mxu0 %v2733
    %v2803 = vpop.f32.mrf.mxu0
    %v2804 = vadd.f32 0.0, %v2803
    %v2805 = vpop.f32.mrf.mxu0
    %2806 = vdwg.mxu0
    %v2807 = vmul.f32 %v2726, 0.35355338
    %v2808 = vmul.f32 %v2804, 0.35355338
    %v2809 = vadd.f32 %v2807, %v312
    %v2810 = vadd.f32 %v2808, %v316
    %v2811 = vsel %vm153, %v2809, -inf
    %2812 = vmax.xlane.f32.xlu0 %v2811
    %v2813 = vpop.xlane.xlu0 %2812
    %v2814 = vsel %vm153, %v2810, -inf
    %2815 = vmax.xlane.f32.xlu0 %v2814
    %v2816 = vpop.xlane.xlu0 %2815
    %v2817 = vsub.f32 %v2809, %v2813
    %v2818 = vsub.f32 %v2810, %v2816
    %v2819 = vmul.f32 %v2817, 1.442695
    %v2820 = vpow.pop %v2819
    %v2821 = vmul.f32 %v2818, 1.442695
    %v2822 = vpow.pop %v2821
    %v2823 = vsel %vm153, %v2820, 0.0
    %2824 = vadd.xlane.f32.xlu0 %v2823
    %v2825 = vpop.xlane.xlu0 %2824
    %v2826 = vsel %vm153, %v2822, 0.0
    %2827 = vadd.xlane.f32.xlu0 %v2826
    %v2828 = vpop.xlane.xlu0 %2827
    %v2829 = vrcp.pop %v2825
    %v2830 = vmul.f32 %v2820, %v2829
    %v2831 = vrcp.pop %v2828
    %v2832 = vmul.f32 %v2822, %v2831
    %2833 = vrot.lane.b32.xlu0 %v1977, 48
    %v2834 = vpop.permute.xlu0 %2833
    %v2837 = vsel %vm153, %v2830, 0
    %2839 = vmatprep.subr.mxu0 0.0
    %2840 = vmatpush1.msra.mxu0 0.0
    %2841 = vmatprep.subr.mxu0 0.0
    %2842 = vmatpush1.msra.mxu0 0.0
    %2843 = vmatprep.subr.mxu0 0.0
    %2844 = vmatpush1.msra.mxu0 0.0
    %2845 = vmatprep.subr.mxu0 0.0
    %2846 = vmatpush1.msra.mxu0 0.0
    %2847 = vmatprep.subr.mxu0 0.0
    %2848 = vmatpush1.msra.mxu0 0.0
    %2849 = vmatprep.subr.mxu0 0.0
    %2850 = vmatpush1.msra.mxu0 0.0
    %2851 = vmatprep.subr.mxu0 0.0
    %2852 = vmatpush1.msra.mxu0 0.0
    %2853 = vmatprep.subr.mxu0 0.0
    %2854 = vmatpush1.msra.mxu0 0.0
    %2855 = vmatprep.subr.mxu0 0.0
    %2856 = vmatpush1.msra.mxu0 0.0
    %2857 = vmatprep.subr.mxu0 0.0
    %2858 = vmatpush1.msra.mxu0 0.0
    %2859 = vmatprep.subr.mxu0 0.0
    %2860 = vmatpush1.msra.mxu0 0.0
    %2861 = vmatprep.subr.mxu0 0.0
    %2862 = vmatpush1.msra.mxu0 0.0
    %2863 = vmatprep.subr.mxu0 0.0
    %2864 = vmatpush1.msra.mxu0 0.0
    %2865 = vmatprep.subr.mxu0 0.0
    %2866 = vmatpush1.msra.mxu0 0.0
    %2867 = vmatprep.subr.mxu0 0.0
    %2868 = vmatpush1.msra.mxu0 0.0
    %2869 = vmatprep.subr.mxu0 0.0
    %2870 = vmatpush1.msra.mxu0 %v2834
    %2871 = vmatprep.subr.mxu0 0.0
    %2872 = vmatpush2.msra.mxu0 0.0
    %2873 = vmatprep.subr.mxu0 0.0
    %2874 = vmatpush2.msra.mxu0 0.0
    %2875 = vmatprep.subr.mxu0 0.0
    %2876 = vmatpush2.msra.mxu0 0.0
    %2877 = vmatprep.subr.mxu0 0.0
    %2878 = vmatpush2.msra.mxu0 0.0
    %2879 = vmatprep.subr.mxu0 0.0
    %2880 = vmatpush2.msra.mxu0 0.0
    %2881 = vmatprep.subr.mxu0 0.0
    %2882 = vmatpush2.msra.mxu0 0.0
    %2883 = vmatprep.subr.mxu0 0.0
    %2884 = vmatpush2.msra.mxu0 0.0
    %2885 = vmatprep.subr.mxu0 0.0
    %2886 = vmatpush2.msra.mxu0 0.0
    %2887 = vmatprep.subr.mxu0 0.0
    %2888 = vmatpush2.msra.mxu0 0.0
    %2889 = vmatprep.subr.mxu0 0.0
    %2890 = vmatpush2.msra.mxu0 0.0
    %2891 = vmatprep.subr.mxu0 0.0
    %2892 = vmatpush2.msra.mxu0 0.0
    %2893 = vmatprep.subr.mxu0 0.0
    %2894 = vmatpush2.msra.mxu0 0.0
    %2895 = vmatprep.subr.mxu0 0.0
    %2896 = vmatpush2.msra.mxu0 0.0
    %2897 = vmatprep.subr.mxu0 0.0
    %2898 = vmatpush2.msra.mxu0 0.0
    %2899 = vmatprep.subr.mxu0 0.0
    %2900 = vmatpush2.msra.mxu0 0.0
    %2901 = vmatprep.subr.mxu0 0.0
    %2902 = vmatpush2.msra.mxu0 0.0
    %2903 = vmatprep.mubr.f32.mxu0 0.0
    %2904 = vmatmul.mubr.f32.gmra.mxu0 %v2837
    %v2905 = vpop.f32.mrf.mxu0
    %v2906 = vadd.f32 0.0, %v2905
    %v2907 = vpop.f32.mrf.mxu0
    %2908 = vdwg.mxu0
    %2909 = vrot.lane.b32.xlu0 %v1982, 48
    %v2910 = vpop.permute.xlu0 %2909
    %v2913 = vsel %vm153, %v2832, 0
    %2915 = vmatprep.subr.mxu0 0.0
    %2916 = vmatpush1.msra.mxu0 0.0
    %2917 = vmatprep.subr.mxu0 0.0
    %2918 = vmatpush1.msra.mxu0 0.0
    %2919 = vmatprep.subr.mxu0 0.0
    %2920 = vmatpush1.msra.mxu0 0.0
    %2921 = vmatprep.subr.mxu0 0.0
    %2922 = vmatpush1.msra.mxu0 0.0
    %2923 = vmatprep.subr.mxu0 0.0
    %2924 = vmatpush1.msra.mxu0 0.0
    %2925 = vmatprep.subr.mxu0 0.0
    %2926 = vmatpush1.msra.mxu0 0.0
    %2927 = vmatprep.subr.mxu0 0.0
    %2928 = vmatpush1.msra.mxu0 0.0
    %2929 = vmatprep.subr.mxu0 0.0
    %2930 = vmatpush1.msra.mxu0 0.0
    %2931 = vmatprep.subr.mxu0 0.0
    %2932 = vmatpush1.msra.mxu0 0.0
    %2933 = vmatprep.subr.mxu0 0.0
    %2934 = vmatpush1.msra.mxu0 0.0
    %2935 = vmatprep.subr.mxu0 0.0
    %2936 = vmatpush1.msra.mxu0 0.0
    %2937 = vmatprep.subr.mxu0 0.0
    %2938 = vmatpush1.msra.mxu0 0.0
    %2939 = vmatprep.subr.mxu0 0.0
    %2940 = vmatpush1.msra.mxu0 0.0
    %2941 = vmatprep.subr.mxu0 0.0
    %2942 = vmatpush1.msra.mxu0 0.0
    %2943 = vmatprep.subr.mxu0 0.0
    %2944 = vmatpush1.msra.mxu0 0.0
    %2945 = vmatprep.subr.mxu0 0.0
    %2946 = vmatpush1.msra.mxu0 %v2910
    %2947 = vmatprep.subr.mxu0 0.0
    %2948 = vmatpush2.msra.mxu0 0.0
    %2949 = vmatprep.subr.mxu0 0.0
    %2950 = vmatpush2.msra.mxu0 0.0
    %2951 = vmatprep.subr.mxu0 0.0
    %2952 = vmatpush2.msra.mxu0 0.0
    %2953 = vmatprep.subr.mxu0 0.0
    %2954 = vmatpush2.msra.mxu0 0.0
    %2955 = vmatprep.subr.mxu0 0.0
    %2956 = vmatpush2.msra.mxu0 0.0
    %2957 = vmatprep.subr.mxu0 0.0
    %2958 = vmatpush2.msra.mxu0 0.0
    %2959 = vmatprep.subr.mxu0 0.0
    %2960 = vmatpush2.msra.mxu0 0.0
    %2961 = vmatprep.subr.mxu0 0.0
    %2962 = vmatpush2.msra.mxu0 0.0
    %2963 = vmatprep.subr.mxu0 0.0
    %2964 = vmatpush2.msra.mxu0 0.0
    %2965 = vmatprep.subr.mxu0 0.0
    %2966 = vmatpush2.msra.mxu0 0.0
    %2967 = vmatprep.subr.mxu0 0.0
    %2968 = vmatpush2.msra.mxu0 0.0
    %2969 = vmatprep.subr.mxu0 0.0
    %2970 = vmatpush2.msra.mxu0 0.0
    %2971 = vmatprep.subr.mxu0 0.0
    %2972 = vmatpush2.msra.mxu0 0.0
    %2973 = vmatprep.subr.mxu0 0.0
    %2974 = vmatpush2.msra.mxu0 0.0
    %2975 = vmatprep.subr.mxu0 0.0
    %2976 = vmatpush2.msra.mxu0 0.0
    %2977 = vmatprep.subr.mxu0 0.0
    %2978 = vmatpush2.msra.mxu0 0.0
    %2979 = vmatprep.mubr.f32.mxu0 0.0
    %2980 = vmatmul.mubr.f32.gmra.mxu0 %v2913
    %v2981 = vpop.f32.mrf.mxu0
    %v2982 = vadd.f32 0.0, %v2981
    %v2983 = vpop.f32.mrf.mxu0
    %2984 = vdwg.mxu0
    %2985 = vrot.lane.b32.xlu0 %v1977, 104
    %v2986 = vpop.permute.xlu0 %2985
    %2987 = vrot.lane.b32.xlu0 %v1977, 72
    %v2988 = vpop.permute.xlu0 %2987
    %v2989 = vsel %vm153, %v2986, 0
    %v2991 = vsel %vm153, %v2988, 0
    %2993 = vmatprep.subr.mxu0 0.0
    %2994 = vmatpush1.xpose.msra.mxu0 0.0
    %2995 = vmatprep.subr.mxu0 0.0
    %2996 = vmatpush1.xpose.msra.mxu0 0.0
    %2997 = vmatprep.subr.mxu0 0.0
    %2998 = vmatpush1.xpose.msra.mxu0 0.0
    %2999 = vmatprep.subr.mxu0 0.0
    %3000 = vmatpush1.xpose.msra.mxu0 0.0
    %3001 = vmatprep.subr.mxu0 0.0
    %3002 = vmatpush1.xpose.msra.mxu0 0.0
    %3003 = vmatprep.subr.mxu0 0.0
    %3004 = vmatpush1.xpose.msra.mxu0 0.0
    %3005 = vmatprep.subr.mxu0 0.0
    %3006 = vmatpush1.xpose.msra.mxu0 0.0
    %3007 = vmatprep.subr.mxu0 0.0
    %3008 = vmatpush1.xpose.msra.mxu0 0.0
    %3009 = vmatprep.subr.mxu0 0.0
    %3010 = vmatpush1.xpose.msra.mxu0 0.0
    %3011 = vmatprep.subr.mxu0 0.0
    %3012 = vmatpush1.xpose.msra.mxu0 0.0
    %3013 = vmatprep.subr.mxu0 0.0
    %3014 = vmatpush1.xpose.msra.mxu0 0.0
    %3015 = vmatprep.subr.mxu0 0.0
    %3016 = vmatpush1.xpose.msra.mxu0 0.0
    %3017 = vmatprep.subr.mxu0 0.0
    %3018 = vmatpush1.xpose.msra.mxu0 0.0
    %3019 = vmatprep.subr.mxu0 0.0
    %3020 = vmatpush1.xpose.msra.mxu0 0.0
    %3021 = vmatprep.subr.mxu0 0.0
    %3022 = vmatpush1.xpose.msra.mxu0 0.0
    %3023 = vmatprep.subr.mxu0 0.0
    %3024 = vmatpush1.xpose.msra.mxu0 %v2991
    %3025 = vmatprep.subr.mxu0 0.0
    %3026 = vmatpush2.xpose.msra.mxu0 0.0
    %3027 = vmatprep.subr.mxu0 0.0
    %3028 = vmatpush2.xpose.msra.mxu0 0.0
    %3029 = vmatprep.subr.mxu0 0.0
    %3030 = vmatpush2.xpose.msra.mxu0 0.0
    %3031 = vmatprep.subr.mxu0 0.0
    %3032 = vmatpush2.xpose.msra.mxu0 0.0
    %3033 = vmatprep.subr.mxu0 0.0
    %3034 = vmatpush2.xpose.msra.mxu0 0.0
    %3035 = vmatprep.subr.mxu0 0.0
    %3036 = vmatpush2.xpose.msra.mxu0 0.0
    %3037 = vmatprep.subr.mxu0 0.0
    %3038 = vmatpush2.xpose.msra.mxu0 0.0
    %3039 = vmatprep.subr.mxu0 0.0
    %3040 = vmatpush2.xpose.msra.mxu0 0.0
    %3041 = vmatprep.subr.mxu0 0.0
    %3042 = vmatpush2.xpose.msra.mxu0 0.0
    %3043 = vmatprep.subr.mxu0 0.0
    %3044 = vmatpush2.xpose.msra.mxu0 0.0
    %3045 = vmatprep.subr.mxu0 0.0
    %3046 = vmatpush2.xpose.msra.mxu0 0.0
    %3047 = vmatprep.subr.mxu0 0.0
    %3048 = vmatpush2.xpose.msra.mxu0 0.0
    %3049 = vmatprep.subr.mxu0 0.0
    %3050 = vmatpush2.xpose.msra.mxu0 0.0
    %3051 = vmatprep.subr.mxu0 0.0
    %3052 = vmatpush2.xpose.msra.mxu0 0.0
    %3053 = vmatprep.subr.mxu0 0.0
    %3054 = vmatpush2.xpose.msra.mxu0 0.0
    %3055 = vmatprep.subr.mxu0 0.0
    %3056 = vmatpush2.xpose.msra.mxu0 0.0
    %3057 = vmatprep.mubr.f32.mxu0 0.0
    %3058 = vmatmul.mubr.f32.gmra.mxu0 %v2989
    %v3059 = vpop.f32.mrf.mxu0
    %v3060 = vadd.f32 0.0, %v3059
    %v3061 = vpop.f32.mrf.mxu0
    %3062 = vdwg.mxu0
    %3063 = vrot.lane.b32.xlu0 %v1982, 104
    %v3064 = vpop.permute.xlu0 %3063
    %3065 = vrot.lane.b32.xlu0 %v1982, 72
    %v3066 = vpop.permute.xlu0 %3065
    %v3067 = vsel %vm153, %v3064, 0
    %v3069 = vsel %vm153, %v3066, 0
    %3071 = vmatprep.subr.mxu0 0.0
    %3072 = vmatpush1.xpose.msra.mxu0 0.0
    %3073 = vmatprep.subr.mxu0 0.0
    %3074 = vmatpush1.xpose.msra.mxu0 0.0
    %3075 = vmatprep.subr.mxu0 0.0
    %3076 = vmatpush1.xpose.msra.mxu0 0.0
    %3077 = vmatprep.subr.mxu0 0.0
    %3078 = vmatpush1.xpose.msra.mxu0 0.0
    %3079 = vmatprep.subr.mxu0 0.0
    %3080 = vmatpush1.xpose.msra.mxu0 0.0
    %3081 = vmatprep.subr.mxu0 0.0
    %3082 = vmatpush1.xpose.msra.mxu0 0.0
    %3083 = vmatprep.subr.mxu0 0.0
    %3084 = vmatpush1.xpose.msra.mxu0 0.0
    %3085 = vmatprep.subr.mxu0 0.0
    %3086 = vmatpush1.xpose.msra.mxu0 0.0
    %3087 = vmatprep.subr.mxu0 0.0
    %3088 = vmatpush1.xpose.msra.mxu0 0.0
    %3089 = vmatprep.subr.mxu0 0.0
    %3090 = vmatpush1.xpose.msra.mxu0 0.0
    %3091 = vmatprep.subr.mxu0 0.0
    %3092 = vmatpush1.xpose.msra.mxu0 0.0
    %3093 = vmatprep.subr.mxu0 0.0
    %3094 = vmatpush1.xpose.msra.mxu0 0.0
    %3095 = vmatprep.subr.mxu0 0.0
    %3096 = vmatpush1.xpose.msra.mxu0 0.0
    %3097 = vmatprep.subr.mxu0 0.0
    %3098 = vmatpush1.xpose.msra.mxu0 0.0
    %3099 = vmatprep.subr.mxu0 0.0
    %3100 = vmatpush1.xpose.msra.mxu0 0.0
    %3101 = vmatprep.subr.mxu0 0.0
    %3102 = vmatpush1.xpose.msra.mxu0 %v3069
    %3103 = vmatprep.subr.mxu0 0.0
    %3104 = vmatpush2.xpose.msra.mxu0 0.0
    %3105 = vmatprep.subr.mxu0 0.0
    %3106 = vmatpush2.xpose.msra.mxu0 0.0
    %3107 = vmatprep.subr.mxu0 0.0
    %3108 = vmatpush2.xpose.msra.mxu0 0.0
    %3109 = vmatprep.subr.mxu0 0.0
    %3110 = vmatpush2.xpose.msra.mxu0 0.0
    %3111 = vmatprep.subr.mxu0 0.0
    %3112 = vmatpush2.xpose.msra.mxu0 0.0
    %3113 = vmatprep.subr.mxu0 0.0
    %3114 = vmatpush2.xpose.msra.mxu0 0.0
    %3115 = vmatprep.subr.mxu0 0.0
    %3116 = vmatpush2.xpose.msra.mxu0 0.0
    %3117 = vmatprep.subr.mxu0 0.0
    %3118 = vmatpush2.xpose.msra.mxu0 0.0
    %3119 = vmatprep.subr.mxu0 0.0
    %3120 = vmatpush2.xpose.msra.mxu0 0.0
    %3121 = vmatprep.subr.mxu0 0.0
    %3122 = vmatpush2.xpose.msra.mxu0 0.0
    %3123 = vmatprep.subr.mxu0 0.0
    %3124 = vmatpush2.xpose.msra.mxu0 0.0
    %3125 = vmatprep.subr.mxu0 0.0
    %3126 = vmatpush2.xpose.msra.mxu0 0.0
    %3127 = vmatprep.subr.mxu0 0.0
    %3128 = vmatpush2.xpose.msra.mxu0 0.0
    %3129 = vmatprep.subr.mxu0 0.0
    %3130 = vmatpush2.xpose.msra.mxu0 0.0
    %3131 = vmatprep.subr.mxu0 0.0
    %3132 = vmatpush2.xpose.msra.mxu0 0.0
    %3133 = vmatprep.subr.mxu0 0.0
    %3134 = vmatpush2.xpose.msra.mxu0 0.0
    %3135 = vmatprep.mubr.f32.mxu0 0.0
    %3136 = vmatmul.mubr.f32.gmra.mxu0 %v3067
    %v3137 = vpop.f32.mrf.mxu0
    %v3138 = vadd.f32 0.0, %v3137
    %v3139 = vpop.f32.mrf.mxu0
    %3140 = vdwg.mxu0
    %v3141 = vmul.f32 %v3060, 0.35355338
    %v3142 = vmul.f32 %v3138, 0.35355338
    %v3143 = vadd.f32 %v3141, %v312
    %v3144 = vadd.f32 %v3142, %v316
    %v3145 = vsel %vm153, %v3143, -inf
    %3146 = vmax.xlane.f32.xlu0 %v3145
    %v3147 = vpop.xlane.xlu0 %3146
    %v3148 = vsel %vm153, %v3144, -inf
    %3149 = vmax.xlane.f32.xlu0 %v3148
    %v3150 = vpop.xlane.xlu0 %3149
    %v3151 = vsub.f32 %v3143, %v3147
    %v3152 = vsub.f32 %v3144, %v3150
    %v3153 = vmul.f32 %v3151, 1.442695
    %v3154 = vpow.pop %v3153
    %v3155 = vmul.f32 %v3152, 1.442695
    %v3156 = vpow.pop %v3155
    %v3157 = vsel %vm153, %v3154, 0.0
    %3158 = vadd.xlane.f32.xlu0 %v3157
    %v3159 = vpop.xlane.xlu0 %3158
    %v3160 = vsel %vm153, %v3156, 0.0
    %3161 = vadd.xlane.f32.xlu0 %v3160
    %v3162 = vpop.xlane.xlu0 %3161
    %v3163 = vrcp.pop %v3159
    %v3164 = vmul.f32 %v3154, %v3163
    %v3165 = vrcp.pop %v3162
    %v3166 = vmul.f32 %v3156, %v3165
    %3167 = vrot.lane.b32.xlu0 %v1977, 40
    %v3168 = vpop.permute.xlu0 %3167
    %v3171 = vsel %vm153, %v3164, 0
    %3173 = vmatprep.subr.mxu0 0.0
    %3174 = vmatpush1.msra.mxu0 0.0
    %3175 = vmatprep.subr.mxu0 0.0
    %3176 = vmatpush1.msra.mxu0 0.0
    %3177 = vmatprep.subr.mxu0 0.0
    %3178 = vmatpush1.msra.mxu0 0.0
    %3179 = vmatprep.subr.mxu0 0.0
    %3180 = vmatpush1.msra.mxu0 0.0
    %3181 = vmatprep.subr.mxu0 0.0
    %3182 = vmatpush1.msra.mxu0 0.0
    %3183 = vmatprep.subr.mxu0 0.0
    %3184 = vmatpush1.msra.mxu0 0.0
    %3185 = vmatprep.subr.mxu0 0.0
    %3186 = vmatpush1.msra.mxu0 0.0
    %3187 = vmatprep.subr.mxu0 0.0
    %3188 = vmatpush1.msra.mxu0 0.0
    %3189 = vmatprep.subr.mxu0 0.0
    %3190 = vmatpush1.msra.mxu0 0.0
    %3191 = vmatprep.subr.mxu0 0.0
    %3192 = vmatpush1.msra.mxu0 0.0
    %3193 = vmatprep.subr.mxu0 0.0
    %3194 = vmatpush1.msra.mxu0 0.0
    %3195 = vmatprep.subr.mxu0 0.0
    %3196 = vmatpush1.msra.mxu0 0.0
    %3197 = vmatprep.subr.mxu0 0.0
    %3198 = vmatpush1.msra.mxu0 0.0
    %3199 = vmatprep.subr.mxu0 0.0
    %3200 = vmatpush1.msra.mxu0 0.0
    %3201 = vmatprep.subr.mxu0 0.0
    %3202 = vmatpush1.msra.mxu0 0.0
    %3203 = vmatprep.subr.mxu0 0.0
    %3204 = vmatpush1.msra.mxu0 %v3168
    %3205 = vmatprep.subr.mxu0 0.0
    %3206 = vmatpush2.msra.mxu0 0.0
    %3207 = vmatprep.subr.mxu0 0.0
    %3208 = vmatpush2.msra.mxu0 0.0
    %3209 = vmatprep.subr.mxu0 0.0
    %3210 = vmatpush2.msra.mxu0 0.0
    %3211 = vmatprep.subr.mxu0 0.0
    %3212 = vmatpush2.msra.mxu0 0.0
    %3213 = vmatprep.subr.mxu0 0.0
    %3214 = vmatpush2.msra.mxu0 0.0
    %3215 = vmatprep.subr.mxu0 0.0
    %3216 = vmatpush2.msra.mxu0 0.0
    %3217 = vmatprep.subr.mxu0 0.0
    %3218 = vmatpush2.msra.mxu0 0.0
    %3219 = vmatprep.subr.mxu0 0.0
    %3220 = vmatpush2.msra.mxu0 0.0
    %3221 = vmatprep.subr.mxu0 0.0
    %3222 = vmatpush2.msra.mxu0 0.0
    %3223 = vmatprep.subr.mxu0 0.0
    %3224 = vmatpush2.msra.mxu0 0.0
    %3225 = vmatprep.subr.mxu0 0.0
    %3226 = vmatpush2.msra.mxu0 0.0
    %3227 = vmatprep.subr.mxu0 0.0
    %3228 = vmatpush2.msra.mxu0 0.0
    %3229 = vmatprep.subr.mxu0 0.0
    %3230 = vmatpush2.msra.mxu0 0.0
    %3231 = vmatprep.subr.mxu0 0.0
    %3232 = vmatpush2.msra.mxu0 0.0
    %3233 = vmatprep.subr.mxu0 0.0
    %3234 = vmatpush2.msra.mxu0 0.0
    %3235 = vmatprep.subr.mxu0 0.0
    %3236 = vmatpush2.msra.mxu0 0.0
    %3237 = vmatprep.mubr.f32.mxu0 0.0
    %3238 = vmatmul.mubr.f32.gmra.mxu0 %v3171
    %v3239 = vpop.f32.mrf.mxu0
    %v3240 = vadd.f32 0.0, %v3239
    %v3241 = vpop.f32.mrf.mxu0
    %3242 = vdwg.mxu0
    %3243 = vrot.lane.b32.xlu0 %v1982, 40
    %v3244 = vpop.permute.xlu0 %3243
    %v3247 = vsel %vm153, %v3166, 0
    %3249 = vmatprep.subr.mxu0 0.0
    %3250 = vmatpush1.msra.mxu0 0.0
    %3251 = vmatprep.subr.mxu0 0.0
    %3252 = vmatpush1.msra.mxu0 0.0
    %3253 = vmatprep.subr.mxu0 0.0
    %3254 = vmatpush1.msra.mxu0 0.0
    %3255 = vmatprep.subr.mxu0 0.0
    %3256 = vmatpush1.msra.mxu0 0.0
    %3257 = vmatprep.subr.mxu0 0.0
    %3258 = vmatpush1.msra.mxu0 0.0
    %3259 = vmatprep.subr.mxu0 0.0
    %3260 = vmatpush1.msra.mxu0 0.0
    %3261 = vmatprep.subr.mxu0 0.0
    %3262 = vmatpush1.msra.mxu0 0.0
    %3263 = vmatprep.subr.mxu0 0.0
    %3264 = vmatpush1.msra.mxu0 0.0
    %3265 = vmatprep.subr.mxu0 0.0
    %3266 = vmatpush1.msra.mxu0 0.0
    %3267 = vmatprep.subr.mxu0 0.0
    %3268 = vmatpush1.msra.mxu0 0.0
    %3269 = vmatprep.subr.mxu0 0.0
    %3270 = vmatpush1.msra.mxu0 0.0
    %3271 = vmatprep.subr.mxu0 0.0
    %3272 = vmatpush1.msra.mxu0 0.0
    %3273 = vmatprep.subr.mxu0 0.0
    %3274 = vmatpush1.msra.mxu0 0.0
    %3275 = vmatprep.subr.mxu0 0.0
    %3276 = vmatpush1.msra.mxu0 0.0
    %3277 = vmatprep.subr.mxu0 0.0
    %3278 = vmatpush1.msra.mxu0 0.0
    %3279 = vmatprep.subr.mxu0 0.0
    %3280 = vmatpush1.msra.mxu0 %v3244
    %3281 = vmatprep.subr.mxu0 0.0
    %3282 = vmatpush2.msra.mxu0 0.0
    %3283 = vmatprep.subr.mxu0 0.0
    %3284 = vmatpush2.msra.mxu0 0.0
    %3285 = vmatprep.subr.mxu0 0.0
    %3286 = vmatpush2.msra.mxu0 0.0
    %3287 = vmatprep.subr.mxu0 0.0
    %3288 = vmatpush2.msra.mxu0 0.0
    %3289 = vmatprep.subr.mxu0 0.0
    %3290 = vmatpush2.msra.mxu0 0.0
    %3291 = vmatprep.subr.mxu0 0.0
    %3292 = vmatpush2.msra.mxu0 0.0
    %3293 = vmatprep.subr.mxu0 0.0
    %3294 = vmatpush2.msra.mxu0 0.0
    %3295 = vmatprep.subr.mxu0 0.0
    %3296 = vmatpush2.msra.mxu0 0.0
    %3297 = vmatprep.subr.mxu0 0.0
    %3298 = vmatpush2.msra.mxu0 0.0
    %3299 = vmatprep.subr.mxu0 0.0
    %3300 = vmatpush2.msra.mxu0 0.0
    %3301 = vmatprep.subr.mxu0 0.0
    %3302 = vmatpush2.msra.mxu0 0.0
    %3303 = vmatprep.subr.mxu0 0.0
    %3304 = vmatpush2.msra.mxu0 0.0
    %3305 = vmatprep.subr.mxu0 0.0
    %3306 = vmatpush2.msra.mxu0 0.0
    %3307 = vmatprep.subr.mxu0 0.0
    %3308 = vmatpush2.msra.mxu0 0.0
    %3309 = vmatprep.subr.mxu0 0.0
    %3310 = vmatpush2.msra.mxu0 0.0
    %3311 = vmatprep.subr.mxu0 0.0
    %3312 = vmatpush2.msra.mxu0 0.0
    %3313 = vmatprep.mubr.f32.mxu0 0.0
    %3314 = vmatmul.mubr.f32.gmra.mxu0 %v3247
    %v3315 = vpop.f32.mrf.mxu0
    %v3316 = vadd.f32 0.0, %v3315
    %v3317 = vpop.f32.mrf.mxu0
    %3318 = vdwg.mxu0
    %3321 = vrot.lane.b32.xlu0 %v2572, 8
    %v3322 = vpop.permute.xlu0 %3321
    %3323 = vrot.lane.b32.xlu0 %v2648, 8
    %v3324 = vpop.permute.xlu0 %3323
    %3329 = vrot.lane.b32.xlu0 %v2906, 16
    %v3330 = vpop.permute.xlu0 %3329
    %3331 = vrot.lane.b32.xlu0 %v2982, 16
    %v3332 = vpop.permute.xlu0 %3331
    %3337 = vrot.lane.b32.xlu0 %v3240, 24
    %v3338 = vpop.permute.xlu0 %3337
    %3339 = vrot.lane.b32.xlu0 %v3316, 24
    %v3340 = vpop.permute.xlu0 %3339
    %v3343 = vsel %vm153, %v2238, %v3322
    %v3344 = vsel %vm153, %v2314, %v3324
    %v3345 = vsel %vm1523, %v3343, %v3330
    %v3346 = vsel %vm1523, %v3344, %v3332
    %v3347 = vsel %vm1526, %v3345, %v3338
    %v3348 = vsel %vm1526, %v3346, %v3340
    %s3349 = scalar_lea.vmem %s5, 32
    %v3350 = vld [vmem:[%s3349] sm:$0xff]
    %v3351 = vld [vmem:[%s3349 + $0x8] sm:$0xff]
    %v3352 = vld [vmem:[%s3349 + $0x10] sm:$0xff]
    %v3353 = vld [vmem:[%s3349 + $0x18] sm:$0xff]
    %v3354 = vlaneseq
    %v3355 = vshrl.u32 %v3354, 7
    %v3356 = vsub.s32 1, %v3355
    %v3357 = vrot.slane %v1894, %v3356
    %v3359 = vsel %vm68, %v3347, 0
    %v3362 = vsel %vm68, %v3348, 0
    %3364 = vmatprep.subr.mxu0 0.0
    %3365 = vmatpush1.msra.mxu0 0.0
    %3366 = vmatprep.subr.mxu0 0.0
    %3367 = vmatpush1.msra.mxu0 0.0
    %3368 = vmatprep.subr.mxu0 0.0
    %3369 = vmatpush1.msra.mxu0 0.0
    %3370 = vmatprep.subr.mxu0 0.0
    %3371 = vmatpush1.msra.mxu0 0.0
    %3372 = vmatprep.subr.mxu0 0.0
    %3373 = vmatpush1.msra.mxu0 0.0
    %3374 = vmatprep.subr.mxu0 0.0
    %3375 = vmatpush1.msra.mxu0 0.0
    %3376 = vmatprep.subr.mxu0 0.0
    %3377 = vmatpush1.msra.mxu0 0.0
    %3378 = vmatprep.subr.mxu0 0.0
    %3379 = vmatpush1.msra.mxu0 0.0
    %3380 = vmatprep.subr.mxu0 0.0
    %3381 = vmatpush1.msra.mxu0 0.0
    %3382 = vmatprep.subr.mxu0 0.0
    %3383 = vmatpush1.msra.mxu0 0.0
    %3384 = vmatprep.subr.mxu0 0.0
    %3385 = vmatpush1.msra.mxu0 0.0
    %3386 = vmatprep.subr.mxu0 0.0
    %3387 = vmatpush1.msra.mxu0 0.0
    %3388 = vmatprep.subr.mxu0 0.0
    %3389 = vmatpush1.msra.mxu0 %v3353
    %3390 = vmatprep.subr.mxu0 0.0
    %3391 = vmatpush1.msra.mxu0 %v3352
    %3392 = vmatprep.subr.mxu0 0.0
    %3393 = vmatpush1.msra.mxu0 %v3351
    %3394 = vmatprep.subr.mxu0 0.0
    %3395 = vmatpush1.msra.mxu0 %v3350
    %3396 = vmatprep.subr.mxu0 0.0
    %3397 = vmatpush2.msra.mxu0 0.0
    %3398 = vmatprep.subr.mxu0 0.0
    %3399 = vmatpush2.msra.mxu0 0.0
    %3400 = vmatprep.subr.mxu0 0.0
    %3401 = vmatpush2.msra.mxu0 0.0
    %3402 = vmatprep.subr.mxu0 0.0
    %3403 = vmatpush2.msra.mxu0 0.0
    %3404 = vmatprep.subr.mxu0 0.0
    %3405 = vmatpush2.msra.mxu0 0.0
    %3406 = vmatprep.subr.mxu0 0.0
    %3407 = vmatpush2.msra.mxu0 0.0
    %3408 = vmatprep.subr.mxu0 0.0
    %3409 = vmatpush2.msra.mxu0 0.0
    %3410 = vmatprep.subr.mxu0 0.0
    %3411 = vmatpush2.msra.mxu0 0.0
    %3412 = vmatprep.subr.mxu0 0.0
    %3413 = vmatpush2.msra.mxu0 0.0
    %3414 = vmatprep.subr.mxu0 0.0
    %3415 = vmatpush2.msra.mxu0 0.0
    %3416 = vmatprep.subr.mxu0 0.0
    %3417 = vmatpush2.msra.mxu0 0.0
    %3418 = vmatprep.subr.mxu0 0.0
    %3419 = vmatpush2.msra.mxu0 0.0
    %3420 = vmatprep.subr.mxu0 0.0
    %3421 = vmatpush2.msra.mxu0 0.0
    %3422 = vmatprep.subr.mxu0 0.0
    %3423 = vmatpush2.msra.mxu0 0.0
    %3424 = vmatprep.subr.mxu0 0.0
    %3425 = vmatpush2.msra.mxu0 0.0
    %3426 = vmatprep.subr.mxu0 0.0
    %3427 = vmatpush2.msra.mxu0 0.0
    %3428 = vmatprep.mubr.f32.mxu0 0.0
    %3429 = vmatmul.mubr.f32.gmra.mxu0 %v3359
    %v3430 = vpop.f32.mrf.mxu0
    %v3431 = vadd.f32 %v3357, %v3430
    %v3432 = vpop.f32.mrf.mxu0
    %3433 = vmatprep.mubr.f32.mxu0 0.0
    %3434 = vmatmul.mubr.f32.gmra.mxu0 %v3362
    %v3435 = vpop.f32.mrf.mxu0
    %v3436 = vadd.f32 %v3357, %v3435
    %v3437 = vpop.f32.mrf.mxu0
    %3438 = vdwg.mxu0
    %v3439 = vadd.f32 %v3431, %v1891
    %v3440 = vadd.f32 %v3436, %v1892
    %v3441 = vsel %vm68, %v3439, 0.0
    %3442 = vadd.xlane.f32.xlu0 %v3441
    %v3443 = vpop.xlane.xlu0 %3442
    %v3444 = vsel %vm68, %v3440, 0.0
    %3445 = vadd.xlane.f32.xlu0 %v3444
    %v3446 = vpop.xlane.xlu0 %3445
    %v3447 = vmul.f32 %v3443, %v1626
    %v3448 = vmul.f32 %v3446, %v1626
    %v3449 = vsub.f32 %v3439, %v3447
    %v3450 = vsub.f32 %v3440, %v3448
    %v3451 = vmul.f32 %v3449, %v3449
    %v3452 = vmul.f32 %v3450, %v3450
    %v3453 = vsel %vm68, %v3451, 0.0
    %3454 = vadd.xlane.f32.xlu0 %v3453
    %v3455 = vpop.xlane.xlu0 %3454
    %v3456 = vsel %vm68, %v3452, 0.0
    %3457 = vadd.xlane.f32.xlu0 %v3456
    %v3458 = vpop.xlane.xlu0 %3457
    %v3459 = vmul.f32 %v3455, %v1626
    %v3460 = vmul.f32 %v3458, %v1626
    %v3461 = vadd.f32 %v3459, 1e-12
    %v3462 = vadd.f32 %v3460, 1e-12
    %v3463 = vrsqrt.pop %v3461
    %v3464 = vrsqrt.pop %v3462
    %v3465 = vmul.f32 %v3449, %v3463
    %v3466 = vmul.f32 %v3450, %v3464
    %v3467 = vlaneseq
    %v3468 = vshrl.u32 %v3467, 7
    %v3469 = vsub.s32 2, %v3468
    %v3470 = vrot.slane %v1894, %v3469
    %v3471 = vmul.f32 %v3465, %v3470
    %v3472 = vmul.f32 %v3466, %v3470
    %v3473 = vlaneseq
    %v3474 = vshrl.u32 %v3473, 7
    %v3475 = vsub.s32 3, %v3474
    %v3476 = vrot.slane %v1894, %v3475
    %v3477 = vadd.f32 %v3471, %v3476
    %v3478 = vadd.f32 %v3472, %v3476
    %s3479 = scalar_lea.vmem %s6, 32
    %v3480 = vld [vmem:[%s3479] sm:$0xff]
    %v3481 = vld [vmem:[%s3479 + $0x8] sm:$0xff]
    %v3482 = vld [vmem:[%s3479 + $0x10] sm:$0xff]
    %v3483 = vld [vmem:[%s3479 + $0x18] sm:$0xff]
    %v3484 = vlaneseq
    %v3485 = vshrl.u32 %v3484, 7
    %v3486 = vsub.s32 4, %v3485
    %v3487 = vrot.slane %v1894, %v3486
    %v3489 = vsel %vm68, %v3477, 0
    %v3492 = vsel %vm68, %v3478, 0
    %3494 = vmatprep.subr.mxu0 0.0
    %3495 = vmatpush1.msra.mxu0 0.0
    %3496 = vmatprep.subr.mxu0 0.0
    %3497 = vmatpush1.msra.mxu0 0.0
    %3498 = vmatprep.subr.mxu0 0.0
    %3499 = vmatpush1.msra.mxu0 0.0
    %3500 = vmatprep.subr.mxu0 0.0
    %3501 = vmatpush1.msra.mxu0 0.0
    %3502 = vmatprep.subr.mxu0 0.0
    %3503 = vmatpush1.msra.mxu0 0.0
    %3504 = vmatprep.subr.mxu0 0.0
    %3505 = vmatpush1.msra.mxu0 0.0
    %3506 = vmatprep.subr.mxu0 0.0
    %3507 = vmatpush1.msra.mxu0 0.0
    %3508 = vmatprep.subr.mxu0 0.0
    %3509 = vmatpush1.msra.mxu0 0.0
    %3510 = vmatprep.subr.mxu0 0.0
    %3511 = vmatpush1.msra.mxu0 0.0
    %3512 = vmatprep.subr.mxu0 0.0
    %3513 = vmatpush1.msra.mxu0 0.0
    %3514 = vmatprep.subr.mxu0 0.0
    %3515 = vmatpush1.msra.mxu0 0.0
    %3516 = vmatprep.subr.mxu0 0.0
    %3517 = vmatpush1.msra.mxu0 0.0
    %3518 = vmatprep.subr.mxu0 0.0
    %3519 = vmatpush1.msra.mxu0 %v3483
    %3520 = vmatprep.subr.mxu0 0.0
    %3521 = vmatpush1.msra.mxu0 %v3482
    %3522 = vmatprep.subr.mxu0 0.0
    %3523 = vmatpush1.msra.mxu0 %v3481
    %3524 = vmatprep.subr.mxu0 0.0
    %3525 = vmatpush1.msra.mxu0 %v3480
    %3526 = vmatprep.subr.mxu0 0.0
    %3527 = vmatpush2.msra.mxu0 0.0
    %3528 = vmatprep.subr.mxu0 0.0
    %3529 = vmatpush2.msra.mxu0 0.0
    %3530 = vmatprep.subr.mxu0 0.0
    %3531 = vmatpush2.msra.mxu0 0.0
    %3532 = vmatprep.subr.mxu0 0.0
    %3533 = vmatpush2.msra.mxu0 0.0
    %3534 = vmatprep.subr.mxu0 0.0
    %3535 = vmatpush2.msra.mxu0 0.0
    %3536 = vmatprep.subr.mxu0 0.0
    %3537 = vmatpush2.msra.mxu0 0.0
    %3538 = vmatprep.subr.mxu0 0.0
    %3539 = vmatpush2.msra.mxu0 0.0
    %3540 = vmatprep.subr.mxu0 0.0
    %3541 = vmatpush2.msra.mxu0 0.0
    %3542 = vmatprep.subr.mxu0 0.0
    %3543 = vmatpush2.msra.mxu0 0.0
    %3544 = vmatprep.subr.mxu0 0.0
    %3545 = vmatpush2.msra.mxu0 0.0
    %3546 = vmatprep.subr.mxu0 0.0
    %3547 = vmatpush2.msra.mxu0 0.0
    %3548 = vmatprep.subr.mxu0 0.0
    %3549 = vmatpush2.msra.mxu0 0.0
    %3550 = vmatprep.subr.mxu0 0.0
    %3551 = vmatpush2.msra.mxu0 0.0
    %3552 = vmatprep.subr.mxu0 0.0
    %3553 = vmatpush2.msra.mxu0 0.0
    %3554 = vmatprep.subr.mxu0 0.0
    %3555 = vmatpush2.msra.mxu0 0.0
    %3556 = vmatprep.subr.mxu0 0.0
    %3557 = vmatpush2.msra.mxu0 0.0
    %3558 = vmatprep.mubr.f32.mxu0 0.0
    %3559 = vmatmul.mubr.f32.gmra.mxu0 %v3489
    %v3560 = vpop.f32.mrf.mxu0
    %v3561 = vadd.f32 %v3487, %v3560
    %v3562 = vpop.f32.mrf.mxu0
    %3563 = vmatprep.mubr.f32.mxu0 0.0
    %3564 = vmatmul.mubr.f32.gmra.mxu0 %v3492
    %v3565 = vpop.f32.mrf.mxu0
    %v3566 = vadd.f32 %v3487, %v3565
    %v3567 = vpop.f32.mrf.mxu0
    %3568 = vdwg.mxu0
    %v3569 = vmul.f32 %v3561, 0.5
    %v3570 = vmul.f32 %v3566, 0.5
    %v3571 = vmul.f32 %v3561, %v1750
    %v3572 = vmul.f32 %v3566, %v1750
    %v3573 = verf.f32.pop %v3571
    %v3574 = verf.f32.pop %v3572
    %v3575 = vadd.f32 %v3573, 1.0
    %v3576 = vadd.f32 %v3574, 1.0
    %v3577 = vmul.f32 %v3569, %v3575
    %v3578 = vmul.f32 %v3570, %v3576
    %s3579 = scalar_lea.vmem %s7, 64
    %v3580 = vld [vmem:[%s3579] sm:$0xff]
    %v3581 = vld [vmem:[%s3579 + $0x8] sm:$0xff]
    %v3582 = vld [vmem:[%s3579 + $0x10] sm:$0xff]
    %v3583 = vld [vmem:[%s3579 + $0x18] sm:$0xff]
    %v3584 = vld [vmem:[%s3579 + $0x20] sm:$0xff]
    %v3585 = vld [vmem:[%s3579 + $0x28] sm:$0xff]
    %v3586 = vld [vmem:[%s3579 + $0x30] sm:$0xff]
    %v3587 = vld [vmem:[%s3579 + $0x38] sm:$0xff]
    %v3588 = vlaneseq
    %v3589 = vshrl.u32 %v3588, 7
    %v3590 = vsub.s32 5, %v3589
    %v3591 = vrot.slane %v1894, %v3590
    %v3593 = vsel %vm1771, %v3577, 0
    %v3596 = vsel %vm1771, %v3578, 0
    %3598 = vmatprep.subr.mxu0 0.0
    %3599 = vmatpush1.msra.mxu0 0.0
    %3600 = vmatprep.subr.mxu0 0.0
    %3601 = vmatpush1.msra.mxu0 0.0
    %3602 = vmatprep.subr.mxu0 0.0
    %3603 = vmatpush1.msra.mxu0 0.0
    %3604 = vmatprep.subr.mxu0 0.0
    %3605 = vmatpush1.msra.mxu0 0.0
    %3606 = vmatprep.subr.mxu0 0.0
    %3607 = vmatpush1.msra.mxu0 0.0
    %3608 = vmatprep.subr.mxu0 0.0
    %3609 = vmatpush1.msra.mxu0 0.0
    %3610 = vmatprep.subr.mxu0 0.0
    %3611 = vmatpush1.msra.mxu0 0.0
    %3612 = vmatprep.subr.mxu0 0.0
    %3613 = vmatpush1.msra.mxu0 0.0
    %3614 = vmatprep.subr.mxu0 0.0
    %3615 = vmatpush1.msra.mxu0 %v3587
    %3616 = vmatprep.subr.mxu0 0.0
    %3617 = vmatpush1.msra.mxu0 %v3586
    %3618 = vmatprep.subr.mxu0 0.0
    %3619 = vmatpush1.msra.mxu0 %v3585
    %3620 = vmatprep.subr.mxu0 0.0
    %3621 = vmatpush1.msra.mxu0 %v3584
    %3622 = vmatprep.subr.mxu0 0.0
    %3623 = vmatpush1.msra.mxu0 %v3583
    %3624 = vmatprep.subr.mxu0 0.0
    %3625 = vmatpush1.msra.mxu0 %v3582
    %3626 = vmatprep.subr.mxu0 0.0
    %3627 = vmatpush1.msra.mxu0 %v3581
    %3628 = vmatprep.subr.mxu0 0.0
    %3629 = vmatpush1.msra.mxu0 %v3580
    %3630 = vmatprep.subr.mxu0 0.0
    %3631 = vmatpush2.msra.mxu0 0.0
    %3632 = vmatprep.subr.mxu0 0.0
    %3633 = vmatpush2.msra.mxu0 0.0
    %3634 = vmatprep.subr.mxu0 0.0
    %3635 = vmatpush2.msra.mxu0 0.0
    %3636 = vmatprep.subr.mxu0 0.0
    %3637 = vmatpush2.msra.mxu0 0.0
    %3638 = vmatprep.subr.mxu0 0.0
    %3639 = vmatpush2.msra.mxu0 0.0
    %3640 = vmatprep.subr.mxu0 0.0
    %3641 = vmatpush2.msra.mxu0 0.0
    %3642 = vmatprep.subr.mxu0 0.0
    %3643 = vmatpush2.msra.mxu0 0.0
    %3644 = vmatprep.subr.mxu0 0.0
    %3645 = vmatpush2.msra.mxu0 0.0
    %3646 = vmatprep.subr.mxu0 0.0
    %3647 = vmatpush2.msra.mxu0 0.0
    %3648 = vmatprep.subr.mxu0 0.0
    %3649 = vmatpush2.msra.mxu0 0.0
    %3650 = vmatprep.subr.mxu0 0.0
    %3651 = vmatpush2.msra.mxu0 0.0
    %3652 = vmatprep.subr.mxu0 0.0
    %3653 = vmatpush2.msra.mxu0 0.0
    %3654 = vmatprep.subr.mxu0 0.0
    %3655 = vmatpush2.msra.mxu0 0.0
    %3656 = vmatprep.subr.mxu0 0.0
    %3657 = vmatpush2.msra.mxu0 0.0
    %3658 = vmatprep.subr.mxu0 0.0
    %3659 = vmatpush2.msra.mxu0 0.0
    %3660 = vmatprep.subr.mxu0 0.0
    %3661 = vmatpush2.msra.mxu0 0.0
    %3662 = vmatprep.mubr.f32.mxu0 0.0
    %3663 = vmatmul.mubr.f32.gmra.mxu0 %v3593
    %v3664 = vpop.f32.mrf.mxu0
    %v3665 = vadd.f32 %v3591, %v3664
    %v3666 = vpop.f32.mrf.mxu0
    %3667 = vmatprep.mubr.f32.mxu0 0.0
    %3668 = vmatmul.mubr.f32.gmra.mxu0 %v3596
    %v3669 = vpop.f32.mrf.mxu0
    %v3670 = vadd.f32 %v3591, %v3669
    %v3671 = vpop.f32.mrf.mxu0
    %3672 = vdwg.mxu0
    %v3673 = vadd.f32 %v3665, %v3477
    %v3674 = vadd.f32 %v3670, %v3478
    %v3675 = vsel %vm68, %v3673, 0.0
    %3676 = vadd.xlane.f32.xlu0 %v3675
    %v3677 = vpop.xlane.xlu0 %3676
    %v3678 = vsel %vm68, %v3674, 0.0
    %3679 = vadd.xlane.f32.xlu0 %v3678
    %v3680 = vpop.xlane.xlu0 %3679
    %v3681 = vmul.f32 %v3677, %v1626
    %v3682 = vmul.f32 %v3680, %v1626
    %v3683 = vsub.f32 %v3673, %v3681
    %v3684 = vsub.f32 %v3674, %v3682
    %v3685 = vmul.f32 %v3683, %v3683
    %v3686 = vmul.f32 %v3684, %v3684
    %v3687 = vsel %vm68, %v3685, 0.0
    %3688 = vadd.xlane.f32.xlu0 %v3687
    %v3689 = vpop.xlane.xlu0 %3688
    %v3690 = vsel %vm68, %v3686, 0.0
    %3691 = vadd.xlane.f32.xlu0 %v3690
    %v3692 = vpop.xlane.xlu0 %3691
    %v3693 = vmul.f32 %v3689, %v1626
    %v3694 = vmul.f32 %v3692, %v1626
    %v3695 = vadd.f32 %v3693, 1e-12
    %v3696 = vadd.f32 %v3694, 1e-12
    %v3697 = vrsqrt.pop %v3695
    %v3698 = vrsqrt.pop %v3696
    %v3699 = vmul.f32 %v3683, %v3697
    %v3700 = vmul.f32 %v3684, %v3698
    %v3701 = vlaneseq
    %v3702 = vshrl.u32 %v3701, 7
    %v3703 = vsub.s32 6, %v3702
    %v3704 = vrot.slane %v1894, %v3703
    %v3705 = vmul.f32 %v3699, %v3704
    %v3706 = vmul.f32 %v3700, %v3704
    %v3707 = vlaneseq
    %v3708 = vshrl.u32 %v3707, 7
    %v3709 = vsub.s32 7, %v3708
    %v3710 = vrot.slane %v1894, %v3709
    %v3711 = vadd.f32 %v3705, %v3710
    %v3712 = vadd.f32 %v3706, %v3710
    %v3713 = vmul.f32 %v3711, %v47
    %v3714 = vmul.f32 %v3712, %v52
    %3715 = vst.msk [vmem:[#allocation2] sm:$0xff] %vm68, %v3713
    %3716 = vst.msk [vmem:[#allocation2 + $0x8] sm:$0xff] %vm68, %v3714
    %v3717 = vld [vmem:[%s9] sm:$0x1]
    %v3718 = vld [vmem:[%s9 + $0x1] sm:$0x1]
    %v3719 = vld [vmem:[%s9 + $0x2] sm:$0x1]
    %v3720 = vld [vmem:[%s9 + $0x3] sm:$0x1]
    %v3721 = vsel %vm68, %v3713, 0.0
    %3722 = vadd.xlane.f32.xlu0 %v3721
    %v3723 = vpop.xlane.xlu0 %3722
    %v3724 = vsel %vm68, %v3714, 0.0
    %3725 = vadd.xlane.f32.xlu0 %v3724
    %v3726 = vpop.xlane.xlu0 %3725
    %v3727 = vmul.f32 %v3723, %v1626
    %v3728 = vmul.f32 %v3726, %v1626
    %v3729 = vsub.f32 %v3713, %v3727
    %v3730 = vsub.f32 %v3714, %v3728
    %v3731 = vmul.f32 %v3729, %v3729
    %v3732 = vmul.f32 %v3730, %v3730
    %v3733 = vsel %vm68, %v3731, 0.0
    %3734 = vadd.xlane.f32.xlu0 %v3733
    %v3735 = vpop.xlane.xlu0 %3734
    %v3736 = vsel %vm68, %v3732, 0.0
    %3737 = vadd.xlane.f32.xlu0 %v3736
    %v3738 = vpop.xlane.xlu0 %3737
    %v3739 = vmul.f32 %v3735, %v1626
    %v3740 = vmul.f32 %v3738, %v1626
    %v3741 = vadd.f32 %v3739, 1e-06
    %v3742 = vadd.f32 %v3740, 1e-06
    %v3743 = vrsqrt.pop %v3741
    %v3744 = vrsqrt.pop %v3742
    %v3745 = vmul.f32 %v3729, %v3743
    %v3746 = vmul.f32 %v3730, %v3744
    %v3747 = vlaneseq
    %v3748 = vshrl.u32 %v3747, 7
    %v3749 = vsub.s32 0, %v3748
    %v3750 = vrot.slane %v3717, %v3749
    %v3751 = vmul.f32 %v3745, %v3750
    %v3752 = vmul.f32 %v3746, %v3750
    %v3753 = vlaneseq
    %v3754 = vshrl.u32 %v3753, 7
    %v3755 = vsub.s32 0, %v3754
    %v3756 = vrot.slane %v3718, %v3755
    %v3757 = vadd.f32 %v3751, %v3756
    %v3758 = vadd.f32 %v3752, %v3756
    %v3759 = vlaneseq
    %v3760 = vshrl.u32 %v3759, 7
    %v3761 = vsub.s32 0, %v3760
    %v3762 = vrot.slane %v3719, %v3761
    %v3763 = vmul.f32 %v3757, %v3762
    %v3764 = vmul.f32 %v3758, %v3762
    %v3765 = vsel %vm68, %v3763, 0.0
    %3766 = vadd.xlane.f32.xlu0 %v3765
    %v3767 = vpop.xlane.xlu0 %3766
    %v3768 = vsel %vm68, %v3764, 0.0
    %3769 = vadd.xlane.f32.xlu0 %v3768
    %v3770 = vpop.xlane.xlu0 %3769
    %v3771 = vlaneseq
    %v3772 = vshrl.u32 %v3771, 7
    %v3773 = vsub.s32 0, %v3772
    %v3774 = vrot.slane %v3720, %v3773
    %v3775 = vadd.f32 %v3767, %v3774
    %v3776 = vadd.f32 %v3770, %v3774
    %v3777 = vmul.f32 %v3775, %v38
    %v3778 = vmul.f32 %v3776, %v39
    %vm3779 = vcmask 7168
    %3780 = vst.msk [vmem:[%s11] sm:$0xff] %vm3779, %v3777
    %3781 = vst.msk [vmem:[%s11 + $0x8] sm:$0xff] %vm3779, %v3778
    // Predicated region
    $region42: #{sum_encoder_forward.1} parent=1 // pred_check
      _
    $region43: #{sum_encoder_forward.1} parent=1 // pred_check_branch
      %3783 = sbr.rel (0) target = $region45
    $region44: #{sum_encoder_forward.1} parent=1 // pred_region
      %s3785 = ssub.s32 256, 256
      %3786 = vsyncadd [#allocation3], %s3785
      %s3787 = sshll.u32 [#allocation2], 4
      %s3788 = int_to_ptr.vmem [resolvable:$true] %s3787
      %3793 = dma.vmem_to_hbm [thread:$0]  %s3788, 256, %s10, [#allocation3], 128, 128, 8
    $region45: #{sum_encoder_forward.1} parent=1 // pred_fallthru
      _
    // Predicated region
    $region46: #{sum_encoder_forward.1} parent=1 // pred_check
      _
    $region47: #{sum_encoder_forward.1} parent=1 // pred_check_branch
      %3795 = sbr.rel (0) target = $region49
    $region48: #{sum_encoder_forward.1} parent=1 // pred_region
      _
    $region49: #{sum_encoder_forward.1} parent=1 // pred_fallthru
      _
    // Predicated region
    $region50: #{sum_encoder_forward.1} parent=1 // pred_check
      _
    $region51: #{sum_encoder_forward.1} parent=1 // pred_check_branch
      %3797 = sbr.rel (0) target = $region53
    $region52: #{sum_encoder_forward.1} parent=1 // pred_region
      %3798 = dma.done [#allocation3], 256
    $region53: #{sum_encoder_forward.1} parent=1 // pred_fallthru
      _
    // Predicated region
    $region54: #{sum_encoder_forward.1} parent=1 // pred_check
      _
    $region55: #{sum_encoder_forward.1} parent=1 // pred_check_branch
      %3800 = sbr.rel (0) target = $region57
    $region56: #{sum_encoder_forward.1} parent=1 // pred_region
      _
    $region57: #{sum_encoder_forward.1} parent=1 // pred_fallthru
      _
    %3801 = vsyncpa [#allocation3], 1

</llo_original>
